<compile_context>
chip_gen: v6e
topology: v6e:2x2x1
jax: 0.10.0
libtpu: 0.0.40
codegen_flags: <defaults>
</compile_context>

<pallas_src>
import functools

import jax
import jax.numpy as jnp
from jax.experimental import pallas as pl
from jax.experimental.pallas import tpu as pltpu

BN_EPS = 1e-5
LANE = 128


# ------------------------------- helpers -----------------------------------


def _round_up(x, m):
    return (x + m - 1) // m * m


def _vmem_limit_bytes():
    # Half of physical VMEM: 64 MiB on v5e/v6e, 32 MiB on v7x (leaves compiler headroom).
    try:
        cap = int(pltpu.get_tpu_info().vmem_capacity_bytes)
    except Exception:
        cap = 64 * 1024 * 1024
    return min(cap // 2, 96 * 1024 * 1024)


def _make_taps_by_kh(s):
    # Tap (kh, kw) of a 3x3/stride-s conv -> (phase, dh, dw) into the phase-decomposed input,
    # grouped by kernel row kh (3 groups of 3 kw taps).
    return tuple(
        tuple(((kh % s) * s + (kw % s), kh // s, kw // s) for kw in range(3))
        for kh in range(3))


# ----------------------------- Pallas kernels ------------------------------


def _accumulate_taps(x_ref, w_ref, acc_ref, taps_by_kh, Ho, Wo, n_phases):
    """3x3 conv as matmuls over a phase-decomposed NHWC block, accumulated in f32 scratch.

    If Cin is lane-aligned, the three kw taps of each kernel row are concatenated along the
    channel axis and contracted in one K=3*Cin matmul (3 matmuls total); otherwise the nine
    per-tap K=Cin matmuls are used.  Both paths accumulate into acc_ref (VMEM, f32).
    """
    Cin = x_ref.shape[-1]
    Hq = x_ref.shape[1] // n_phases
    M = Ho * Wo
    fuse_kw = (Cin % LANE == 0)

    def tap(p, dh, dw):
        r0 = p * Hq + dh
        return x_ref[:, r0:r0 + Ho, dw:dw + Wo, :]      # (1, Ho, Wo, Cin) bf16

    first = True
    for kh, kw_taps in enumerate(taps_by_kh):
        if fuse_kw:
            slab = jnp.concatenate([tap(p, dh, dw) for (p, dh, dw) in kw_taps],
                                   axis=-1).reshape(M, 3 * Cin)
            part = jnp.dot(slab, w_ref[kh], preferred_element_type=jnp.float32)
            if first:
                acc_ref[...] = part
            else:
                acc_ref[...] += part
            first = False
        else:
            wk = w_ref[kh]                              # (3*Cin, tn) bf16
            for kw, (p, dh, dw) in enumerate(kw_taps):
                xs = tap(p, dh, dw).reshape(M, Cin)
                part = jnp.dot(xs, wk[kw * Cin:(kw + 1) * Cin, :],
                               preferred_element_type=jnp.float32)
                if first:
                    acc_ref[...] = part
                else:
                    acc_ref[...] += part
                first = False


def _conv_bn_relu_kernel(x_ref, w_ref, b_ref, o_ref, acc_ref, *,
                         taps_by_kh, Ho, Wo, n_phases, halo):
    _accumulate_taps(x_ref, w_ref, acc_ref, taps_by_kh, Ho, Wo, n_phases)
    tn = o_ref.shape[-1]
    y = jnp.maximum(acc_ref[...] + b_ref[...], 0.0)
    if halo:
        # Write the activation with a 1-px zero halo so the next conv reads it directly from
        # HBM -- removes the XLA pad / round trip between conv1 and conv2.
        o_ref[...] = jnp.zeros_like(o_ref)
        o_ref[:, 1:1 + Ho, 1:1 + Wo, :] = y.reshape(1, Ho, Wo, tn).astype(o_ref.dtype)
    else:
        o_ref[...] = y.reshape(o_ref.shape).astype(o_ref.dtype)


def _conv_bn_add_relu_kernel(x_ref, w_ref, b_ref, r_ref, o_ref, acc_ref, *,
                             taps_by_kh, Ho, Wo, n_phases):
    _accumulate_taps(x_ref, w_ref, acc_ref, taps_by_kh, Ho, Wo, n_phases)
    cres = r_ref.shape[-1]
    res = r_ref[...].reshape(Ho * Wo, cres).astype(jnp.float32)
    if cres == acc_ref.shape[-1]:
        acc_ref[...] += res
    else:
        # Unpadded residual: add into the leading channel lanes only; the padded channels are
        # stripped at the block boundary anyway.
        acc_ref[:, 0:cres] += res
    y = jnp.maximum(acc_ref[...] + b_ref[...], 0.0)
    o_ref[...] = y.reshape(o_ref.shape).astype(o_ref.dtype)


def _conv_bn_proj_add_relu_kernel(x_ref, w_ref, b_ref, xs_ref, ws_ref, bs_ref, o_ref, acc_ref, *,
                                  taps_by_kh, Ho, Wo, n_phases,
                                  sc_phase, sc_dh, sc_dw, sc_hq):
    _accumulate_taps(x_ref, w_ref, acc_ref, taps_by_kh, Ho, Wo, n_phases)
    # 1x1 projection shortcut: its strided input is exactly one phase plane of the (already
    # phase-decomposed, padded) conv1 input, sliced in-kernel -- no extra HBM materialization.
    csc = xs_ref.shape[-1]
    r0 = sc_phase * sc_hq + sc_dh
    sc_in = xs_ref[:, r0:r0 + Ho, sc_dw:sc_dw + Wo, :].reshape(Ho * Wo, csc)
    sc = jnp.dot(sc_in, ws_ref[...], preferred_element_type=jnp.float32)
    y = jnp.maximum(acc_ref[...] + b_ref[...] + bs_ref[...] + sc, 0.0)
    o_ref[...] = y.reshape(o_ref.shape).astype(o_ref.dtype)


# ----------------------------- kernel launcher ------------------------------


def _fused_conv_call(xq, w_kh, bias, taps_by_kh, Ho, Wo, n_phases, *,
                     halo_out=False, residual=None, proj=None, out_dtype=jnp.bfloat16):
    N, PH, Wq, Cin = xq.shape
    KH, Kdim, Cp = w_kh.shape
    M = Ho * Wo
    Ho_out, Wo_out = (Ho + 2, Wo + 2) if halo_out else (Ho, Wo)
    out_isize = jnp.dtype(out_dtype).itemsize

    vmem_limit = _vmem_limit_bytes()
    extra_elems = 0
    if residual is not None:
        extra_elems = Ho * Wo * residual.shape[-1]
    if proj is not None:
        xsc0 = proj[0]
        extra_elems = xsc0.shape[1] * xsc0.shape[2] * xsc0.shape[3]

    def footprint(tn):
        b = 2 * KH * Kdim * tn * 2                     # weight block (double-buffered, bf16)
        b += 2 * PH * Wq * Cin * 2                     # input block
        b += 2 * extra_elems * 2                       # residual / shortcut-input block
        b += 2 * Ho_out * Wo_out * tn * out_isize      # output block
        b += M * tn * 4                                # f32 accumulator scratch
        b += 2 * M * Kdim * 2                          # in-kernel slab temporaries
        b += 2 * M * tn * 4                            # matmul result temporaries
        return b

    tn = 128
    for cand in (Cp, 512, 256, 128):
        if cand <= Cp and Cp % cand == 0 and footprint(cand) <= (vmem_limit * 7) // 10:
            tn = cand
            break
    if residual is not None and residual.shape[-1] != Cp:
        tn = Cp                                        # keep unpadded residual in one Cout tile
    J = Cp // tn

    # Cout-tile outer, batch inner: the weight block index is constant across the inner loop,
    # so each weight tile is fetched once (not once per image).
    grid = (J, N)

    in_specs = [
        pl.BlockSpec((1, PH, Wq, Cin), lambda j, n: (n, 0, 0, 0)),
        pl.BlockSpec((KH, Kdim, tn), lambda j, n: (0, 0, j)),
        pl.BlockSpec((1, tn), lambda j, n: (0, j)),
    ]
    args = [xq, w_kh, bias]
    flops = 2 * N * M * KH * Kdim * Cp
    bytes_accessed = (int(w_kh.size) * 2 + int(bias.size) * 4
                      + J * int(xq.size) * 2
                      + N * Ho_out * Wo_out * Cp * out_isize)

    if residual is not None:
        cres = residual.shape[-1]
        if cres == Cp:
            in_specs.append(pl.BlockSpec((1, Ho, Wo, tn), lambda j, n: (n, 0, 0, j)))
        else:
            in_specs.append(pl.BlockSpec((1, Ho, Wo, cres), lambda j, n: (n, 0, 0, 0)))
        args.append(residual)
        bytes_accessed += int(residual.size) * 2
        kern = functools.partial(_conv_bn_add_relu_kernel, taps_by_kh=taps_by_kh,
                                 Ho=Ho, Wo=Wo, n_phases=n_phases)
    elif proj is not None:
        xsc, wsc, bsc, sc_meta = proj
        csc = xsc.shape[-1]
        in_specs += [
            pl.BlockSpec((1, xsc.shape[1], xsc.shape[2], csc), lambda j, n: (n, 0, 0, 0)),
            pl.BlockSpec((csc, tn), lambda j, n: (0, j)),
            pl.BlockSpec((1, tn), lambda j, n: (0, j)),
        ]
        args += [xsc, wsc, bsc]
        flops += 2 * N * M * csc * Cp
        bytes_accessed += J * int(xsc.size) * 2 + int(wsc.size) * 2 + int(bsc.size) * 4
        kern = functools.partial(_conv_bn_proj_add_relu_kernel, taps_by_kh=taps_by_kh,
                                 Ho=Ho, Wo=Wo, n_phases=n_phases, **sc_meta)
    else:
        kern = functools.partial(_conv_bn_relu_kernel, taps_by_kh=taps_by_kh,
                                 Ho=Ho, Wo=Wo, n_phases=n_phases, halo=halo_out)

    return pl.pallas_call(
        kern,
        out_shape=jax.ShapeDtypeStruct((N, Ho_out, Wo_out, Cp), out_dtype),
        grid_spec=pltpu.PrefetchScalarGridSpec(
            num_scalar_prefetch=0,
            grid=grid,
            in_specs=in_specs,
            out_specs=pl.BlockSpec((1, Ho_out, Wo_out, tn), lambda j, n: (n, 0, 0, j)),
            scratch_shapes=[pltpu.VMEM((M, tn), jnp.float32)],
        ),
        compiler_params=pltpu.CompilerParams(
            dimension_semantics=("parallel", "parallel"),
            vmem_limit_bytes=vmem_limit,
        ),
        cost_estimate=pl.CostEstimate(flops=int(flops), transcendentals=0,
                                      bytes_accessed=int(bytes_accessed)),
    )(*args)


# ------------------------------ host-side prep ------------------------------


def _bn_fold(gamma, beta, mean, var):
    scale = gamma / jnp.sqrt(var + BN_EPS)
    bias = beta - mean * scale
    return scale, bias


def _fold_conv_bn_weights(w_oihw, gamma, beta, mean, var, cout_pad, cin_pad=None):
    """PyTorch (Cout,Cin,kh,kw) conv weight + BN -> ((kh, kw*Cin_p, Cout_p) bf16, (1,Cout_p) f32).

    The K axis of each kh slab stacks the kw taps (kw-major, cin-minor), matching the
    in-kernel channel-axis concatenation of the three kw-shifted input slices."""
    scale, bias = _bn_fold(gamma, beta, mean, var)
    cout, cin, kh, kw = w_oihw.shape
    w = jnp.transpose(w_oihw, (2, 3, 1, 0)) * scale[None, None, None, :]   # (kh,kw,cin,cout)
    if cin_pad is not None and cin_pad > cin:
        w = jnp.pad(w, ((0, 0), (0, 0), (0, cin_pad - cin), (0, 0)))
    if cout_pad > cout:
        w = jnp.pad(w, ((0, 0), (0, 0), (0, 0), (0, cout_pad - cout)))
        bias = jnp.pad(bias, (0, cout_pad - cout))
    kh_, kw_, cin_p, cout_p = w.shape
    w = w.reshape(kh_, kw_ * cin_p, cout_p)
    return w.astype(jnp.bfloat16), bias.reshape(1, -1).astype(jnp.float32)


def _phase_decompose(x_pad, s):
    """(N,Hp,Wp,C) padded NHWC -> (N, s*s*ceil(Hp/s), ceil(Wp/s), C) stride-phase planes."""
    N, Hp, Wp, C = x_pad.shape
    Hp2, Wp2 = _round_up(Hp, s), _round_up(Wp, s)
    x_pad = jnp.pad(x_pad, ((0, 0), (0, Hp2 - Hp), (0, Wp2 - Wp), (0, 0)))
    Hq, Wq = Hp2 // s, Wp2 // s
    xq = x_pad.reshape(N, Hq, s, Wq, s, C).transpose(0, 2, 4, 1, 3, 5)
    return xq.reshape(N, s * s * Hq, Wq, C)


# --------------------------- BasicBlock forward -----------------------------


def basic_block_forward(x_nchw, params, stride):
    """Pallas implementation of BasicBlock.forward (eval-mode BN folded into conv weights)."""
    in_planes = x_nchw.shape[1]
    planes = params["conv1_w"].shape[0]
    Cp = _round_up(planes, LANE)            # lane-dense (padded) channel count

    x_bf = jnp.transpose(x_nchw, (0, 2, 3, 1)).astype(jnp.bfloat16)   # NHWC bf16
    N, H, W, _ = x_bf.shape
    Ho = (H + 2 - 3) // stride + 1
    Wo = (W + 2 - 3) // stride + 1

    taps1 = _make_taps_by_kh(stride)
    taps2 = _make_taps_by_kh(1)

    # conv1 + bn1 + relu, written with a 1-px zero halo for direct consumption by conv2.
    w1, b1 = _fold_conv_bn_weights(params["conv1_w"], params["bn1_g"], params["bn1_b"],
                                   params["bn1_m"], params["bn1_v"], Cp)
    xq1 = _phase_decompose(jnp.pad(x_bf, ((0, 0), (1, 1), (1, 1), (0, 0))), stride)
    out1 = _fused_conv_call(xq1, w1, b1, taps1, Ho, Wo, stride * stride,
                            halo_out=True, out_dtype=jnp.bfloat16)   # (N, Ho+2, Wo+2, Cp)

    # conv2 + bn2 + shortcut + relu in one kernel.
    w2, b2 = _fold_conv_bn_weights(params["conv2_w"], params["bn2_g"], params["bn2_b"],
                                   params["bn2_m"], params["bn2_v"], Cp, cin_pad=Cp)

    if stride != 1 or in_planes != planes:
        # Projection shortcut (1x1 conv + BN) fused into the same kernel; its strided input is
        # read from the corresponding phase plane of xq1 (no separate strided-slice copy).
        wsc, bsc = _fold_conv_bn_weights(params["convsc_w"], params["bnsc_g"], params["bnsc_b"],
                                         params["bnsc_m"], params["bnsc_v"], Cp)
        ph = 1 % stride
        sc_meta = dict(sc_phase=ph * stride + ph, sc_dh=1 // stride, sc_dw=1 // stride,
                       sc_hq=xq1.shape[1] // (stride * stride))
        out = _fused_conv_call(out1, w2, b2, taps2, Ho, Wo, 1,
                               proj=(xq1, wsc[0], bsc, sc_meta), out_dtype=jnp.bfloat16)
    else:
        # Identity shortcut: residual passed unpadded, padded on read inside the kernel.
        out = _fused_conv_call(out1, w2, b2, taps2, Ho, Wo, 1,
                               residual=x_bf, out_dtype=jnp.bfloat16)

    # Strip channel padding; NCHW / f32 only at the block boundary.
    return jnp.transpose(out[..., :planes], (0, 3, 1, 2)).astype(jnp.float32)


# ------------------------- pure-JAX reference ------------------------------


def _conv_ref(x_nhwc, w_oihw, stride, padding):
    w_hwio = jnp.transpose(w_oihw, (2, 3, 1, 0))
    return jax.lax.conv_general_dilated(
        x_nhwc, w_hwio, (stride, stride), [(padding, padding)] * 2,
        dimension_numbers=("NHWC", "HWIO", "NHWC"),
        preferred_element_type=jnp.float32)


def basic_block_ref(x_nchw, params, stride):
    """Reference with matching numerics (bf16 inputs/weights, f32 accumulation)."""
    in_planes = x_nchw.shape[1]
    planes = params["conv1_w"].shape[0]
    x_bf = jnp.transpose(x_nchw, (0, 2, 3, 1)).astype(jnp.float32).astype(jnp.bfloat16)

    s1, b1 = _bn_fold(params["bn1_g"], params["bn1_b"], params["bn1_m"], params["bn1_v"])
    s2, b2 = _bn_fold(params["bn2_g"], params["bn2_b"], params["bn2_m"], params["bn2_v"])
    w1 = (params["conv1_w"] * s1[:, None, None, None]).astype(jnp.bfloat16)
    w2 = (params["conv2_w"] * s2[:, None, None, None]).astype(jnp.bfloat16)

    out = jnp.maximum(_conv_ref(x_bf, w1, stride, 1) + b1, 0.0).astype(jnp.bfloat16)
    out = _conv_ref(out, w2, 1, 1) + b2
    if stride != 1 or in_planes != planes:
        ssc, bsc = _bn_fold(params["bnsc_g"], params["bnsc_b"],
                            params["bnsc_m"], params["bnsc_v"])
        wsc = (params["convsc_w"] * ssc[:, None, None, None]).astype(jnp.bfloat16)
        sc = _conv_ref(x_bf, wsc, stride, 0) + bsc
    else:
        sc = x_bf.astype(jnp.float32)
    out = jnp.maximum(out + sc, 0.0)
    return jnp.transpose(out, (0, 3, 1, 2))


# ------------------------------- params ------------------------------------


def init_params(key, in_planes, planes, stride):
    ks = jax.random.split(key, 16)
    p = {
        "conv1_w": 0.1 * jax.random.normal(ks[0], (planes, in_planes, 3, 3), jnp.float32),
        "conv2_w": 0.1 * jax.random.normal(ks[1], (planes, planes, 3, 3), jnp.float32),
        "bn1_g": 1.0 + 0.1 * jax.random.normal(ks[2], (planes,), jnp.float32),
        "bn1_b": 0.1 * jax.random.normal(ks[3], (planes,), jnp.float32),
        "bn1_m": 0.05 * jax.random.normal(ks[4], (planes,), jnp.float32),
        "bn1_v": 1.0 + 0.1 * jnp.abs(jax.random.normal(ks[5], (planes,), jnp.float32)),
        "bn2_g": 1.0 + 0.1 * jax.random.normal(ks[6], (planes,), jnp.float32),
        "bn2_b": 0.1 * jax.random.normal(ks[7], (planes,), jnp.float32),
        "bn2_m": 0.05 * jax.random.normal(ks[8], (planes,), jnp.float32),
        "bn2_v": 1.0 + 0.1 * jnp.abs(jax.random.normal(ks[9], (planes,), jnp.float32)),
    }
    if stride != 1 or in_planes != planes:
        p.update({
            "convsc_w": 0.1 * jax.random.normal(ks[10], (planes, in_planes, 1, 1), jnp.float32),
            "bnsc_g": 1.0 + 0.1 * jax.random.normal(ks[11], (planes,), jnp.float32),
            "bnsc_b": 0.1 * jax.random.normal(ks[12], (planes,), jnp.float32),
            "bnsc_m": 0.05 * jax.random.normal(ks[13], (planes,), jnp.float32),
            "bnsc_v": 1.0 + 0.1 * jnp.abs(jax.random.normal(ks[14], (planes,), jnp.float32)),
        })
    return p


if __name__ == "__main__":
    key = jax.random.PRNGKey(0)
    k_x1, k_x2, k_p1, k_p2 = jax.random.split(key, 4)

    fwd = jax.jit(basic_block_forward, static_argnames="stride")

    # Case 1: projection shortcut (stride=2, in_planes != planes).
    x1 = jax.random.normal(k_x1, (2, 4, 16, 16), jnp.float32)  # NCHW
    params1 = init_params(k_p1, in_planes=4, planes=8, stride=2)
    y1 = jax.block_until_ready(fwd(x1, params1, stride=2))
    ref1 = basic_block_ref(x1, params1, stride=2)
    assert y1.shape == (2, 8, 8, 8), y1.shape
    assert jnp.allclose(y1, ref1, atol=2e-2, rtol=2e-2), \
        f"projection-case mismatch, max abs err {float(jnp.max(jnp.abs(y1 - ref1)))}"

    # Case 2: identity shortcut (stride=1, in_planes == planes).
    x2 = jax.random.normal(k_x2, (2, 8, 16, 16), jnp.float32)  # NCHW
    params2 = init_params(k_p2, in_planes=8, planes=8, stride=1)
    y2 = jax.block_until_ready(fwd(x2, params2, stride=1))
    ref2 = basic_block_ref(x2, params2, stride=1)
    assert y2.shape == (2, 8, 16, 16), y2.shape
    assert jnp.allclose(y2, ref2, atol=2e-2, rtol=2e-2), \
        f"identity-case mismatch, max abs err {float(jnp.max(jnp.abs(y2 - ref2)))}"

    print("KERNEL_OK")
</pallas_src>

<mosaic_0001>
module attributes {stable_mosaic.version = 11 : i64} {
  func.func @_conv_bn_relu_kernel(%arg0: i32, %arg1: i32, %arg2: memref<1x36x9x4xbf16, #tpu.memory_space<vmem>>, %arg3: memref<3x12x128xbf16, #tpu.memory_space<vmem>>, %arg4: memref<1x128xf32, #tpu.memory_space<vmem>>, %arg5: memref<1x10x10x128xbf16, #tpu.memory_space<vmem>>, %arg6: memref<64x128xf32, #tpu.memory_space<vmem>>) attributes {dimension_semantics = [#tpu.dimension_semantics<parallel>, #tpu.dimension_semantics<parallel>], iteration_bounds = array<i64: 1, 2>, scalar_prefetch = 0 : i64, scratch_operands = 1 : i64, tpu.core_type = #tpu.core_type<tc>, window_params = [{transform_indices = @transform_0, window_bounds = array<i64: 1, 36, 9, 4>}, {transform_indices = @transform_1, window_bounds = array<i64: 3, 12, 128>}, {transform_indices = @transform_2, window_bounds = array<i64: 1, 128>}, {transform_indices = @transform_3, window_bounds = array<i64: 1, 10, 10, 128>}]} {
    %c0 = arith.constant 0 : index
    %c0_0 = arith.constant 0 : index
    %c0_1 = arith.constant 0 : index
    %0 = vector.load %arg3[%c0, %c0_0, %c0_1] : memref<3x12x128xbf16, #tpu.memory_space<vmem>>, vector<1x12x128xbf16>
    %1 = vector.shape_cast %0 : vector<1x12x128xbf16> to vector<12x128xbf16>
    %c0_2 = arith.constant 0 : index
    %c0_3 = arith.constant 0 : index
    %c0_4 = arith.constant 0 : index
    %c0_5 = arith.constant 0 : index
    %2 = vector.load %arg2[%c0_2, %c0_3, %c0_4, %c0_5] : memref<1x36x9x4xbf16, #tpu.memory_space<vmem>>, vector<1x8x8x4xbf16>
    %3 = vector.shape_cast %2 : vector<1x8x8x4xbf16> to vector<64x4xbf16>
    %4 = vector.extract_strided_slice %1 {offsets = [0, 0], sizes = [4, 128], strides = [1, 1]} : vector<12x128xbf16> to vector<4x128xbf16>
    %cst = arith.constant dense<0.000000e+00> : vector<64x128xf32>
    %5 = tpu.matmul %3, %4, %cst {dimension_numbers = #tpu.dot_dimension_numbers<[1], [0], [0], [1], [0, 0, 1, 1], [], []>} : vector<64x4xbf16>, vector<4x128xbf16>, vector<64x128xf32> -> vector<64x128xf32>
    %c0_6 = arith.constant 0 : index
    %c0_7 = arith.constant 0 : index
    %6 = vector.load %arg6[%c0_6, %c0_7] : memref<64x128xf32, #tpu.memory_space<vmem>>, vector<64x128xf32>
    tpu.vector_store %arg6[%c0_6, %c0_7], %5 {strides = array<i32>} : memref<64x128xf32, #tpu.memory_space<vmem>>, vector<64x128xf32>,
    %c0_8 = arith.constant 0 : index
    %c9 = arith.constant 9 : index
    %c0_9 = arith.constant 0 : index
    %c0_10 = arith.constant 0 : index
    %7 = vector.load %arg2[%c0_8, %c9, %c0_9, %c0_10] : memref<1x36x9x4xbf16, #tpu.memory_space<vmem>>, vector<1x8x8x4xbf16>
    %8 = vector.shape_cast %7 : vector<1x8x8x4xbf16> to vector<64x4xbf16>
    %9 = vector.extract_strided_slice %1 {offsets = [4, 0], sizes = [4, 128], strides = [1, 1]} : vector<12x128xbf16> to vector<4x128xbf16>
    %cst_11 = arith.constant dense<0.000000e+00> : vector<64x128xf32>
    %10 = tpu.matmul %8, %9, %cst_11 {dimension_numbers = #tpu.dot_dimension_numbers<[1], [0], [0], [1], [0, 0, 1, 1], [], []>} : vector<64x4xbf16>, vector<4x128xbf16>, vector<64x128xf32> -> vector<64x128xf32>
    %c0_12 = arith.constant 0 : index
    %c0_13 = arith.constant 0 : index
    %11 = vector.load %arg6[%c0_12, %c0_13] : memref<64x128xf32, #tpu.memory_space<vmem>>, vector<64x128xf32>
    %12 = arith.addf %11, %10 : vector<64x128xf32>
    %c0_14 = arith.constant 0 : index
    %c0_15 = arith.constant 0 : index
    %13 = vector.load %arg6[%c0_14, %c0_15] : memref<64x128xf32, #tpu.memory_space<vmem>>, vector<64x128xf32>
    tpu.vector_store %arg6[%c0_14, %c0_15], %12 {strides = array<i32>} : memref<64x128xf32, #tpu.memory_space<vmem>>, vector<64x128xf32>,
    %c0_16 = arith.constant 0 : index
    %c0_17 = arith.constant 0 : index
    %c1 = arith.constant 1 : index
    %c0_18 = arith.constant 0 : index
    %14 = vector.load %arg2[%c0_16, %c0_17, %c1, %c0_18] : memref<1x36x9x4xbf16, #tpu.memory_space<vmem>>, vector<1x8x8x4xbf16>
    %15 = vector.shape_cast %14 : vector<1x8x8x4xbf16> to vector<64x4xbf16>
    %16 = vector.extract_strided_slice %1 {offsets = [8, 0], sizes = [4, 128], strides = [1, 1]} : vector<12x128xbf16> to vector<4x128xbf16>
    %cst_19 = arith.constant dense<0.000000e+00> : vector<64x128xf32>
    %17 = tpu.matmul %15, %16, %cst_19 {dimension_numbers = #tpu.dot_dimension_numbers<[1], [0], [0], [1], [0, 0, 1, 1], [], []>} : vector<64x4xbf16>, vector<4x128xbf16>, vector<64x128xf32> -> vector<64x128xf32>
    %c0_20 = arith.constant 0 : index
    %c0_21 = arith.constant 0 : index
    %18 = vector.load %arg6[%c0_20, %c0_21] : memref<64x128xf32, #tpu.memory_space<vmem>>, vector<64x128xf32>
    %19 = arith.addf %18, %17 : vector<64x128xf32>
    %c0_22 = arith.constant 0 : index
    %c0_23 = arith.constant 0 : index
    %20 = vector.load %arg6[%c0_22, %c0_23] : memref<64x128xf32, #tpu.memory_space<vmem>>, vector<64x128xf32>
    tpu.vector_store %arg6[%c0_22, %c0_23], %19 {strides = array<i32>} : memref<64x128xf32, #tpu.memory_space<vmem>>, vector<64x128xf32>,
    %c1_24 = arith.constant 1 : index
    %c0_25 = arith.constant 0 : index
    %c0_26 = arith.constant 0 : index
    %21 = vector.load %arg3[%c1_24, %c0_25, %c0_26] : memref<3x12x128xbf16, #tpu.memory_space<vmem>>, vector<1x12x128xbf16>
    %22 = vector.shape_cast %21 : vector<1x12x128xbf16> to vector<12x128xbf16>
    %c0_27 = arith.constant 0 : index
    %c18 = arith.constant 18 : index
    %c0_28 = arith.constant 0 : index
    %c0_29 = arith.constant 0 : index
    %23 = vector.load %arg2[%c0_27, %c18, %c0_28, %c0_29] : memref<1x36x9x4xbf16, #tpu.memory_space<vmem>>, vector<1x8x8x4xbf16>
    %24 = vector.shape_cast %23 : vector<1x8x8x4xbf16> to vector<64x4xbf16>
    %25 = vector.extract_strided_slice %22 {offsets = [0, 0], sizes = [4, 128], strides = [1, 1]} : vector<12x128xbf16> to vector<4x128xbf16>
    %cst_30 = arith.constant dense<0.000000e+00> : vector<64x128xf32>
    %26 = tpu.matmul %24, %25, %cst_30 {dimension_numbers = #tpu.dot_dimension_numbers<[1], [0], [0], [1], [0, 0, 1, 1], [], []>} : vector<64x4xbf16>, vector<4x128xbf16>, vector<64x128xf32> -> vector<64x128xf32>
    %c0_31 = arith.constant 0 : index
    %c0_32 = arith.constant 0 : index
    %27 = vector.load %arg6[%c0_31, %c0_32] : memref<64x128xf32, #tpu.memory_space<vmem>>, vector<64x128xf32>
    %28 = arith.addf %27, %26 : vector<64x128xf32>
    %c0_33 = arith.constant 0 : index
    %c0_34 = arith.constant 0 : index
    %29 = vector.load %arg6[%c0_33, %c0_34] : memref<64x128xf32, #tpu.memory_space<vmem>>, vector<64x128xf32>
    tpu.vector_store %arg6[%c0_33, %c0_34], %28 {strides = array<i32>} : memref<64x128xf32, #tpu.memory_space<vmem>>, vector<64x128xf32>,
    %c0_35 = arith.constant 0 : index
    %c27 = arith.constant 27 : index
    %c0_36 = arith.constant 0 : index
    %c0_37 = arith.constant 0 : index
    %30 = vector.load %arg2[%c0_35, %c27, %c0_36, %c0_37] : memref<1x36x9x4xbf16, #tpu.memory_space<vmem>>, vector<1x8x8x4xbf16>
    %31 = vector.shape_cast %30 : vector<1x8x8x4xbf16> to vector<64x4xbf16>
    %32 = vector.extract_strided_slice %22 {offsets = [4, 0], sizes = [4, 128], strides = [1, 1]} : vector<12x128xbf16> to vector<4x128xbf16>
    %cst_38 = arith.constant dense<0.000000e+00> : vector<64x128xf32>
    %33 = tpu.matmul %31, %32, %cst_38 {dimension_numbers = #tpu.dot_dimension_numbers<[1], [0], [0], [1], [0, 0, 1, 1], [], []>} : vector<64x4xbf16>, vector<4x128xbf16>, vector<64x128xf32> -> vector<64x128xf32>
    %c0_39 = arith.constant 0 : index
    %c0_40 = arith.constant 0 : index
    %34 = vector.load %arg6[%c0_39, %c0_40] : memref<64x128xf32, #tpu.memory_space<vmem>>, vector<64x128xf32>
    %35 = arith.addf %34, %33 : vector<64x128xf32>
    %c0_41 = arith.constant 0 : index
    %c0_42 = arith.constant 0 : index
    %36 = vector.load %arg6[%c0_41, %c0_42] : memref<64x128xf32, #tpu.memory_space<vmem>>, vector<64x128xf32>
    tpu.vector_store %arg6[%c0_41, %c0_42], %35 {strides = array<i32>} : memref<64x128xf32, #tpu.memory_space<vmem>>, vector<64x128xf32>,
    %c0_43 = arith.constant 0 : index
    %c18_44 = arith.constant 18 : index
    %c1_45 = arith.constant 1 : index
    %c0_46 = arith.constant 0 : index
    %37 = vector.load %arg2[%c0_43, %c18_44, %c1_45, %c0_46] : memref<1x36x9x4xbf16, #tpu.memory_space<vmem>>, vector<1x8x8x4xbf16>
    %38 = vector.shape_cast %37 : vector<1x8x8x4xbf16> to vector<64x4xbf16>
    %39 = vector.extract_strided_slice %22 {offsets = [8, 0], sizes = [4, 128], strides = [1, 1]} : vector<12x128xbf16> to vector<4x128xbf16>
    %cst_47 = arith.constant dense<0.000000e+00> : vector<64x128xf32>
    %40 = tpu.matmul %38, %39, %cst_47 {dimension_numbers = #tpu.dot_dimension_numbers<[1], [0], [0], [1], [0, 0, 1, 1], [], []>} : vector<64x4xbf16>, vector<4x128xbf16>, vector<64x128xf32> -> vector<64x128xf32>
    %c0_48 = arith.constant 0 : index
    %c0_49 = arith.constant 0 : index
    %41 = vector.load %arg6[%c0_48, %c0_49] : memref<64x128xf32, #tpu.memory_space<vmem>>, vector<64x128xf32>
    %42 = arith.addf %41, %40 : vector<64x128xf32>
    %c0_50 = arith.constant 0 : index
    %c0_51 = arith.constant 0 : index
    %43 = vector.load %arg6[%c0_50, %c0_51] : memref<64x128xf32, #tpu.memory_space<vmem>>, vector<64x128xf32>
    tpu.vector_store %arg6[%c0_50, %c0_51], %42 {strides = array<i32>} : memref<64x128xf32, #tpu.memory_space<vmem>>, vector<64x128xf32>,
    %c2 = arith.constant 2 : index
    %c0_52 = arith.constant 0 : index
    %c0_53 = arith.constant 0 : index
    %44 = vector.load %arg3[%c2, %c0_52, %c0_53] : memref<3x12x128xbf16, #tpu.memory_space<vmem>>, vector<1x12x128xbf16>
    %45 = vector.shape_cast %44 : vector<1x12x128xbf16> to vector<12x128xbf16>
    %c0_54 = arith.constant 0 : index
    %c1_55 = arith.constant 1 : index
    %c0_56 = arith.constant 0 : index
    %c0_57 = arith.constant 0 : index
    %46 = vector.load %arg2[%c0_54, %c1_55, %c0_56, %c0_57] : memref<1x36x9x4xbf16, #tpu.memory_space<vmem>>, vector<1x8x8x4xbf16>
    %47 = vector.shape_cast %46 : vector<1x8x8x4xbf16> to vector<64x4xbf16>
    %48 = vector.extract_strided_slice %45 {offsets = [0, 0], sizes = [4, 128], strides = [1, 1]} : vector<12x128xbf16> to vector<4x128xbf16>
    %cst_58 = arith.constant dense<0.000000e+00> : vector<64x128xf32>
    %49 = tpu.matmul %47, %48, %cst_58 {dimension_numbers = #tpu.dot_dimension_numbers<[1], [0], [0], [1], [0, 0, 1, 1], [], []>} : vector<64x4xbf16>, vector<4x128xbf16>, vector<64x128xf32> -> vector<64x128xf32>
    %c0_59 = arith.constant 0 : index
    %c0_60 = arith.constant 0 : index
    %50 = vector.load %arg6[%c0_59, %c0_60] : memref<64x128xf32, #tpu.memory_space<vmem>>, vector<64x128xf32>
    %51 = arith.addf %50, %49 : vector<64x128xf32>
    %c0_61 = arith.constant 0 : index
    %c0_62 = arith.constant 0 : index
    %52 = vector.load %arg6[%c0_61, %c0_62] : memref<64x128xf32, #tpu.memory_space<vmem>>, vector<64x128xf32>
    tpu.vector_store %arg6[%c0_61, %c0_62], %51 {strides = array<i32>} : memref<64x128xf32, #tpu.memory_space<vmem>>, vector<64x128xf32>,
    %c0_63 = arith.constant 0 : index
    %c10 = arith.constant 10 : index
    %c0_64 = arith.constant 0 : index
    %c0_65 = arith.constant 0 : index
    %53 = vector.load %arg2[%c0_63, %c10, %c0_64, %c0_65] : memref<1x36x9x4xbf16, #tpu.memory_space<vmem>>, vector<1x8x8x4xbf16>
    %54 = vector.shape_cast %53 : vector<1x8x8x4xbf16> to vector<64x4xbf16>
    %55 = vector.extract_strided_slice %45 {offsets = [4, 0], sizes = [4, 128], strides = [1, 1]} : vector<12x128xbf16> to vector<4x128xbf16>
    %cst_66 = arith.constant dense<0.000000e+00> : vector<64x128xf32>
    %56 = tpu.matmul %54, %55, %cst_66 {dimension_numbers = #tpu.dot_dimension_numbers<[1], [0], [0], [1], [0, 0, 1, 1], [], []>} : vector<64x4xbf16>, vector<4x128xbf16>, vector<64x128xf32> -> vector<64x128xf32>
    %c0_67 = arith.constant 0 : index
    %c0_68 = arith.constant 0 : index
    %57 = vector.load %arg6[%c0_67, %c0_68] : memref<64x128xf32, #tpu.memory_space<vmem>>, vector<64x128xf32>
    %58 = arith.addf %57, %56 : vector<64x128xf32>
    %c0_69 = arith.constant 0 : index
    %c0_70 = arith.constant 0 : index
    %59 = vector.load %arg6[%c0_69, %c0_70] : memref<64x128xf32, #tpu.memory_space<vmem>>, vector<64x128xf32>
    tpu.vector_store %arg6[%c0_69, %c0_70], %58 {strides = array<i32>} : memref<64x128xf32, #tpu.memory_space<vmem>>, vector<64x128xf32>,
    %c0_71 = arith.constant 0 : index
    %c1_72 = arith.constant 1 : index
    %c1_73 = arith.constant 1 : index
    %c0_74 = arith.constant 0 : index
    %60 = vector.load %arg2[%c0_71, %c1_72, %c1_73, %c0_74] : memref<1x36x9x4xbf16, #tpu.memory_space<vmem>>, vector<1x8x8x4xbf16>
    %61 = vector.shape_cast %60 : vector<1x8x8x4xbf16> to vector<64x4xbf16>
    %62 = vector.extract_strided_slice %45 {offsets = [8, 0], sizes = [4, 128], strides = [1, 1]} : vector<12x128xbf16> to vector<4x128xbf16>
    %cst_75 = arith.constant dense<0.000000e+00> : vector<64x128xf32>
    %63 = tpu.matmul %61, %62, %cst_75 {dimension_numbers = #tpu.dot_dimension_numbers<[1], [0], [0], [1], [0, 0, 1, 1], [], []>} : vector<64x4xbf16>, vector<4x128xbf16>, vector<64x128xf32> -> vector<64x128xf32>
    %c0_76 = arith.constant 0 : index
    %c0_77 = arith.constant 0 : index
    %64 = vector.load %arg6[%c0_76, %c0_77] : memref<64x128xf32, #tpu.memory_space<vmem>>, vector<64x128xf32>
    %65 = arith.addf %64, %63 : vector<64x128xf32>
    %c0_78 = arith.constant 0 : index
    %c0_79 = arith.constant 0 : index
    %66 = vector.load %arg6[%c0_78, %c0_79] : memref<64x128xf32, #tpu.memory_space<vmem>>, vector<64x128xf32>
    tpu.vector_store %arg6[%c0_78, %c0_79], %65 {strides = array<i32>} : memref<64x128xf32, #tpu.memory_space<vmem>>, vector<64x128xf32>,
    %c0_80 = arith.constant 0 : index
    %c0_81 = arith.constant 0 : index
    %67 = vector.load %arg6[%c0_80, %c0_81] : memref<64x128xf32, #tpu.memory_space<vmem>>, vector<64x128xf32>
    %c0_82 = arith.constant 0 : index
    %c0_83 = arith.constant 0 : index
    %68 = vector.load %arg4[%c0_82, %c0_83] : memref<1x128xf32, #tpu.memory_space<vmem>>, vector<1x128xf32>
    %69 = vector.broadcast %68 : vector<1x128xf32> to vector<64x128xf32>
    %70 = arith.addf %67, %69 : vector<64x128xf32>
    %cst_84 = arith.constant 0.000000e+00 : f32
    %71 = vector.broadcast %cst_84 : f32 to vector<64x128xf32>
    %72 = arith.maximumf %70, %71 : vector<64x128xf32>
    %cst_85 = arith.constant 0.000000e+00 : bf16
    %73 = vector.broadcast %cst_85 : bf16 to vector<1x10x10x128xbf16>
    %c0_86 = arith.constant 0 : index
    %c0_87 = arith.constant 0 : index
    %c0_88 = arith.constant 0 : index
    %c0_89 = arith.constant 0 : index
    %74 = vector.load %arg5[%c0_86, %c0_87, %c0_88, %c0_89] : memref<1x10x10x128xbf16, #tpu.memory_space<vmem>>, vector<1x10x10x128xbf16>
    tpu.vector_store %arg5[%c0_86, %c0_87, %c0_88, %c0_89], %73 {strides = array<i32>} : memref<1x10x10x128xbf16, #tpu.memory_space<vmem>>, vector<1x10x10x128xbf16>,
    %75 = vector.shape_cast %72 : vector<64x128xf32> to vector<1x8x8x128xf32>
    %76 = arith.truncf %75 : vector<1x8x8x128xf32> to vector<1x8x8x128xbf16>
    %c0_90 = arith.constant 0 : index
    %c1_91 = arith.constant 1 : index
    %c1_92 = arith.constant 1 : index
    %c0_93 = arith.constant 0 : index
    %77 = vector.load %arg5[%c0_90, %c1_91, %c1_92, %c0_93] : memref<1x10x10x128xbf16, #tpu.memory_space<vmem>>, vector<1x8x8x128xbf16>
    tpu.vector_store %arg5[%c0_90, %c1_91, %c1_92, %c0_93], %76 {strides = array<i32>} : memref<1x10x10x128xbf16, #tpu.memory_space<vmem>>, vector<1x8x8x128xbf16>,
    return
  }
  func.func @transform_0(%arg0: i32, %arg1: i32) -> (i32, i32, i32, i32) {
    %c0_i32 = arith.constant 0 : i32
    %c0_i32_0 = arith.constant 0 : i32
    %c0_i32_1 = arith.constant 0 : i32
    %c0_i32_2 = arith.constant 0 : i32
    return %arg1, %c0_i32, %c0_i32_0, %c0_i32_1 : i32, i32, i32, i32
  }
  func.func @transform_1(%arg0: i32, %arg1: i32) -> (i32, i32, i32) {
    %c0_i32 = arith.constant 0 : i32
    %c0_i32_0 = arith.constant 0 : i32
    %c0_i32_1 = arith.constant 0 : i32
    return %c0_i32, %c0_i32_0, %arg0 : i32, i32, i32
  }
  func.func @transform_2(%arg0: i32, %arg1: i32) -> (i32, i32) {
    %c0_i32 = arith.constant 0 : i32
    %c0_i32_0 = arith.constant 0 : i32
    return %c0_i32, %arg0 : i32, i32
  }
  func.func @transform_3(%arg0: i32, %arg1: i32) -> (i32, i32, i32, i32) {
    %c0_i32 = arith.constant 0 : i32
    %c0_i32_0 = arith.constant 0 : i32
    %c0_i32_1 = arith.constant 0 : i32
    return %arg1, %c0_i32, %c0_i32_0, %arg0 : i32, i32, i32, i32
  }
}

module attributes {stable_mosaic.version = 11 : i64} {
  func.func @_conv_bn_proj_add_relu_kernel(%arg0: i32, %arg1: i32, %arg2: memref<1x10x10x128xbf16, #tpu.memory_space<vmem>>, %arg3: memref<3x384x128xbf16, #tpu.memory_space<vmem>>, %arg4: memref<1x128xf32, #tpu.memory_space<vmem>>, %arg5: memref<1x36x9x4xbf16, #tpu.memory_space<vmem>>, %arg6: memref<4x128xbf16, #tpu.memory_space<vmem>>, %arg7: memref<1x128xf32, #tpu.memory_space<vmem>>, %arg8: memref<1x8x8x128xbf16, #tpu.memory_space<vmem>>, %arg9: memref<64x128xf32, #tpu.memory_space<vmem>>) attributes {dimension_semantics = [#tpu.dimension_semantics<parallel>, #tpu.dimension_semantics<parallel>], iteration_bounds = array<i64: 1, 2>, scalar_prefetch = 0 : i64, scratch_operands = 1 : i64, tpu.core_type = #tpu.core_type<tc>, window_params = [{transform_indices = @transform_0, window_bounds = array<i64: 1, 10, 10, 128>}, {transform_indices = @transform_1, window_bounds = array<i64: 3, 384, 128>}, {transform_indices = @transform_2, window_bounds = array<i64: 1, 128>}, {transform_indices = @transform_3, window_bounds = array<i64: 1, 36, 9, 4>}, {transform_indices = @transform_4, window_bounds = array<i64: 4, 128>}, {transform_indices = @transform_5, window_bounds = array<i64: 1, 128>}, {transform_indices = @transform_6, window_bounds = array<i64: 1, 8, 8, 128>}]} {
    %c0 = arith.constant 0 : index
    %c0_0 = arith.constant 0 : index
    %c0_1 = arith.constant 0 : index
    %c0_2 = arith.constant 0 : index
    %0 = vector.load %arg2[%c0, %c0_0, %c0_1, %c0_2] : memref<1x10x10x128xbf16, #tpu.memory_space<vmem>>, vector<1x8x8x128xbf16>
    %c0_3 = arith.constant 0 : index
    %c0_4 = arith.constant 0 : index
    %c1 = arith.constant 1 : index
    %c0_5 = arith.constant 0 : index
    %1 = vector.load %arg2[%c0_3, %c0_4, %c1, %c0_5] : memref<1x10x10x128xbf16, #tpu.memory_space<vmem>>, vector<1x8x8x128xbf16>
    %c0_6 = arith.constant 0 : index
    %c0_7 = arith.constant 0 : index
    %c2 = arith.constant 2 : index
    %c0_8 = arith.constant 0 : index
    %2 = vector.load %arg2[%c0_6, %c0_7, %c2, %c0_8] : memref<1x10x10x128xbf16, #tpu.memory_space<vmem>>, vector<1x8x8x128xbf16>
    %3 = tpu.concatenate %0, %1, %2 in 3 : vector<1x8x8x128xbf16>, vector<1x8x8x128xbf16>, vector<1x8x8x128xbf16> -> vector<1x8x8x384xbf16>
    %4 = vector.shape_cast %3 : vector<1x8x8x384xbf16> to vector<64x384xbf16>
    %c0_9 = arith.constant 0 : index
    %c0_10 = arith.constant 0 : index
    %c0_11 = arith.constant 0 : index
    %5 = vector.load %arg3[%c0_9, %c0_10, %c0_11] : memref<3x384x128xbf16, #tpu.memory_space<vmem>>, vector<1x384x128xbf16>
    %6 = vector.shape_cast %5 : vector<1x384x128xbf16> to vector<384x128xbf16>
    %cst = arith.constant dense<0.000000e+00> : vector<64x128xf32>
    %7 = tpu.matmul %4, %6, %cst {dimension_numbers = #tpu.dot_dimension_numbers<[1], [0], [0], [1], [0, 0, 1, 1], [], []>} : vector<64x384xbf16>, vector<384x128xbf16>, vector<64x128xf32> -> vector<64x128xf32>
    %c0_12 = arith.constant 0 : index
    %c0_13 = arith.constant 0 : index
    %8 = vector.load %arg9[%c0_12, %c0_13] : memref<64x128xf32, #tpu.memory_space<vmem>>, vector<64x128xf32>
    tpu.vector_store %arg9[%c0_12, %c0_13], %7 {strides = array<i32>} : memref<64x128xf32, #tpu.memory_space<vmem>>, vector<64x128xf32>,
    %c0_14 = arith.constant 0 : index
    %c1_15 = arith.constant 1 : index
    %c0_16 = arith.constant 0 : index
    %c0_17 = arith.constant 0 : index
    %9 = vector.load %arg2[%c0_14, %c1_15, %c0_16, %c0_17] : memref<1x10x10x128xbf16, #tpu.memory_space<vmem>>, vector<1x8x8x128xbf16>
    %c0_18 = arith.constant 0 : index
    %c1_19 = arith.constant 1 : index
    %c1_20 = arith.constant 1 : index
    %c0_21 = arith.constant 0 : index
    %10 = vector.load %arg2[%c0_18, %c1_19, %c1_20, %c0_21] : memref<1x10x10x128xbf16, #tpu.memory_space<vmem>>, vector<1x8x8x128xbf16>
    %c0_22 = arith.constant 0 : index
    %c1_23 = arith.constant 1 : index
    %c2_24 = arith.constant 2 : index
    %c0_25 = arith.constant 0 : index
    %11 = vector.load %arg2[%c0_22, %c1_23, %c2_24, %c0_25] : memref<1x10x10x128xbf16, #tpu.memory_space<vmem>>, vector<1x8x8x128xbf16>
    %12 = tpu.concatenate %9, %10, %11 in 3 : vector<1x8x8x128xbf16>, vector<1x8x8x128xbf16>, vector<1x8x8x128xbf16> -> vector<1x8x8x384xbf16>
    %13 = vector.shape_cast %12 : vector<1x8x8x384xbf16> to vector<64x384xbf16>
    %c1_26 = arith.constant 1 : index
    %c0_27 = arith.constant 0 : index
    %c0_28 = arith.constant 0 : index
    %14 = vector.load %arg3[%c1_26, %c0_27, %c0_28] : memref<3x384x128xbf16, #tpu.memory_space<vmem>>, vector<1x384x128xbf16>
    %15 = vector.shape_cast %14 : vector<1x384x128xbf16> to vector<384x128xbf16>
    %cst_29 = arith.constant dense<0.000000e+00> : vector<64x128xf32>
    %16 = tpu.matmul %13, %15, %cst_29 {dimension_numbers = #tpu.dot_dimension_numbers<[1], [0], [0], [1], [0, 0, 1, 1], [], []>} : vector<64x384xbf16>, vector<384x128xbf16>, vector<64x128xf32> -> vector<64x128xf32>
    %c0_30 = arith.constant 0 : index
    %c0_31 = arith.constant 0 : index
    %17 = vector.load %arg9[%c0_30, %c0_31] : memref<64x128xf32, #tpu.memory_space<vmem>>, vector<64x128xf32>
    %18 = arith.addf %17, %16 : vector<64x128xf32>
    %c0_32 = arith.constant 0 : index
    %c0_33 = arith.constant 0 : index
    %19 = vector.load %arg9[%c0_32, %c0_33] : memref<64x128xf32, #tpu.memory_space<vmem>>, vector<64x128xf32>
    tpu.vector_store %arg9[%c0_32, %c0_33], %18 {strides = array<i32>} : memref<64x128xf32, #tpu.memory_space<vmem>>, vector<64x128xf32>,
    %c0_34 = arith.constant 0 : index
    %c2_35 = arith.constant 2 : index
    %c0_36 = arith.constant 0 : index
    %c0_37 = arith.constant 0 : index
    %20 = vector.load %arg2[%c0_34, %c2_35, %c0_36, %c0_37] : memref<1x10x10x128xbf16, #tpu.memory_space<vmem>>, vector<1x8x8x128xbf16>
    %c0_38 = arith.constant 0 : index
    %c2_39 = arith.constant 2 : index
    %c1_40 = arith.constant 1 : index
    %c0_41 = arith.constant 0 : index
    %21 = vector.load %arg2[%c0_38, %c2_39, %c1_40, %c0_41] : memref<1x10x10x128xbf16, #tpu.memory_space<vmem>>, vector<1x8x8x128xbf16>
    %c0_42 = arith.constant 0 : index
    %c2_43 = arith.constant 2 : index
    %c2_44 = arith.constant 2 : index
    %c0_45 = arith.constant 0 : index
    %22 = vector.load %arg2[%c0_42, %c2_43, %c2_44, %c0_45] : memref<1x10x10x128xbf16, #tpu.memory_space<vmem>>, vector<1x8x8x128xbf16>
    %23 = tpu.concatenate %20, %21, %22 in 3 : vector<1x8x8x128xbf16>, vector<1x8x8x128xbf16>, vector<1x8x8x128xbf16> -> vector<1x8x8x384xbf16>
    %24 = vector.shape_cast %23 : vector<1x8x8x384xbf16> to vector<64x384xbf16>
    %c2_46 = arith.constant 2 : index
    %c0_47 = arith.constant 0 : index
    %c0_48 = arith.constant 0 : index
    %25 = vector.load %arg3[%c2_46, %c0_47, %c0_48] : memref<3x384x128xbf16, #tpu.memory_space<vmem>>, vector<1x384x128xbf16>
    %26 = vector.shape_cast %25 : vector<1x384x128xbf16> to vector<384x128xbf16>
    %cst_49 = arith.constant dense<0.000000e+00> : vector<64x128xf32>
    %27 = tpu.matmul %24, %26, %cst_49 {dimension_numbers = #tpu.dot_dimension_numbers<[1], [0], [0], [1], [0, 0, 1, 1], [], []>} : vector<64x384xbf16>, vector<384x128xbf16>, vector<64x128xf32> -> vector<64x128xf32>
    %c0_50 = arith.constant 0 : index
    %c0_51 = arith.constant 0 : index
    %28 = vector.load %arg9[%c0_50, %c0_51] : memref<64x128xf32, #tpu.memory_space<vmem>>, vector<64x128xf32>
    %29 = arith.addf %28, %27 : vector<64x128xf32>
    %c0_52 = arith.constant 0 : index
    %c0_53 = arith.constant 0 : index
    %30 = vector.load %arg9[%c0_52, %c0_53] : memref<64x128xf32, #tpu.memory_space<vmem>>, vector<64x128xf32>
    tpu.vector_store %arg9[%c0_52, %c0_53], %29 {strides = array<i32>} : memref<64x128xf32, #tpu.memory_space<vmem>>, vector<64x128xf32>,
    %c0_54 = arith.constant 0 : index
    %c27 = arith.constant 27 : index
    %c0_55 = arith.constant 0 : index
    %c0_56 = arith.constant 0 : index
    %31 = vector.load %arg5[%c0_54, %c27, %c0_55, %c0_56] : memref<1x36x9x4xbf16, #tpu.memory_space<vmem>>, vector<1x8x8x4xbf16>
    %32 = vector.shape_cast %31 : vector<1x8x8x4xbf16> to vector<64x4xbf16>
    %c0_57 = arith.constant 0 : index
    %c0_58 = arith.constant 0 : index
    %33 = vector.load %arg6[%c0_57, %c0_58] : memref<4x128xbf16, #tpu.memory_space<vmem>>, vector<4x128xbf16>
    %cst_59 = arith.constant dense<0.000000e+00> : vector<64x128xf32>
    %34 = tpu.matmul %32, %33, %cst_59 {dimension_numbers = #tpu.dot_dimension_numbers<[1], [0], [0], [1], [0, 0, 1, 1], [], []>} : vector<64x4xbf16>, vector<4x128xbf16>, vector<64x128xf32> -> vector<64x128xf32>
    %c0_60 = arith.constant 0 : index
    %c0_61 = arith.constant 0 : index
    %35 = vector.load %arg9[%c0_60, %c0_61] : memref<64x128xf32, #tpu.memory_space<vmem>>, vector<64x128xf32>
    %c0_62 = arith.constant 0 : index
    %c0_63 = arith.constant 0 : index
    %36 = vector.load %arg4[%c0_62, %c0_63] : memref<1x128xf32, #tpu.memory_space<vmem>>, vector<1x128xf32>
    %37 = vector.broadcast %36 : vector<1x128xf32> to vector<64x128xf32>
    %38 = arith.addf %35, %37 : vector<64x128xf32>
    %c0_64 = arith.constant 0 : index
    %c0_65 = arith.constant 0 : index
    %39 = vector.load %arg7[%c0_64, %c0_65] : memref<1x128xf32, #tpu.memory_space<vmem>>, vector<1x128xf32>
    %40 = vector.broadcast %39 : vector<1x128xf32> to vector<64x128xf32>
    %41 = arith.addf %38, %40 : vector<64x128xf32>
    %42 = arith.addf %41, %34 : vector<64x128xf32>
    %cst_66 = arith.constant 0.000000e+00 : f32
    %43 = vector.broadcast %cst_66 : f32 to vector<64x128xf32>
    %44 = arith.maximumf %42, %43 : vector<64x128xf32>
    %45 = vector.shape_cast %44 : vector<64x128xf32> to vector<1x8x8x128xf32>
    %46 = arith.truncf %45 : vector<1x8x8x128xf32> to vector<1x8x8x128xbf16>
    %c0_67 = arith.constant 0 : index
    %c0_68 = arith.constant 0 : index
    %c0_69 = arith.constant 0 : index
    %c0_70 = arith.constant 0 : index
    %47 = vector.load %arg8[%c0_67, %c0_68, %c0_69, %c0_70] : memref<1x8x8x128xbf16, #tpu.memory_space<vmem>>, vector<1x8x8x128xbf16>
    tpu.vector_store %arg8[%c0_67, %c0_68, %c0_69, %c0_70], %46 {strides = array<i32>} : memref<1x8x8x128xbf16, #tpu.memory_space<vmem>>, vector<1x8x8x128xbf16>,
    return
  }
  func.func @transform_0(%arg0: i32, %arg1: i32) -> (i32, i32, i32, i32) {
    %c0_i32 = arith.constant 0 : i32
    %c0_i32_0 = arith.constant 0 : i32
    %c0_i32_1 = arith.constant 0 : i32
    %c0_i32_2 = arith.constant 0 : i32
    return %arg1, %c0_i32, %c0_i32_0, %c0_i32_1 : i32, i32, i32, i32
  }
  func.func @transform_1(%arg0: i32, %arg1: i32) -> (i32, i32, i32) {
    %c0_i32 = arith.constant 0 : i32
    %c0_i32_0 = arith.constant 0 : i32
    %c0_i32_1 = arith.constant 0 : i32
    return %c0_i32, %c0_i32_0, %arg0 : i32, i32, i32
  }
  func.func @transform_2(%arg0: i32, %arg1: i32) -> (i32, i32) {
    %c0_i32 = arith.constant 0 : i32
    %c0_i32_0 = arith.constant 0 : i32
    return %c0_i32, %arg0 : i32, i32
  }
  func.func @transform_3(%arg0: i32, %arg1: i32) -> (i32, i32, i32, i32) {
    %c0_i32 = arith.constant 0 : i32
    %c0_i32_0 = arith.constant 0 : i32
    %c0_i32_1 = arith.constant 0 : i32
    %c0_i32_2 = arith.constant 0 : i32
    return %arg1, %c0_i32, %c0_i32_0, %c0_i32_1 : i32, i32, i32, i32
  }
  func.func @transform_4(%arg0: i32, %arg1: i32) -> (i32, i32) {
    %c0_i32 = arith.constant 0 : i32
    %c0_i32_0 = arith.constant 0 : i32
    return %c0_i32, %arg0 : i32, i32
  }
  func.func @transform_5(%arg0: i32, %arg1: i32) -> (i32, i32) {
    %c0_i32 = arith.constant 0 : i32
    %c0_i32_0 = arith.constant 0 : i32
    return %c0_i32, %arg0 : i32, i32
  }
  func.func @transform_6(%arg0: i32, %arg1: i32) -> (i32, i32, i32, i32) {
    %c0_i32 = arith.constant 0 : i32
    %c0_i32_0 = arith.constant 0 : i32
    %c0_i32_1 = arith.constant 0 : i32
    return %arg1, %c0_i32, %c0_i32_0, %arg0 : i32, i32, i32, i32
  }
}

</mosaic_0001>

<llo_original>
// kernel: basic_block_forward.2
$region0: #{basic_block_forward.2}
  #allocation0 [shape = 'u32[]', space=smem, size = 0x4, offset = 0x4, fixed_abs, tag = 'smem constant byte address 0x4 - core index']
  #allocation1 [shape = 'u32[144,128]{1,0:T(1,128)}', space=vmem, size = 0x12000, scoped, tag = 'internal scratch']
  #allocation2 [shape = 'f32[64,128]{1,0:T(8,128)}', space=vmem, size = 0x8000, scoped, tag = 'scratch operand']
  %s0 = inlined_call_operand.vmem [shape: bf16[2,36,9,4], index: 0, kind: input, shape index: {}]
  %s1 = inlined_call_operand.vmem [shape: bf16[3,12,128], index: 1, kind: input, shape index: {}]
  %s2 = inlined_call_operand.vmem [shape: f32[1,128], index: 2, kind: input, shape index: {}]
  %s3 = inlined_call_operand.vmem [shape: bf16[2,10,10,128], index: 3, kind: output, shape index: {}]
  %s4 = sld [smem:[#allocation0]]
  $region45: #{basic_block_forward.2} parent=0
    _
  %s6 = ssub.s32 1, %s4
  %s7 = scalar_select 0, %s6, %s4
  loop: start=0, step=1, limit=4
  $region2: #{basic_block_forward.2} parent=0 // loop_pre_header
    _
  $region3: #{basic_block_forward.2} parent=0 // loop_header
    %s9 = sphi 0, %s13
    %p10 = scmp.ge.s32.totalorder %s9, 4
    %s16 = sphi 0, %s28
    %s17 = sphi 0, %s24
    %s18 = sphi 0, %s16
    %s19 = sphi 0, %s17
    %s20 = sphi 0, %s18
    %s21 = sphi 0, %s19
    %s31 = sphi 0, %s33
    %s34 = sphi 0, %s31
    %s35 = sphi 0, %s34
    %s51 = sphi 0, %s35
    %s57 = sphi 0, %s59
    %s60 = sphi 0, %s57
    %s61 = sphi 0, %s60
    %s77 = sphi 0, %s61
    %s83 = sphi 0, %s85
    %s86 = sphi 0, %s83
    %s87 = sphi 0, %s86
    %s103 = sphi 0, %s87
    %s111 = sphi 0, %s113
    %s114 = sphi 0, %s111
    %s115 = sphi 0, %s114
    %s131 = sphi 0, %s115
  $region4: #{basic_block_forward.2} parent=0 // loop_header_branch
    %12 = sbr.rel (%p10) target = $region8
  $region5: #{basic_block_forward.2} parent=0 // loop_body
    %s14 = ssub.s32 %s9, 1
    %s15 = ssub.s32 %s9, 2
    %s22 = sadd.s32 1, %s17
    %p23 = scmp.ge.s32.totalorder %s22, 2
    %s24 = scalar_select %p23, 0, %s22
    %s25 = sadd.s32 1, %s16
    %s26 = scalar_select %p23, %s25, %s16
    %p27 = scmp.ge.s32.totalorder %s26, 1
    %s28 = scalar_select %p27, 0, %s26
    %s29 = ssub.s32 %s17, %s24
    %p30 = scmp.eq.s32.totalorder %s29, 0
    %s32 = sadd.s32 %s31, 1
    %s33 = scalar_select %p30, %s31, %s32
    %p36 = pneg %p30
    %p37 = scmp.eq.s32.totalorder %s9, 1
    %p38 = por %p36, %p37
    %p39 = scmp.ne.s32.totalorder %s31, %s34
    %p40 = scmp.eq.s32.totalorder %s9, 0
    %p41 = por %p39, %p40
    %p42 = scmp.ne.s32.totalorder %s31, %s34
    %p43 = scmp.eq.s32.totalorder %s14, 1
    %p44 = por %p42, %p43
    %p45 = scmp.ne.s32.totalorder %s34, %s35
    %p46 = scmp.eq.s32.totalorder %s14, 0
    %p47 = por %p45, %p46
    %p48 = scmp.ne.s32.totalorder %s34, %s35
    %p49 = scmp.eq.s32.totalorder %s15, 1
    %p50 = por %p48, %p49
    %p52 = scmp.ne.s32.totalorder %s35, %s51
    %p53 = scmp.eq.s32.totalorder %s15, 0
    %p54 = por %p52, %p53
    %s55 = ssub.s32 %s16, %s28
    %p56 = scmp.eq.s32.totalorder %s55, 0
    %s58 = sadd.s32 %s57, 1
    %s59 = scalar_select %p56, %s57, %s58
    %p62 = pneg %p56
    %p63 = scmp.eq.s32.totalorder %s9, 1
    %p64 = por %p62, %p63
    %p65 = scmp.ne.s32.totalorder %s57, %s60
    %p66 = scmp.eq.s32.totalorder %s9, 0
    %p67 = por %p65, %p66
    %p68 = scmp.ne.s32.totalorder %s57, %s60
    %p69 = scmp.eq.s32.totalorder %s14, 1
    %p70 = por %p68, %p69
    %p71 = scmp.ne.s32.totalorder %s60, %s61
    %p72 = scmp.eq.s32.totalorder %s14, 0
    %p73 = por %p71, %p72
    %p74 = scmp.ne.s32.totalorder %s60, %s61
    %p75 = scmp.eq.s32.totalorder %s15, 1
    %p76 = por %p74, %p75
    %p78 = scmp.ne.s32.totalorder %s61, %s77
    %p79 = scmp.eq.s32.totalorder %s15, 0
    %p80 = por %p78, %p79
    %s81 = ssub.s32 %s16, %s28
    %p82 = scmp.eq.s32.totalorder %s81, 0
    %s84 = sadd.s32 %s83, 1
    %s85 = scalar_select %p82, %s83, %s84
    %p88 = pneg %p82
    %p89 = scmp.eq.s32.totalorder %s9, 1
    %p90 = por %p88, %p89
    %p91 = scmp.ne.s32.totalorder %s83, %s86
    %p92 = scmp.eq.s32.totalorder %s9, 0
    %p93 = por %p91, %p92
    %p94 = scmp.ne.s32.totalorder %s83, %s86
    %p95 = scmp.eq.s32.totalorder %s14, 1
    %p96 = por %p94, %p95
    %p97 = scmp.ne.s32.totalorder %s86, %s87
    %p98 = scmp.eq.s32.totalorder %s14, 0
    %p99 = por %p97, %p98
    %p100 = scmp.ne.s32.totalorder %s86, %s87
    %p101 = scmp.eq.s32.totalorder %s15, 1
    %p102 = por %p100, %p101
    %p104 = scmp.ne.s32.totalorder %s87, %s103
    %p105 = scmp.eq.s32.totalorder %s15, 0
    %p106 = por %p104, %p105
    %s107 = ssub.s32 %s17, %s24
    %s108 = ssub.s32 %s16, %s28
    %s109 = sor.u32 %s107, %s108
    %p110 = scmp.eq.s32.totalorder %s109, 0
    %s112 = sadd.s32 %s111, 1
    %s113 = scalar_select %p110, %s111, %s112
    %p116 = pneg %p110
    %p117 = scmp.eq.s32.totalorder %s9, 1
    %p118 = por %p116, %p117
    %p119 = scmp.ne.s32.totalorder %s111, %s114
    %p120 = scmp.eq.s32.totalorder %s9, 0
    %p121 = por %p119, %p120
    %p122 = scmp.ne.s32.totalorder %s111, %s114
    %p123 = scmp.eq.s32.totalorder %s14, 1
    %p124 = por %p122, %p123
    %p125 = scmp.ne.s32.totalorder %s114, %s115
    %p126 = scmp.eq.s32.totalorder %s14, 0
    %p127 = por %p125, %p126
    %p128 = scmp.ne.s32.totalorder %s114, %s115
    %p129 = scmp.eq.s32.totalorder %s15, 1
    %p130 = por %p128, %p129
    %p132 = scmp.ne.s32.totalorder %s115, %s131
    %p133 = scmp.eq.s32.totalorder %s15, 0
    %p134 = por %p132, %p133
    %p135 = scmp.le.s32.totalorder 1, %s9
    %p136 = scmp.lt.s32.totalorder %s9, 3
    %p137 = pnand %p135, %p136
    %p138 = pneg %p137
    // Predicated region
    $region9: #{basic_block_forward.2} parent=5 // pred_check
      _
    $region10: #{basic_block_forward.2} parent=5 // pred_check_branch
      %140 = sbr.rel (%p137) target = $region12
    $region11: #{basic_block_forward.2} parent=5 // pred_region
      %s141 = ssub.s32 %s9, 1
      // Predicated region
      $region13: #{basic_block_forward.2} parent=11 // pred_check
        %p142 = pneg %p73
      $region14: #{basic_block_forward.2} parent=11 // pred_check_branch
        %144 = sbr.rel (%p142) target = $region16
      $region15: #{basic_block_forward.2} parent=11 // pred_region
        %p145 = scmp.lt.s32.totalorder %s18, 0
        %s146 = scalar_select %p145, %s18, 0
        %s147 = smul.addr %s146, 4
        %s148 = scalar_lea.vmem %s1, %s147
      $region16: #{basic_block_forward.2} parent=11 // pred_fallthru
        _
      // Predicated region
      $region17: #{basic_block_forward.2} parent=11 // pred_check
        %p149 = pneg %p99
      $region18: #{basic_block_forward.2} parent=11 // pred_check_branch
        %151 = sbr.rel (%p149) target = $region20
      $region19: #{basic_block_forward.2} parent=11 // pred_region
        %p152 = scmp.lt.s32.totalorder %s18, 0
        %s153 = scalar_select %p152, %s18, 0
        %s154 = scalar_lea.vmem %s2, %s153
      $region20: #{basic_block_forward.2} parent=11 // pred_fallthru
        _
    $region12: #{basic_block_forward.2} parent=5 // pred_fallthru
      _
    %p155 = scmp.lt.s32.totalorder %s9, 2
    // Predicated region
    $region21: #{basic_block_forward.2} parent=5 // pred_check
      %p156 = pneg %p155
    $region22: #{basic_block_forward.2} parent=5 // pred_check_branch
      %158 = sbr.rel (%p156) target = $region24
    $region23: #{basic_block_forward.2} parent=5 // pred_region
      // Predicated region
      $region25: #{basic_block_forward.2} parent=23 // pred_check
        %p159 = pneg %p41
      $region26: #{basic_block_forward.2} parent=23 // pred_check_branch
        %161 = sbr.rel (%p159) target = $region28
      $region27: #{basic_block_forward.2} parent=23 // pred_region
        %p162 = scmp.lt.s32.totalorder %s17, 1
        %s163 = scalar_select %p162, %s17, 1
        %s164 = smul.addr %s163, 72
        %s165 = smul.addr %s164, 4
        %s166 = scalar_lea.vmem %s0, %s165
      $region28: #{basic_block_forward.2} parent=23 // pred_fallthru
        _
    $region24: #{basic_block_forward.2} parent=5 // pred_fallthru
      _
    %p167 = scmp.le.s32.totalorder 1, %s9
    %p168 = scmp.lt.s32.totalorder %s9, 3
    %p169 = pnand %p167, %p168
    %p170 = pneg %p169
    // Predicated region
    $region29: #{basic_block_forward.2} parent=5 // pred_check
      _
    $region30: #{basic_block_forward.2} parent=5 // pred_check_branch
      %172 = sbr.rel (%p169) target = $region32
    $region31: #{basic_block_forward.2} parent=5 // pred_region
      %s173 = ssub.s32 %s9, 1
      %p174 = scmp.lt.s32.totalorder %s19, 1
      %s175 = scalar_select %p174, %s19, 1
      %s176 = smul.addr %s175, 72
      %s177 = smul.addr %s176, 4
      %s178 = scalar_lea.vmem %s0, %s177
      %p179 = pneg %p47
      %p180 = pneg %p44
      %p181 = scmp.lt.s32.totalorder %s18, 0
      %s182 = scalar_select %p181, %s18, 0
      %s183 = smul.addr %s182, 4
      %s184 = scalar_lea.vmem %s1, %s183
      %p185 = pneg %p73
      %p186 = pneg %p70
      %p187 = scmp.lt.s32.totalorder %s18, 0
      %s188 = scalar_select %p187, %s18, 0
      %s189 = scalar_lea.vmem %s2, %s188
      %p190 = pneg %p99
      %p191 = pneg %p96
      %p192 = pneg %p127
      %p193 = pneg %p124
      %p194 = scmp.lt.s32.totalorder %s19, 1
      %s195 = scalar_select %p194, %s19, 1
      %p196 = scmp.lt.s32.totalorder %s18, 0
      %s197 = scalar_select %p196, %s18, 0
      %s198 = smul.addr %s195, 20
      %s199 = sadd.s32 %s197, %s198
      %s200 = smul.addr %s199, 4
      %s201 = scalar_lea.vmem %s3, %s200
      %p202 = scmp.lt.s32.totalorder %s19, 1
      %s203 = scalar_select %p202, %s19, 1
      %s204 = smul.addr %s203, 72
      %s205 = smul.addr %s204, 4
      %s206 = scalar_lea.vmem %s0, %s205
      %p207 = scmp.lt.s32.totalorder %s18, 0
      %s208 = scalar_select %p207, %s18, 0
      %s209 = smul.addr %s208, 4
      %s210 = scalar_lea.vmem %s1, %s209
      %p211 = scmp.lt.s32.totalorder %s18, 0
      %s212 = scalar_select %p211, %s18, 0
      %s213 = scalar_lea.vmem %s2, %s212
      %p214 = scmp.lt.s32.totalorder %s19, 1
      %s215 = scalar_select %p214, %s19, 1
      %p216 = scmp.lt.s32.totalorder %s18, 0
      %s217 = scalar_select %p216, %s18, 0
      %s218 = smul.addr %s215, 20
      %s219 = sadd.s32 %s217, %s218
      %s220 = smul.addr %s219, 4
      %s221 = scalar_lea.vmem %s3, %s220
      %v223 = vld [vmem:[%s210] sm:$0xf]
      %v224 = vld [vmem:[%s210 + $0x4] sm:$0x3]
      %v225 = vld [vmem:[%s206] sm:$0xf]
      %v226 = vld [vmem:[%s206 + $0x8] sm:$0xf]
      %v227 = vld [vmem:[%s206 + $0x10] sm:$0xf]
      %v228 = vld [vmem:[%s206 + $0x18] sm:$0xf]
      %v229 = vld [vmem:[%s206 + $0x20] sm:$0xf]
      %v230 = vld [vmem:[%s206 + $0x28] sm:$0xf]
      %v231 = vld [vmem:[%s206 + $0x30] sm:$0xf]
      %v232 = vld [vmem:[%s206 + $0x38] sm:$0xf]
      %v241 = vunpack.c.l.b16 %v225
      %v242 = vunpack.c.l.b16 %v226
      %v243 = vunpack.c.l.b16 %v227
      %v244 = vunpack.c.l.b16 %v228
      %v245 = vunpack.c.l.b16 %v229
      %v246 = vunpack.c.l.b16 %v230
      %v247 = vunpack.c.l.b16 %v231
      %v248 = vunpack.c.l.b16 %v232
      %v249 = vpack.c.b16 %v242, %v241
      %v250 = vpack.c.b16 %v244, %v243
      %v251 = vpack.c.b16 %v246, %v245
      %v252 = vpack.c.b16 %v248, %v247
      %vm253 = vcmask 31744
      %v255 = vsel %vm253, %v249, 0
      %v258 = vsel %vm253, %v250, 0
      %v261 = vsel %vm253, %v251, 0
      %v264 = vsel %vm253, %v252, 0
      %vm266 = vcmask 1041408
      %v268 = vsel %vm266, %v223, 0
      %270 = vmatprep.subr.bf16.mxu0 0
      %271 = vmatpush1.bf16.msra.mxu0 0
      %272 = vmatprep.subr.bf16.mxu0 0
      %273 = vmatpush1.bf16.msra.mxu0 0
      %274 = vmatprep.subr.bf16.mxu0 0
      %275 = vmatpush1.bf16.msra.mxu0 0
      %276 = vmatprep.subr.bf16.mxu0 0
      %277 = vmatpush1.bf16.msra.mxu0 0
      %278 = vmatprep.subr.bf16.mxu0 0
      %279 = vmatpush1.bf16.msra.mxu0 0
      %280 = vmatprep.subr.bf16.mxu0 0
      %281 = vmatpush1.bf16.msra.mxu0 0
      %282 = vmatprep.subr.bf16.mxu0 0
      %283 = vmatpush1.bf16.msra.mxu0 0
      %284 = vmatprep.subr.bf16.mxu0 0
      %285 = vmatpush1.bf16.msra.mxu0 %v268
      %286 = vmatprep.subr.bf16.mxu0 0
      %287 = vmatpush2.bf16.msra.mxu0 0
      %288 = vmatprep.subr.bf16.mxu0 0
      %289 = vmatpush2.bf16.msra.mxu0 0
      %290 = vmatprep.subr.bf16.mxu0 0
      %291 = vmatpush2.bf16.msra.mxu0 0
      %292 = vmatprep.subr.bf16.mxu0 0
      %293 = vmatpush2.bf16.msra.mxu0 0
      %294 = vmatprep.subr.bf16.mxu0 0
      %295 = vmatpush2.bf16.msra.mxu0 0
      %296 = vmatprep.subr.bf16.mxu0 0
      %297 = vmatpush2.bf16.msra.mxu0 0
      %298 = vmatprep.subr.bf16.mxu0 0
      %299 = vmatpush2.bf16.msra.mxu0 0
      %300 = vmatprep.subr.bf16.mxu0 0
      %301 = vmatpush2.bf16.msra.mxu0 0
      %302 = vmatprep.mubr.bf16.mxu0 0
      %303 = vmatmul.mubr.bf16.gmra.mxu0 %v255
      %v304 = vpop.f32.mrf.mxu0
      %v305 = vadd.f32 0.0, %v304
      %v306 = vpop.f32.mrf.mxu0
      %v307 = vpop.f32.mrf.mxu0
      %v308 = vadd.f32 0.0, %v307
      %v309 = vpop.f32.mrf.mxu0
      %310 = vmatprep.mubr.bf16.mxu0 0
      %311 = vmatmul.mubr.bf16.gmra.mxu0 %v258
      %v312 = vpop.f32.mrf.mxu0
      %v313 = vadd.f32 0.0, %v312
      %v314 = vpop.f32.mrf.mxu0
      %v315 = vpop.f32.mrf.mxu0
      %v316 = vadd.f32 0.0, %v315
      %v317 = vpop.f32.mrf.mxu0
      %318 = vmatprep.mubr.bf16.mxu0 0
      %319 = vmatmul.mubr.bf16.gmra.mxu0 %v261
      %v320 = vpop.f32.mrf.mxu0
      %v321 = vadd.f32 0.0, %v320
      %v322 = vpop.f32.mrf.mxu0
      %v323 = vpop.f32.mrf.mxu0
      %v324 = vadd.f32 0.0, %v323
      %v325 = vpop.f32.mrf.mxu0
      %326 = vmatprep.mubr.bf16.mxu0 0
      %327 = vmatmul.mubr.bf16.gmra.mxu0 %v264
      %v328 = vpop.f32.mrf.mxu0
      %v329 = vadd.f32 0.0, %v328
      %v330 = vpop.f32.mrf.mxu0
      %v331 = vpop.f32.mrf.mxu0
      %v332 = vadd.f32 0.0, %v331
      %v333 = vpop.f32.mrf.mxu0
      %334 = vdwg.mxu0
      %335 = vst [vmem:[#allocation2] sm:$0xff] %v305
      %336 = vst [vmem:[#allocation2 + $0x8] sm:$0xff] %v308
      %337 = vst [vmem:[#allocation2 + $0x10] sm:$0xff] %v313
      %338 = vst [vmem:[#allocation2 + $0x18] sm:$0xff] %v316
      %339 = vst [vmem:[#allocation2 + $0x20] sm:$0xff] %v321
      %340 = vst [vmem:[#allocation2 + $0x28] sm:$0xff] %v324
      %341 = vst [vmem:[#allocation2 + $0x30] sm:$0xff] %v329
      %342 = vst [vmem:[#allocation2 + $0x38] sm:$0xff] %v332
      %s343 = scalar_lea.vmem %s206, 72
      %v344 = vld [vmem:[%s343] sm:$0xf]
      %v345 = vld [vmem:[%s343 + $0x8] sm:$0xf]
      %v346 = vld [vmem:[%s343 + $0x10] sm:$0xf]
      %v347 = vld [vmem:[%s343 + $0x18] sm:$0xf]
      %v348 = vld [vmem:[%s343 + $0x20] sm:$0xf]
      %v349 = vld [vmem:[%s343 + $0x28] sm:$0xf]
      %v350 = vld [vmem:[%s343 + $0x30] sm:$0xf]
      %v351 = vld [vmem:[%s343 + $0x38] sm:$0xf]
      %v360 = vunpack.c.l.b16 %v344
      %v361 = vunpack.c.l.b16 %v345
      %v362 = vunpack.c.l.b16 %v346
      %v363 = vunpack.c.l.b16 %v347
      %v364 = vunpack.c.l.b16 %v348
      %v365 = vunpack.c.l.b16 %v349
      %v366 = vunpack.c.l.b16 %v350
      %v367 = vunpack.c.l.b16 %v351
      %v368 = vpack.c.b16 %v361, %v360
      %v369 = vpack.c.b16 %v363, %v362
      %v370 = vpack.c.b16 %v365, %v364
      %v371 = vpack.c.b16 %v367, %v366
      %v373 = vunpack.c.l.b16 %v223
      %v374 = vpack.c.b16 %v373, %v373
      %v375 = vrot.slane %v374, 2
      %v377 = vsel %vm253, %v368, 0
      %v380 = vsel %vm253, %v369, 0
      %v383 = vsel %vm253, %v370, 0
      %v386 = vsel %vm253, %v371, 0
      %v389 = vsel %vm266, %v375, 0
      %391 = vmatprep.subr.bf16.mxu0 0
      %392 = vmatpush1.bf16.msra.mxu0 0
      %393 = vmatprep.subr.bf16.mxu0 0
      %394 = vmatpush1.bf16.msra.mxu0 0
      %395 = vmatprep.subr.bf16.mxu0 0
      %396 = vmatpush1.bf16.msra.mxu0 0
      %397 = vmatprep.subr.bf16.mxu0 0
      %398 = vmatpush1.bf16.msra.mxu0 0
      %399 = vmatprep.subr.bf16.mxu0 0
      %400 = vmatpush1.bf16.msra.mxu0 0
      %401 = vmatprep.subr.bf16.mxu0 0
      %402 = vmatpush1.bf16.msra.mxu0 0
      %403 = vmatprep.subr.bf16.mxu0 0
      %404 = vmatpush1.bf16.msra.mxu0 0
      %405 = vmatprep.subr.bf16.mxu0 0
      %406 = vmatpush1.bf16.msra.mxu0 %v389
      %407 = vmatprep.subr.bf16.mxu0 0
      %408 = vmatpush2.bf16.msra.mxu0 0
      %409 = vmatprep.subr.bf16.mxu0 0
      %410 = vmatpush2.bf16.msra.mxu0 0
      %411 = vmatprep.subr.bf16.mxu0 0
      %412 = vmatpush2.bf16.msra.mxu0 0
      %413 = vmatprep.subr.bf16.mxu0 0
      %414 = vmatpush2.bf16.msra.mxu0 0
      %415 = vmatprep.subr.bf16.mxu0 0
      %416 = vmatpush2.bf16.msra.mxu0 0
      %417 = vmatprep.subr.bf16.mxu0 0
      %418 = vmatpush2.bf16.msra.mxu0 0
      %419 = vmatprep.subr.bf16.mxu0 0
      %420 = vmatpush2.bf16.msra.mxu0 0
      %421 = vmatprep.subr.bf16.mxu0 0
      %422 = vmatpush2.bf16.msra.mxu0 0
      %423 = vmatprep.mubr.bf16.mxu0 0
      %424 = vmatmul.mubr.bf16.gmra.mxu0 %v377
      %v425 = vpop.f32.mrf.mxu0
      %v426 = vadd.f32 0.0, %v425
      %v427 = vpop.f32.mrf.mxu0
      %v428 = vpop.f32.mrf.mxu0
      %v429 = vadd.f32 0.0, %v428
      %v430 = vpop.f32.mrf.mxu0
      %431 = vmatprep.mubr.bf16.mxu0 0
      %432 = vmatmul.mubr.bf16.gmra.mxu0 %v380
      %v433 = vpop.f32.mrf.mxu0
      %v434 = vadd.f32 0.0, %v433
      %v435 = vpop.f32.mrf.mxu0
      %v436 = vpop.f32.mrf.mxu0
      %v437 = vadd.f32 0.0, %v436
      %v438 = vpop.f32.mrf.mxu0
      %439 = vmatprep.mubr.bf16.mxu0 0
      %440 = vmatmul.mubr.bf16.gmra.mxu0 %v383
      %v441 = vpop.f32.mrf.mxu0
      %v442 = vadd.f32 0.0, %v441
      %v443 = vpop.f32.mrf.mxu0
      %v444 = vpop.f32.mrf.mxu0
      %v445 = vadd.f32 0.0, %v444
      %v446 = vpop.f32.mrf.mxu0
      %447 = vmatprep.mubr.bf16.mxu0 0
      %448 = vmatmul.mubr.bf16.gmra.mxu0 %v386
      %v449 = vpop.f32.mrf.mxu0
      %v450 = vadd.f32 0.0, %v449
      %v451 = vpop.f32.mrf.mxu0
      %v452 = vpop.f32.mrf.mxu0
      %v453 = vadd.f32 0.0, %v452
      %v454 = vpop.f32.mrf.mxu0
      %455 = vdwg.mxu0
      %v456 = vld [vmem:[#allocation2] sm:$0xff]
      %v457 = vld [vmem:[#allocation2 + $0x8] sm:$0xff]
      %v458 = vld [vmem:[#allocation2 + $0x10] sm:$0xff]
      %v459 = vld [vmem:[#allocation2 + $0x18] sm:$0xff]
      %v460 = vld [vmem:[#allocation2 + $0x20] sm:$0xff]
      %v461 = vld [vmem:[#allocation2 + $0x28] sm:$0xff]
      %v462 = vld [vmem:[#allocation2 + $0x30] sm:$0xff]
      %v463 = vld [vmem:[#allocation2 + $0x38] sm:$0xff]
      %v464 = vadd.f32 %v456, %v426
      %v465 = vadd.f32 %v457, %v429
      %v466 = vadd.f32 %v458, %v434
      %v467 = vadd.f32 %v459, %v437
      %v468 = vadd.f32 %v460, %v442
      %v469 = vadd.f32 %v461, %v445
      %v470 = vadd.f32 %v462, %v450
      %v471 = vadd.f32 %v463, %v453
      %472 = vst [vmem:[#allocation2] sm:$0xff] %v464
      %473 = vst [vmem:[#allocation2 + $0x8] sm:$0xff] %v465
      %474 = vst [vmem:[#allocation2 + $0x10] sm:$0xff] %v466
      %475 = vst [vmem:[#allocation2 + $0x18] sm:$0xff] %v467
      %476 = vst [vmem:[#allocation2 + $0x20] sm:$0xff] %v468
      %477 = vst [vmem:[#allocation2 + $0x28] sm:$0xff] %v469
      %478 = vst [vmem:[#allocation2 + $0x30] sm:$0xff] %v470
      %479 = vst [vmem:[#allocation2 + $0x38] sm:$0xff] %v471
      %v480 = vld [vmem:[%s206] sm:$0xf]
      %v481 = vld [vmem:[%s206 + $0x4] sm:$0x1]
      %v482 = vld [vmem:[%s206 + $0x8] sm:$0xf]
      %v483 = vld [vmem:[%s206 + $0xc] sm:$0x1]
      %v484 = vld [vmem:[%s206 + $0x10] sm:$0xf]
      %v485 = vld [vmem:[%s206 + $0x14] sm:$0x1]
      %v486 = vld [vmem:[%s206 + $0x18] sm:$0xf]
      %v487 = vld [vmem:[%s206 + $0x1c] sm:$0x1]
      %v488 = vld [vmem:[%s206 + $0x20] sm:$0xf]
      %v489 = vld [vmem:[%s206 + $0x24] sm:$0x1]
      %v490 = vld [vmem:[%s206 + $0x28] sm:$0xf]
      %v491 = vld [vmem:[%s206 + $0x2c] sm:$0x1]
      %v492 = vld [vmem:[%s206 + $0x30] sm:$0xf]
      %v493 = vld [vmem:[%s206 + $0x34] sm:$0x1]
      %v494 = vld [vmem:[%s206 + $0x38] sm:$0xf]
      %v495 = vld [vmem:[%s206 + $0x3c] sm:$0x1]
      %vm496 = vsmask.f32 3328
      %vm497 = vsmask.f32 7440
      %vm498 = vmor %vm496, %vm497
      %v500 = vshrl.u32 %v480, 16
      %v502 = vrot.slane %v500, 4
      %v503 = vshll.u32 %v480, 16
      %v505 = vrot.slane %v503, 5
      %v506 = vor.u32 %v502, %v505
      %v507 = vrot.slane %v506, 4
      %v509 = vshll.u32 %v481, 16
      %v511 = vrot.slane %v509, 5
      %v512 = vsel %vm498, %v507, %v511
      %v514 = vshrl.u32 %v482, 16
      %v516 = vrot.slane %v514, 4
      %v517 = vshll.u32 %v482, 16
      %v519 = vrot.slane %v517, 5
      %v520 = vor.u32 %v516, %v519
      %v521 = vrot.slane %v520, 4
      %v523 = vshll.u32 %v483, 16
      %v525 = vrot.slane %v523, 5
      %v526 = vsel %vm498, %v521, %v525
      %v528 = vshrl.u32 %v484, 16
      %v530 = vrot.slane %v528, 4
      %v531 = vshll.u32 %v484, 16
      %v533 = vrot.slane %v531, 5
      %v534 = vor.u32 %v530, %v533
      %v535 = vrot.slane %v534, 4
      %v537 = vshll.u32 %v485, 16
      %v539 = vrot.slane %v537, 5
      %v540 = vsel %vm498, %v535, %v539
      %v542 = vshrl.u32 %v486, 16
      %v544 = vrot.slane %v542, 4
      %v545 = vshll.u32 %v486, 16
      %v547 = vrot.slane %v545, 5
      %v548 = vor.u32 %v544, %v547
      %v549 = vrot.slane %v548, 4
      %v551 = vshll.u32 %v487, 16
      %v553 = vrot.slane %v551, 5
      %v554 = vsel %vm498, %v549, %v553
      %v556 = vshrl.u32 %v488, 16
      %v558 = vrot.slane %v556, 4
      %v559 = vshll.u32 %v488, 16
      %v561 = vrot.slane %v559, 5
      %v562 = vor.u32 %v558, %v561
      %v563 = vrot.slane %v562, 4
      %v565 = vshll.u32 %v489, 16
      %v567 = vrot.slane %v565, 5
      %v568 = vsel %vm498, %v563, %v567
      %v570 = vshrl.u32 %v490, 16
      %v572 = vrot.slane %v570, 4
      %v573 = vshll.u32 %v490, 16
      %v575 = vrot.slane %v573, 5
      %v576 = vor.u32 %v572, %v575
      %v577 = vrot.slane %v576, 4
      %v579 = vshll.u32 %v491, 16
      %v581 = vrot.slane %v579, 5
      %v582 = vsel %vm498, %v577, %v581
      %v584 = vshrl.u32 %v492, 16
      %v586 = vrot.slane %v584, 4
      %v587 = vshll.u32 %v492, 16
      %v589 = vrot.slane %v587, 5
      %v590 = vor.u32 %v586, %v589
      %v591 = vrot.slane %v590, 4
      %v593 = vshll.u32 %v493, 16
      %v595 = vrot.slane %v593, 5
      %v596 = vsel %vm498, %v591, %v595
      %v598 = vshrl.u32 %v494, 16
      %v600 = vrot.slane %v598, 4
      %v601 = vshll.u32 %v494, 16
      %v603 = vrot.slane %v601, 5
      %v604 = vor.u32 %v600, %v603
      %v605 = vrot.slane %v604, 4
      %v607 = vshll.u32 %v495, 16
      %v609 = vrot.slane %v607, 5
      %v610 = vsel %vm498, %v605, %v609
      %v611 = vunpack.c.l.b16 %v512
      %v612 = vunpack.c.l.b16 %v526
      %v613 = vunpack.c.l.b16 %v540
      %v614 = vunpack.c.l.b16 %v554
      %v615 = vunpack.c.l.b16 %v568
      %v616 = vunpack.c.l.b16 %v582
      %v617 = vunpack.c.l.b16 %v596
      %v618 = vunpack.c.l.b16 %v610
      %v619 = vpack.c.b16 %v612, %v611
      %v620 = vpack.c.b16 %v614, %v613
      %v621 = vpack.c.b16 %v616, %v615
      %v622 = vpack.c.b16 %v618, %v617
      %v624 = vsel %vm253, %v619, 0
      %v627 = vsel %vm253, %v620, 0
      %v630 = vsel %vm253, %v621, 0
      %v633 = vsel %vm253, %v622, 0
      %v636 = vsel %vm266, %v224, 0
      %638 = vmatprep.subr.bf16.mxu0 0
      %639 = vmatpush1.bf16.msra.mxu0 0
      %640 = vmatprep.subr.bf16.mxu0 0
      %641 = vmatpush1.bf16.msra.mxu0 0
      %642 = vmatprep.subr.bf16.mxu0 0
      %643 = vmatpush1.bf16.msra.mxu0 0
      %644 = vmatprep.subr.bf16.mxu0 0
      %645 = vmatpush1.bf16.msra.mxu0 0
      %646 = vmatprep.subr.bf16.mxu0 0
      %647 = vmatpush1.bf16.msra.mxu0 0
      %648 = vmatprep.subr.bf16.mxu0 0
      %649 = vmatpush1.bf16.msra.mxu0 0
      %650 = vmatprep.subr.bf16.mxu0 0
      %651 = vmatpush1.bf16.msra.mxu0 0
      %652 = vmatprep.subr.bf16.mxu0 0
      %653 = vmatpush1.bf16.msra.mxu0 %v636
      %654 = vmatprep.subr.bf16.mxu0 0
      %655 = vmatpush2.bf16.msra.mxu0 0
      %656 = vmatprep.subr.bf16.mxu0 0
      %657 = vmatpush2.bf16.msra.mxu0 0
      %658 = vmatprep.subr.bf16.mxu0 0
      %659 = vmatpush2.bf16.msra.mxu0 0
      %660 = vmatprep.subr.bf16.mxu0 0
      %661 = vmatpush2.bf16.msra.mxu0 0
      %662 = vmatprep.subr.bf16.mxu0 0
      %663 = vmatpush2.bf16.msra.mxu0 0
      %664 = vmatprep.subr.bf16.mxu0 0
      %665 = vmatpush2.bf16.msra.mxu0 0
      %666 = vmatprep.subr.bf16.mxu0 0
      %667 = vmatpush2.bf16.msra.mxu0 0
      %668 = vmatprep.subr.bf16.mxu0 0
      %669 = vmatpush2.bf16.msra.mxu0 0
      %670 = vmatprep.mubr.bf16.mxu0 0
      %671 = vmatmul.mubr.bf16.gmra.mxu0 %v624
      %v672 = vpop.f32.mrf.mxu0
      %v673 = vadd.f32 0.0, %v672
      %v674 = vpop.f32.mrf.mxu0
      %v675 = vpop.f32.mrf.mxu0
      %v676 = vadd.f32 0.0, %v675
      %v677 = vpop.f32.mrf.mxu0
      %678 = vmatprep.mubr.bf16.mxu0 0
      %679 = vmatmul.mubr.bf16.gmra.mxu0 %v627
      %v680 = vpop.f32.mrf.mxu0
      %v681 = vadd.f32 0.0, %v680
      %v682 = vpop.f32.mrf.mxu0
      %v683 = vpop.f32.mrf.mxu0
      %v684 = vadd.f32 0.0, %v683
      %v685 = vpop.f32.mrf.mxu0
      %686 = vmatprep.mubr.bf16.mxu0 0
      %687 = vmatmul.mubr.bf16.gmra.mxu0 %v630
      %v688 = vpop.f32.mrf.mxu0
      %v689 = vadd.f32 0.0, %v688
      %v690 = vpop.f32.mrf.mxu0
      %v691 = vpop.f32.mrf.mxu0
      %v692 = vadd.f32 0.0, %v691
      %v693 = vpop.f32.mrf.mxu0
      %694 = vmatprep.mubr.bf16.mxu0 0
      %695 = vmatmul.mubr.bf16.gmra.mxu0 %v633
      %v696 = vpop.f32.mrf.mxu0
      %v697 = vadd.f32 0.0, %v696
      %v698 = vpop.f32.mrf.mxu0
      %v699 = vpop.f32.mrf.mxu0
      %v700 = vadd.f32 0.0, %v699
      %v701 = vpop.f32.mrf.mxu0
      %702 = vdwg.mxu0
      %v703 = vld [vmem:[#allocation2] sm:$0xff]
      %v704 = vld [vmem:[#allocation2 + $0x8] sm:$0xff]
      %v705 = vld [vmem:[#allocation2 + $0x10] sm:$0xff]
      %v706 = vld [vmem:[#allocation2 + $0x18] sm:$0xff]
      %v707 = vld [vmem:[#allocation2 + $0x20] sm:$0xff]
      %v708 = vld [vmem:[#allocation2 + $0x28] sm:$0xff]
      %v709 = vld [vmem:[#allocation2 + $0x30] sm:$0xff]
      %v710 = vld [vmem:[#allocation2 + $0x38] sm:$0xff]
      %v711 = vadd.f32 %v703, %v673
      %v712 = vadd.f32 %v704, %v676
      %v713 = vadd.f32 %v705, %v681
      %v714 = vadd.f32 %v706, %v684
      %v715 = vadd.f32 %v707, %v689
      %v716 = vadd.f32 %v708, %v692
      %v717 = vadd.f32 %v709, %v697
      %v718 = vadd.f32 %v710, %v700
      %719 = vst [vmem:[#allocation2] sm:$0xff] %v711
      %720 = vst [vmem:[#allocation2 + $0x8] sm:$0xff] %v712
      %721 = vst [vmem:[#allocation2 + $0x10] sm:$0xff] %v713
      %722 = vst [vmem:[#allocation2 + $0x18] sm:$0xff] %v714
      %723 = vst [vmem:[#allocation2 + $0x20] sm:$0xff] %v715
      %724 = vst [vmem:[#allocation2 + $0x28] sm:$0xff] %v716
      %725 = vst [vmem:[#allocation2 + $0x30] sm:$0xff] %v717
      %726 = vst [vmem:[#allocation2 + $0x38] sm:$0xff] %v718
      %s727 = scalar_lea.vmem %s210, 8
      %v728 = vld [vmem:[%s727] sm:$0xf]
      %v729 = vld [vmem:[%s727 + $0x4] sm:$0x3]
      %s730 = scalar_lea.vmem %s206, 144
      %v731 = vld [vmem:[%s730] sm:$0xf]
      %v732 = vld [vmem:[%s730 + $0x8] sm:$0xf]
      %v733 = vld [vmem:[%s730 + $0x10] sm:$0xf]
      %v734 = vld [vmem:[%s730 + $0x18] sm:$0xf]
      %v735 = vld [vmem:[%s730 + $0x20] sm:$0xf]
      %v736 = vld [vmem:[%s730 + $0x28] sm:$0xf]
      %v737 = vld [vmem:[%s730 + $0x30] sm:$0xf]
      %v738 = vld [vmem:[%s730 + $0x38] sm:$0xf]
      %v747 = vunpack.c.l.b16 %v731
      %v748 = vunpack.c.l.b16 %v732
      %v749 = vunpack.c.l.b16 %v733
      %v750 = vunpack.c.l.b16 %v734
      %v751 = vunpack.c.l.b16 %v735
      %v752 = vunpack.c.l.b16 %v736
      %v753 = vunpack.c.l.b16 %v737
      %v754 = vunpack.c.l.b16 %v738
      %v755 = vpack.c.b16 %v748, %v747
      %v756 = vpack.c.b16 %v750, %v749
      %v757 = vpack.c.b16 %v752, %v751
      %v758 = vpack.c.b16 %v754, %v753
      %v760 = vsel %vm253, %v755, 0
      %v763 = vsel %vm253, %v756, 0
      %v766 = vsel %vm253, %v757, 0
      %v769 = vsel %vm253, %v758, 0
      %v772 = vsel %vm266, %v728, 0
      %774 = vmatprep.subr.bf16.mxu0 0
      %775 = vmatpush1.bf16.msra.mxu0 0
      %776 = vmatprep.subr.bf16.mxu0 0
      %777 = vmatpush1.bf16.msra.mxu0 0
      %778 = vmatprep.subr.bf16.mxu0 0
      %779 = vmatpush1.bf16.msra.mxu0 0
      %780 = vmatprep.subr.bf16.mxu0 0
      %781 = vmatpush1.bf16.msra.mxu0 0
      %782 = vmatprep.subr.bf16.mxu0 0
      %783 = vmatpush1.bf16.msra.mxu0 0
      %784 = vmatprep.subr.bf16.mxu0 0
      %785 = vmatpush1.bf16.msra.mxu0 0
      %786 = vmatprep.subr.bf16.mxu0 0
      %787 = vmatpush1.bf16.msra.mxu0 0
      %788 = vmatprep.subr.bf16.mxu0 0
      %789 = vmatpush1.bf16.msra.mxu0 %v772
      %790 = vmatprep.subr.bf16.mxu0 0
      %791 = vmatpush2.bf16.msra.mxu0 0
      %792 = vmatprep.subr.bf16.mxu0 0
      %793 = vmatpush2.bf16.msra.mxu0 0
      %794 = vmatprep.subr.bf16.mxu0 0
      %795 = vmatpush2.bf16.msra.mxu0 0
      %796 = vmatprep.subr.bf16.mxu0 0
      %797 = vmatpush2.bf16.msra.mxu0 0
      %798 = vmatprep.subr.bf16.mxu0 0
      %799 = vmatpush2.bf16.msra.mxu0 0
      %800 = vmatprep.subr.bf16.mxu0 0
      %801 = vmatpush2.bf16.msra.mxu0 0
      %802 = vmatprep.subr.bf16.mxu0 0
      %803 = vmatpush2.bf16.msra.mxu0 0
      %804 = vmatprep.subr.bf16.mxu0 0
      %805 = vmatpush2.bf16.msra.mxu0 0
      %806 = vmatprep.mubr.bf16.mxu0 0
      %807 = vmatmul.mubr.bf16.gmra.mxu0 %v760
      %v808 = vpop.f32.mrf.mxu0
      %v809 = vadd.f32 0.0, %v808
      %v810 = vpop.f32.mrf.mxu0
      %v811 = vpop.f32.mrf.mxu0
      %v812 = vadd.f32 0.0, %v811
      %v813 = vpop.f32.mrf.mxu0
      %814 = vmatprep.mubr.bf16.mxu0 0
      %815 = vmatmul.mubr.bf16.gmra.mxu0 %v763
      %v816 = vpop.f32.mrf.mxu0
      %v817 = vadd.f32 0.0, %v816
      %v818 = vpop.f32.mrf.mxu0
      %v819 = vpop.f32.mrf.mxu0
      %v820 = vadd.f32 0.0, %v819
      %v821 = vpop.f32.mrf.mxu0
      %822 = vmatprep.mubr.bf16.mxu0 0
      %823 = vmatmul.mubr.bf16.gmra.mxu0 %v766
      %v824 = vpop.f32.mrf.mxu0
      %v825 = vadd.f32 0.0, %v824
      %v826 = vpop.f32.mrf.mxu0
      %v827 = vpop.f32.mrf.mxu0
      %v828 = vadd.f32 0.0, %v827
      %v829 = vpop.f32.mrf.mxu0
      %830 = vmatprep.mubr.bf16.mxu0 0
      %831 = vmatmul.mubr.bf16.gmra.mxu0 %v769
      %v832 = vpop.f32.mrf.mxu0
      %v833 = vadd.f32 0.0, %v832
      %v834 = vpop.f32.mrf.mxu0
      %v835 = vpop.f32.mrf.mxu0
      %v836 = vadd.f32 0.0, %v835
      %v837 = vpop.f32.mrf.mxu0
      %838 = vdwg.mxu0
      %v839 = vld [vmem:[#allocation2] sm:$0xff]
      %v840 = vld [vmem:[#allocation2 + $0x8] sm:$0xff]
      %v841 = vld [vmem:[#allocation2 + $0x10] sm:$0xff]
      %v842 = vld [vmem:[#allocation2 + $0x18] sm:$0xff]
      %v843 = vld [vmem:[#allocation2 + $0x20] sm:$0xff]
      %v844 = vld [vmem:[#allocation2 + $0x28] sm:$0xff]
      %v845 = vld [vmem:[#allocation2 + $0x30] sm:$0xff]
      %v846 = vld [vmem:[#allocation2 + $0x38] sm:$0xff]
      %v847 = vadd.f32 %v839, %v809
      %v848 = vadd.f32 %v840, %v812
      %v849 = vadd.f32 %v841, %v817
      %v850 = vadd.f32 %v842, %v820
      %v851 = vadd.f32 %v843, %v825
      %v852 = vadd.f32 %v844, %v828
      %v853 = vadd.f32 %v845, %v833
      %v854 = vadd.f32 %v846, %v836
      %855 = vst [vmem:[#allocation2] sm:$0xff] %v847
      %856 = vst [vmem:[#allocation2 + $0x8] sm:$0xff] %v848
      %857 = vst [vmem:[#allocation2 + $0x10] sm:$0xff] %v849
      %858 = vst [vmem:[#allocation2 + $0x18] sm:$0xff] %v850
      %859 = vst [vmem:[#allocation2 + $0x20] sm:$0xff] %v851
      %860 = vst [vmem:[#allocation2 + $0x28] sm:$0xff] %v852
      %861 = vst [vmem:[#allocation2 + $0x30] sm:$0xff] %v853
      %862 = vst [vmem:[#allocation2 + $0x38] sm:$0xff] %v854
      %s863 = scalar_lea.vmem %s206, 216
      %v864 = vld [vmem:[%s863] sm:$0xf]
      %v865 = vld [vmem:[%s863 + $0x8] sm:$0xf]
      %v866 = vld [vmem:[%s863 + $0x10] sm:$0xf]
      %v867 = vld [vmem:[%s863 + $0x18] sm:$0xf]
      %v868 = vld [vmem:[%s863 + $0x20] sm:$0xf]
      %v869 = vld [vmem:[%s863 + $0x28] sm:$0xf]
      %v870 = vld [vmem:[%s863 + $0x30] sm:$0xf]
      %v871 = vld [vmem:[%s863 + $0x38] sm:$0xf]
      %v880 = vunpack.c.l.b16 %v864
      %v881 = vunpack.c.l.b16 %v865
      %v882 = vunpack.c.l.b16 %v866
      %v883 = vunpack.c.l.b16 %v867
      %v884 = vunpack.c.l.b16 %v868
      %v885 = vunpack.c.l.b16 %v869
      %v886 = vunpack.c.l.b16 %v870
      %v887 = vunpack.c.l.b16 %v871
      %v888 = vpack.c.b16 %v881, %v880
      %v889 = vpack.c.b16 %v883, %v882
      %v890 = vpack.c.b16 %v885, %v884
      %v891 = vpack.c.b16 %v887, %v886
      %v893 = vunpack.c.l.b16 %v728
      %v894 = vpack.c.b16 %v893, %v893
      %v895 = vrot.slane %v894, 2
      %v897 = vsel %vm253, %v888, 0
      %v900 = vsel %vm253, %v889, 0
      %v903 = vsel %vm253, %v890, 0
      %v906 = vsel %vm253, %v891, 0
      %v909 = vsel %vm266, %v895, 0
      %911 = vmatprep.subr.bf16.mxu0 0
      %912 = vmatpush1.bf16.msra.mxu0 0
      %913 = vmatprep.subr.bf16.mxu0 0
      %914 = vmatpush1.bf16.msra.mxu0 0
      %915 = vmatprep.subr.bf16.mxu0 0
      %916 = vmatpush1.bf16.msra.mxu0 0
      %917 = vmatprep.subr.bf16.mxu0 0
      %918 = vmatpush1.bf16.msra.mxu0 0
      %919 = vmatprep.subr.bf16.mxu0 0
      %920 = vmatpush1.bf16.msra.mxu0 0
      %921 = vmatprep.subr.bf16.mxu0 0
      %922 = vmatpush1.bf16.msra.mxu0 0
      %923 = vmatprep.subr.bf16.mxu0 0
      %924 = vmatpush1.bf16.msra.mxu0 0
      %925 = vmatprep.subr.bf16.mxu0 0
      %926 = vmatpush1.bf16.msra.mxu0 %v909
      %927 = vmatprep.subr.bf16.mxu0 0
      %928 = vmatpush2.bf16.msra.mxu0 0
      %929 = vmatprep.subr.bf16.mxu0 0
      %930 = vmatpush2.bf16.msra.mxu0 0
      %931 = vmatprep.subr.bf16.mxu0 0
      %932 = vmatpush2.bf16.msra.mxu0 0
      %933 = vmatprep.subr.bf16.mxu0 0
      %934 = vmatpush2.bf16.msra.mxu0 0
      %935 = vmatprep.subr.bf16.mxu0 0
      %936 = vmatpush2.bf16.msra.mxu0 0
      %937 = vmatprep.subr.bf16.mxu0 0
      %938 = vmatpush2.bf16.msra.mxu0 0
      %939 = vmatprep.subr.bf16.mxu0 0
      %940 = vmatpush2.bf16.msra.mxu0 0
      %941 = vmatprep.subr.bf16.mxu0 0
      %942 = vmatpush2.bf16.msra.mxu0 0
      %943 = vmatprep.mubr.bf16.mxu0 0
      %944 = vmatmul.mubr.bf16.gmra.mxu0 %v897
      %v945 = vpop.f32.mrf.mxu0
      %v946 = vadd.f32 0.0, %v945
      %v947 = vpop.f32.mrf.mxu0
      %v948 = vpop.f32.mrf.mxu0
      %v949 = vadd.f32 0.0, %v948
      %v950 = vpop.f32.mrf.mxu0
      %951 = vmatprep.mubr.bf16.mxu0 0
      %952 = vmatmul.mubr.bf16.gmra.mxu0 %v900
      %v953 = vpop.f32.mrf.mxu0
      %v954 = vadd.f32 0.0, %v953
      %v955 = vpop.f32.mrf.mxu0
      %v956 = vpop.f32.mrf.mxu0
      %v957 = vadd.f32 0.0, %v956
      %v958 = vpop.f32.mrf.mxu0
      %959 = vmatprep.mubr.bf16.mxu0 0
      %960 = vmatmul.mubr.bf16.gmra.mxu0 %v903
      %v961 = vpop.f32.mrf.mxu0
      %v962 = vadd.f32 0.0, %v961
      %v963 = vpop.f32.mrf.mxu0
      %v964 = vpop.f32.mrf.mxu0
      %v965 = vadd.f32 0.0, %v964
      %v966 = vpop.f32.mrf.mxu0
      %967 = vmatprep.mubr.bf16.mxu0 0
      %968 = vmatmul.mubr.bf16.gmra.mxu0 %v906
      %v969 = vpop.f32.mrf.mxu0
      %v970 = vadd.f32 0.0, %v969
      %v971 = vpop.f32.mrf.mxu0
      %v972 = vpop.f32.mrf.mxu0
      %v973 = vadd.f32 0.0, %v972
      %v974 = vpop.f32.mrf.mxu0
      %975 = vdwg.mxu0
      %v976 = vld [vmem:[#allocation2] sm:$0xff]
      %v977 = vld [vmem:[#allocation2 + $0x8] sm:$0xff]
      %v978 = vld [vmem:[#allocation2 + $0x10] sm:$0xff]
      %v979 = vld [vmem:[#allocation2 + $0x18] sm:$0xff]
      %v980 = vld [vmem:[#allocation2 + $0x20] sm:$0xff]
      %v981 = vld [vmem:[#allocation2 + $0x28] sm:$0xff]
      %v982 = vld [vmem:[#allocation2 + $0x30] sm:$0xff]
      %v983 = vld [vmem:[#allocation2 + $0x38] sm:$0xff]
      %v984 = vadd.f32 %v976, %v946
      %v985 = vadd.f32 %v977, %v949
      %v986 = vadd.f32 %v978, %v954
      %v987 = vadd.f32 %v979, %v957
      %v988 = vadd.f32 %v980, %v962
      %v989 = vadd.f32 %v981, %v965
      %v990 = vadd.f32 %v982, %v970
      %v991 = vadd.f32 %v983, %v973
      %992 = vst [vmem:[#allocation2] sm:$0xff] %v984
      %993 = vst [vmem:[#allocation2 + $0x8] sm:$0xff] %v985
      %994 = vst [vmem:[#allocation2 + $0x10] sm:$0xff] %v986
      %995 = vst [vmem:[#allocation2 + $0x18] sm:$0xff] %v987
      %996 = vst [vmem:[#allocation2 + $0x20] sm:$0xff] %v988
      %997 = vst [vmem:[#allocation2 + $0x28] sm:$0xff] %v989
      %998 = vst [vmem:[#allocation2 + $0x30] sm:$0xff] %v990
      %999 = vst [vmem:[#allocation2 + $0x38] sm:$0xff] %v991
      %v1000 = vld [vmem:[%s730] sm:$0xf]
      %v1001 = vld [vmem:[%s730 + $0x4] sm:$0x1]
      %v1002 = vld [vmem:[%s730 + $0x8] sm:$0xf]
      %v1003 = vld [vmem:[%s730 + $0xc] sm:$0x1]
      %v1004 = vld [vmem:[%s730 + $0x10] sm:$0xf]
      %v1005 = vld [vmem:[%s730 + $0x14] sm:$0x1]
      %v1006 = vld [vmem:[%s730 + $0x18] sm:$0xf]
      %v1007 = vld [vmem:[%s730 + $0x1c] sm:$0x1]
      %v1008 = vld [vmem:[%s730 + $0x20] sm:$0xf]
      %v1009 = vld [vmem:[%s730 + $0x24] sm:$0x1]
      %v1010 = vld [vmem:[%s730 + $0x28] sm:$0xf]
      %v1011 = vld [vmem:[%s730 + $0x2c] sm:$0x1]
      %v1012 = vld [vmem:[%s730 + $0x30] sm:$0xf]
      %v1013 = vld [vmem:[%s730 + $0x34] sm:$0x1]
      %v1014 = vld [vmem:[%s730 + $0x38] sm:$0xf]
      %v1015 = vld [vmem:[%s730 + $0x3c] sm:$0x1]
      %v1017 = vshrl.u32 %v1000, 16
      %v1019 = vrot.slane %v1017, 4
      %v1020 = vshll.u32 %v1000, 16
      %v1022 = vrot.slane %v1020, 5
      %v1023 = vor.u32 %v1019, %v1022
      %v1024 = vrot.slane %v1023, 4
      %v1026 = vshll.u32 %v1001, 16
      %v1028 = vrot.slane %v1026, 5
      %v1029 = vsel %vm498, %v1024, %v1028
      %v1031 = vshrl.u32 %v1002, 16
      %v1033 = vrot.slane %v1031, 4
      %v1034 = vshll.u32 %v1002, 16
      %v1036 = vrot.slane %v1034, 5
      %v1037 = vor.u32 %v1033, %v1036
      %v1038 = vrot.slane %v1037, 4
      %v1040 = vshll.u32 %v1003, 16
      %v1042 = vrot.slane %v1040, 5
      %v1043 = vsel %vm498, %v1038, %v1042
      %v1045 = vshrl.u32 %v1004, 16
      %v1047 = vrot.slane %v1045, 4
      %v1048 = vshll.u32 %v1004, 16
      %v1050 = vrot.slane %v1048, 5
      %v1051 = vor.u32 %v1047, %v1050
      %v1052 = vrot.slane %v1051, 4
      %v1054 = vshll.u32 %v1005, 16
      %v1056 = vrot.slane %v1054, 5
      %v1057 = vsel %vm498, %v1052, %v1056
      %v1059 = vshrl.u32 %v1006, 16
      %v1061 = vrot.slane %v1059, 4
      %v1062 = vshll.u32 %v1006, 16
      %v1064 = vrot.slane %v1062, 5
      %v1065 = vor.u32 %v1061, %v1064
      %v1066 = vrot.slane %v1065, 4
      %v1068 = vshll.u32 %v1007, 16
      %v1070 = vrot.slane %v1068, 5
      %v1071 = vsel %vm498, %v1066, %v1070
      %v1073 = vshrl.u32 %v1008, 16
      %v1075 = vrot.slane %v1073, 4
      %v1076 = vshll.u32 %v1008, 16
      %v1078 = vrot.slane %v1076, 5
      %v1079 = vor.u32 %v1075, %v1078
      %v1080 = vrot.slane %v1079, 4
      %v1082 = vshll.u32 %v1009, 16
      %v1084 = vrot.slane %v1082, 5
      %v1085 = vsel %vm498, %v1080, %v1084
      %v1087 = vshrl.u32 %v1010, 16
      %v1089 = vrot.slane %v1087, 4
      %v1090 = vshll.u32 %v1010, 16
      %v1092 = vrot.slane %v1090, 5
      %v1093 = vor.u32 %v1089, %v1092
      %v1094 = vrot.slane %v1093, 4
      %v1096 = vshll.u32 %v1011, 16
      %v1098 = vrot.slane %v1096, 5
      %v1099 = vsel %vm498, %v1094, %v1098
      %v1101 = vshrl.u32 %v1012, 16
      %v1103 = vrot.slane %v1101, 4
      %v1104 = vshll.u32 %v1012, 16
      %v1106 = vrot.slane %v1104, 5
      %v1107 = vor.u32 %v1103, %v1106
      %v1108 = vrot.slane %v1107, 4
      %v1110 = vshll.u32 %v1013, 16
      %v1112 = vrot.slane %v1110, 5
      %v1113 = vsel %vm498, %v1108, %v1112
      %v1115 = vshrl.u32 %v1014, 16
      %v1117 = vrot.slane %v1115, 4
      %v1118 = vshll.u32 %v1014, 16
      %v1120 = vrot.slane %v1118, 5
      %v1121 = vor.u32 %v1117, %v1120
      %v1122 = vrot.slane %v1121, 4
      %v1124 = vshll.u32 %v1015, 16
      %v1126 = vrot.slane %v1124, 5
      %v1127 = vsel %vm498, %v1122, %v1126
      %v1128 = vunpack.c.l.b16 %v1029
      %v1129 = vunpack.c.l.b16 %v1043
      %v1130 = vunpack.c.l.b16 %v1057
      %v1131 = vunpack.c.l.b16 %v1071
      %v1132 = vunpack.c.l.b16 %v1085
      %v1133 = vunpack.c.l.b16 %v1099
      %v1134 = vunpack.c.l.b16 %v1113
      %v1135 = vunpack.c.l.b16 %v1127
      %v1136 = vpack.c.b16 %v1129, %v1128
      %v1137 = vpack.c.b16 %v1131, %v1130
      %v1138 = vpack.c.b16 %v1133, %v1132
      %v1139 = vpack.c.b16 %v1135, %v1134
      %v1141 = vsel %vm253, %v1136, 0
      %v1144 = vsel %vm253, %v1137, 0
      %v1147 = vsel %vm253, %v1138, 0
      %v1150 = vsel %vm253, %v1139, 0
      %v1153 = vsel %vm266, %v729, 0
      %1155 = vmatprep.subr.bf16.mxu0 0
      %1156 = vmatpush1.bf16.msra.mxu0 0
      %1157 = vmatprep.subr.bf16.mxu0 0
      %1158 = vmatpush1.bf16.msra.mxu0 0
      %1159 = vmatprep.subr.bf16.mxu0 0
      %1160 = vmatpush1.bf16.msra.mxu0 0
      %1161 = vmatprep.subr.bf16.mxu0 0
      %1162 = vmatpush1.bf16.msra.mxu0 0
      %1163 = vmatprep.subr.bf16.mxu0 0
      %1164 = vmatpush1.bf16.msra.mxu0 0
      %1165 = vmatprep.subr.bf16.mxu0 0
      %1166 = vmatpush1.bf16.msra.mxu0 0
      %1167 = vmatprep.subr.bf16.mxu0 0
      %1168 = vmatpush1.bf16.msra.mxu0 0
      %1169 = vmatprep.subr.bf16.mxu0 0
      %1170 = vmatpush1.bf16.msra.mxu0 %v1153
      %1171 = vmatprep.subr.bf16.mxu0 0
      %1172 = vmatpush2.bf16.msra.mxu0 0
      %1173 = vmatprep.subr.bf16.mxu0 0
      %1174 = vmatpush2.bf16.msra.mxu0 0
      %1175 = vmatprep.subr.bf16.mxu0 0
      %1176 = vmatpush2.bf16.msra.mxu0 0
      %1177 = vmatprep.subr.bf16.mxu0 0
      %1178 = vmatpush2.bf16.msra.mxu0 0
      %1179 = vmatprep.subr.bf16.mxu0 0
      %1180 = vmatpush2.bf16.msra.mxu0 0
      %1181 = vmatprep.subr.bf16.mxu0 0
      %1182 = vmatpush2.bf16.msra.mxu0 0
      %1183 = vmatprep.subr.bf16.mxu0 0
      %1184 = vmatpush2.bf16.msra.mxu0 0
      %1185 = vmatprep.subr.bf16.mxu0 0
      %1186 = vmatpush2.bf16.msra.mxu0 0
      %1187 = vmatprep.mubr.bf16.mxu0 0
      %1188 = vmatmul.mubr.bf16.gmra.mxu0 %v1141
      %v1189 = vpop.f32.mrf.mxu0
      %v1190 = vadd.f32 0.0, %v1189
      %v1191 = vpop.f32.mrf.mxu0
      %v1192 = vpop.f32.mrf.mxu0
      %v1193 = vadd.f32 0.0, %v1192
      %v1194 = vpop.f32.mrf.mxu0
      %1195 = vmatprep.mubr.bf16.mxu0 0
      %1196 = vmatmul.mubr.bf16.gmra.mxu0 %v1144
      %v1197 = vpop.f32.mrf.mxu0
      %v1198 = vadd.f32 0.0, %v1197
      %v1199 = vpop.f32.mrf.mxu0
      %v1200 = vpop.f32.mrf.mxu0
      %v1201 = vadd.f32 0.0, %v1200
      %v1202 = vpop.f32.mrf.mxu0
      %1203 = vmatprep.mubr.bf16.mxu0 0
      %1204 = vmatmul.mubr.bf16.gmra.mxu0 %v1147
      %v1205 = vpop.f32.mrf.mxu0
      %v1206 = vadd.f32 0.0, %v1205
      %v1207 = vpop.f32.mrf.mxu0
      %v1208 = vpop.f32.mrf.mxu0
      %v1209 = vadd.f32 0.0, %v1208
      %v1210 = vpop.f32.mrf.mxu0
      %1211 = vmatprep.mubr.bf16.mxu0 0
      %1212 = vmatmul.mubr.bf16.gmra.mxu0 %v1150
      %v1213 = vpop.f32.mrf.mxu0
      %v1214 = vadd.f32 0.0, %v1213
      %v1215 = vpop.f32.mrf.mxu0
      %v1216 = vpop.f32.mrf.mxu0
      %v1217 = vadd.f32 0.0, %v1216
      %v1218 = vpop.f32.mrf.mxu0
      %1219 = vdwg.mxu0
      %v1220 = vld [vmem:[#allocation2] sm:$0xff]
      %v1221 = vld [vmem:[#allocation2 + $0x8] sm:$0xff]
      %v1222 = vld [vmem:[#allocation2 + $0x10] sm:$0xff]
      %v1223 = vld [vmem:[#allocation2 + $0x18] sm:$0xff]
      %v1224 = vld [vmem:[#allocation2 + $0x20] sm:$0xff]
      %v1225 = vld [vmem:[#allocation2 + $0x28] sm:$0xff]
      %v1226 = vld [vmem:[#allocation2 + $0x30] sm:$0xff]
      %v1227 = vld [vmem:[#allocation2 + $0x38] sm:$0xff]
      %v1228 = vadd.f32 %v1220, %v1190
      %v1229 = vadd.f32 %v1221, %v1193
      %v1230 = vadd.f32 %v1222, %v1198
      %v1231 = vadd.f32 %v1223, %v1201
      %v1232 = vadd.f32 %v1224, %v1206
      %v1233 = vadd.f32 %v1225, %v1209
      %v1234 = vadd.f32 %v1226, %v1214
      %v1235 = vadd.f32 %v1227, %v1217
      %1236 = vst [vmem:[#allocation2] sm:$0xff] %v1228
      %1237 = vst [vmem:[#allocation2 + $0x8] sm:$0xff] %v1229
      %1238 = vst [vmem:[#allocation2 + $0x10] sm:$0xff] %v1230
      %1239 = vst [vmem:[#allocation2 + $0x18] sm:$0xff] %v1231
      %1240 = vst [vmem:[#allocation2 + $0x20] sm:$0xff] %v1232
      %1241 = vst [vmem:[#allocation2 + $0x28] sm:$0xff] %v1233
      %1242 = vst [vmem:[#allocation2 + $0x30] sm:$0xff] %v1234
      %1243 = vst [vmem:[#allocation2 + $0x38] sm:$0xff] %v1235
      %s1244 = scalar_lea.vmem %s210, 16
      %v1245 = vld [vmem:[%s1244] sm:$0xf]
      %v1246 = vld [vmem:[%s1244 + $0x4] sm:$0x3]
      %s1247 = scalar_lea.vmem %s206, 8
      %v1248 = vld [vmem:[%s1247] sm:$0xf]
      %v1249 = vld [vmem:[%s1247 + $0x8] sm:$0xf]
      %v1250 = vld [vmem:[%s1247 + $0x10] sm:$0xf]
      %v1251 = vld [vmem:[%s1247 + $0x18] sm:$0xf]
      %v1252 = vld [vmem:[%s1247 + $0x20] sm:$0xf]
      %v1253 = vld [vmem:[%s1247 + $0x28] sm:$0xf]
      %v1254 = vld [vmem:[%s1247 + $0x30] sm:$0xf]
      %v1255 = vld [vmem:[%s1247 + $0x38] sm:$0xf]
      %v1264 = vunpack.c.l.b16 %v1248
      %v1265 = vunpack.c.l.b16 %v1249
      %v1266 = vunpack.c.l.b16 %v1250
      %v1267 = vunpack.c.l.b16 %v1251
      %v1268 = vunpack.c.l.b16 %v1252
      %v1269 = vunpack.c.l.b16 %v1253
      %v1270 = vunpack.c.l.b16 %v1254
      %v1271 = vunpack.c.l.b16 %v1255
      %v1272 = vpack.c.b16 %v1265, %v1264
      %v1273 = vpack.c.b16 %v1267, %v1266
      %v1274 = vpack.c.b16 %v1269, %v1268
      %v1275 = vpack.c.b16 %v1271, %v1270
      %v1277 = vsel %vm253, %v1272, 0
      %v1280 = vsel %vm253, %v1273, 0
      %v1283 = vsel %vm253, %v1274, 0
      %v1286 = vsel %vm253, %v1275, 0
      %v1289 = vsel %vm266, %v1245, 0
      %1291 = vmatprep.subr.bf16.mxu0 0
      %1292 = vmatpush1.bf16.msra.mxu0 0
      %1293 = vmatprep.subr.bf16.mxu0 0
      %1294 = vmatpush1.bf16.msra.mxu0 0
      %1295 = vmatprep.subr.bf16.mxu0 0
      %1296 = vmatpush1.bf16.msra.mxu0 0
      %1297 = vmatprep.subr.bf16.mxu0 0
      %1298 = vmatpush1.bf16.msra.mxu0 0
      %1299 = vmatprep.subr.bf16.mxu0 0
      %1300 = vmatpush1.bf16.msra.mxu0 0
      %1301 = vmatprep.subr.bf16.mxu0 0
      %1302 = vmatpush1.bf16.msra.mxu0 0
      %1303 = vmatprep.subr.bf16.mxu0 0
      %1304 = vmatpush1.bf16.msra.mxu0 0
      %1305 = vmatprep.subr.bf16.mxu0 0
      %1306 = vmatpush1.bf16.msra.mxu0 %v1289
      %1307 = vmatprep.subr.bf16.mxu0 0
      %1308 = vmatpush2.bf16.msra.mxu0 0
      %1309 = vmatprep.subr.bf16.mxu0 0
      %1310 = vmatpush2.bf16.msra.mxu0 0
      %1311 = vmatprep.subr.bf16.mxu0 0
      %1312 = vmatpush2.bf16.msra.mxu0 0
      %1313 = vmatprep.subr.bf16.mxu0 0
      %1314 = vmatpush2.bf16.msra.mxu0 0
      %1315 = vmatprep.subr.bf16.mxu0 0
      %1316 = vmatpush2.bf16.msra.mxu0 0
      %1317 = vmatprep.subr.bf16.mxu0 0
      %1318 = vmatpush2.bf16.msra.mxu0 0
      %1319 = vmatprep.subr.bf16.mxu0 0
      %1320 = vmatpush2.bf16.msra.mxu0 0
      %1321 = vmatprep.subr.bf16.mxu0 0
      %1322 = vmatpush2.bf16.msra.mxu0 0
      %1323 = vmatprep.mubr.bf16.mxu0 0
      %1324 = vmatmul.mubr.bf16.gmra.mxu0 %v1277
      %v1325 = vpop.f32.mrf.mxu0
      %v1326 = vadd.f32 0.0, %v1325
      %v1327 = vpop.f32.mrf.mxu0
      %v1328 = vpop.f32.mrf.mxu0
      %v1329 = vadd.f32 0.0, %v1328
      %v1330 = vpop.f32.mrf.mxu0
      %1331 = vmatprep.mubr.bf16.mxu0 0
      %1332 = vmatmul.mubr.bf16.gmra.mxu0 %v1280
      %v1333 = vpop.f32.mrf.mxu0
      %v1334 = vadd.f32 0.0, %v1333
      %v1335 = vpop.f32.mrf.mxu0
      %v1336 = vpop.f32.mrf.mxu0
      %v1337 = vadd.f32 0.0, %v1336
      %v1338 = vpop.f32.mrf.mxu0
      %1339 = vmatprep.mubr.bf16.mxu0 0
      %1340 = vmatmul.mubr.bf16.gmra.mxu0 %v1283
      %v1341 = vpop.f32.mrf.mxu0
      %v1342 = vadd.f32 0.0, %v1341
      %v1343 = vpop.f32.mrf.mxu0
      %v1344 = vpop.f32.mrf.mxu0
      %v1345 = vadd.f32 0.0, %v1344
      %v1346 = vpop.f32.mrf.mxu0
      %1347 = vmatprep.mubr.bf16.mxu0 0
      %1348 = vmatmul.mubr.bf16.gmra.mxu0 %v1286
      %v1349 = vpop.f32.mrf.mxu0
      %v1350 = vadd.f32 0.0, %v1349
      %v1351 = vpop.f32.mrf.mxu0
      %v1352 = vpop.f32.mrf.mxu0
      %v1353 = vadd.f32 0.0, %v1352
      %v1354 = vpop.f32.mrf.mxu0
      %1355 = vdwg.mxu0
      %v1356 = vld [vmem:[#allocation2] sm:$0xff]
      %v1357 = vld [vmem:[#allocation2 + $0x8] sm:$0xff]
      %v1358 = vld [vmem:[#allocation2 + $0x10] sm:$0xff]
      %v1359 = vld [vmem:[#allocation2 + $0x18] sm:$0xff]
      %v1360 = vld [vmem:[#allocation2 + $0x20] sm:$0xff]
      %v1361 = vld [vmem:[#allocation2 + $0x28] sm:$0xff]
      %v1362 = vld [vmem:[#allocation2 + $0x30] sm:$0xff]
      %v1363 = vld [vmem:[#allocation2 + $0x38] sm:$0xff]
      %v1364 = vadd.f32 %v1356, %v1326
      %v1365 = vadd.f32 %v1357, %v1329
      %v1366 = vadd.f32 %v1358, %v1334
      %v1367 = vadd.f32 %v1359, %v1337
      %v1368 = vadd.f32 %v1360, %v1342
      %v1369 = vadd.f32 %v1361, %v1345
      %v1370 = vadd.f32 %v1362, %v1350
      %v1371 = vadd.f32 %v1363, %v1353
      %1372 = vst [vmem:[#allocation2] sm:$0xff] %v1364
      %1373 = vst [vmem:[#allocation2 + $0x8] sm:$0xff] %v1365
      %1374 = vst [vmem:[#allocation2 + $0x10] sm:$0xff] %v1366
      %1375 = vst [vmem:[#allocation2 + $0x18] sm:$0xff] %v1367
      %1376 = vst [vmem:[#allocation2 + $0x20] sm:$0xff] %v1368
      %1377 = vst [vmem:[#allocation2 + $0x28] sm:$0xff] %v1369
      %1378 = vst [vmem:[#allocation2 + $0x30] sm:$0xff] %v1370
      %1379 = vst [vmem:[#allocation2 + $0x38] sm:$0xff] %v1371
      %s1380 = scalar_lea.vmem %s206, 80
      %v1381 = vld [vmem:[%s1380] sm:$0xf]
      %v1382 = vld [vmem:[%s1380 + $0x8] sm:$0xf]
      %v1383 = vld [vmem:[%s1380 + $0x10] sm:$0xf]
      %v1384 = vld [vmem:[%s1380 + $0x18] sm:$0xf]
      %v1385 = vld [vmem:[%s1380 + $0x20] sm:$0xf]
      %v1386 = vld [vmem:[%s1380 + $0x28] sm:$0xf]
      %v1387 = vld [vmem:[%s1380 + $0x30] sm:$0xf]
      %v1388 = vld [vmem:[%s1380 + $0x38] sm:$0xf]
      %v1397 = vunpack.c.l.b16 %v1381
      %v1398 = vunpack.c.l.b16 %v1382
      %v1399 = vunpack.c.l.b16 %v1383
      %v1400 = vunpack.c.l.b16 %v1384
      %v1401 = vunpack.c.l.b16 %v1385
      %v1402 = vunpack.c.l.b16 %v1386
      %v1403 = vunpack.c.l.b16 %v1387
      %v1404 = vunpack.c.l.b16 %v1388
      %v1405 = vpack.c.b16 %v1398, %v1397
      %v1406 = vpack.c.b16 %v1400, %v1399
      %v1407 = vpack.c.b16 %v1402, %v1401
      %v1408 = vpack.c.b16 %v1404, %v1403
      %v1410 = vunpack.c.l.b16 %v1245
      %v1411 = vpack.c.b16 %v1410, %v1410
      %v1412 = vrot.slane %v1411, 2
      %v1414 = vsel %vm253, %v1405, 0
      %v1417 = vsel %vm253, %v1406, 0
      %v1420 = vsel %vm253, %v1407, 0
      %v1423 = vsel %vm253, %v1408, 0
      %v1426 = vsel %vm266, %v1412, 0
      %1428 = vmatprep.subr.bf16.mxu0 0
      %1429 = vmatpush1.bf16.msra.mxu0 0
      %1430 = vmatprep.subr.bf16.mxu0 0
      %1431 = vmatpush1.bf16.msra.mxu0 0
      %1432 = vmatprep.subr.bf16.mxu0 0
      %1433 = vmatpush1.bf16.msra.mxu0 0
      %1434 = vmatprep.subr.bf16.mxu0 0
      %1435 = vmatpush1.bf16.msra.mxu0 0
      %1436 = vmatprep.subr.bf16.mxu0 0
      %1437 = vmatpush1.bf16.msra.mxu0 0
      %1438 = vmatprep.subr.bf16.mxu0 0
      %1439 = vmatpush1.bf16.msra.mxu0 0
      %1440 = vmatprep.subr.bf16.mxu0 0
      %1441 = vmatpush1.bf16.msra.mxu0 0
      %1442 = vmatprep.subr.bf16.mxu0 0
      %1443 = vmatpush1.bf16.msra.mxu0 %v1426
      %1444 = vmatprep.subr.bf16.mxu0 0
      %1445 = vmatpush2.bf16.msra.mxu0 0
      %1446 = vmatprep.subr.bf16.mxu0 0
      %1447 = vmatpush2.bf16.msra.mxu0 0
      %1448 = vmatprep.subr.bf16.mxu0 0
      %1449 = vmatpush2.bf16.msra.mxu0 0
      %1450 = vmatprep.subr.bf16.mxu0 0
      %1451 = vmatpush2.bf16.msra.mxu0 0
      %1452 = vmatprep.subr.bf16.mxu0 0
      %1453 = vmatpush2.bf16.msra.mxu0 0
      %1454 = vmatprep.subr.bf16.mxu0 0
      %1455 = vmatpush2.bf16.msra.mxu0 0
      %1456 = vmatprep.subr.bf16.mxu0 0
      %1457 = vmatpush2.bf16.msra.mxu0 0
      %1458 = vmatprep.subr.bf16.mxu0 0
      %1459 = vmatpush2.bf16.msra.mxu0 0
      %1460 = vmatprep.mubr.bf16.mxu0 0
      %1461 = vmatmul.mubr.bf16.gmra.mxu0 %v1414
      %v1462 = vpop.f32.mrf.mxu0
      %v1463 = vadd.f32 0.0, %v1462
      %v1464 = vpop.f32.mrf.mxu0
      %v1465 = vpop.f32.mrf.mxu0
      %v1466 = vadd.f32 0.0, %v1465
      %v1467 = vpop.f32.mrf.mxu0
      %1468 = vmatprep.mubr.bf16.mxu0 0
      %1469 = vmatmul.mubr.bf16.gmra.mxu0 %v1417
      %v1470 = vpop.f32.mrf.mxu0
      %v1471 = vadd.f32 0.0, %v1470
      %v1472 = vpop.f32.mrf.mxu0
      %v1473 = vpop.f32.mrf.mxu0
      %v1474 = vadd.f32 0.0, %v1473
      %v1475 = vpop.f32.mrf.mxu0
      %1476 = vmatprep.mubr.bf16.mxu0 0
      %1477 = vmatmul.mubr.bf16.gmra.mxu0 %v1420
      %v1478 = vpop.f32.mrf.mxu0
      %v1479 = vadd.f32 0.0, %v1478
      %v1480 = vpop.f32.mrf.mxu0
      %v1481 = vpop.f32.mrf.mxu0
      %v1482 = vadd.f32 0.0, %v1481
      %v1483 = vpop.f32.mrf.mxu0
      %1484 = vmatprep.mubr.bf16.mxu0 0
      %1485 = vmatmul.mubr.bf16.gmra.mxu0 %v1423
      %v1486 = vpop.f32.mrf.mxu0
      %v1487 = vadd.f32 0.0, %v1486
      %v1488 = vpop.f32.mrf.mxu0
      %v1489 = vpop.f32.mrf.mxu0
      %v1490 = vadd.f32 0.0, %v1489
      %v1491 = vpop.f32.mrf.mxu0
      %1492 = vdwg.mxu0
      %v1493 = vld [vmem:[#allocation2] sm:$0xff]
      %v1494 = vld [vmem:[#allocation2 + $0x8] sm:$0xff]
      %v1495 = vld [vmem:[#allocation2 + $0x10] sm:$0xff]
      %v1496 = vld [vmem:[#allocation2 + $0x18] sm:$0xff]
      %v1497 = vld [vmem:[#allocation2 + $0x20] sm:$0xff]
      %v1498 = vld [vmem:[#allocation2 + $0x28] sm:$0xff]
      %v1499 = vld [vmem:[#allocation2 + $0x30] sm:$0xff]
      %v1500 = vld [vmem:[#allocation2 + $0x38] sm:$0xff]
      %v1501 = vadd.f32 %v1493, %v1463
      %v1502 = vadd.f32 %v1494, %v1466
      %v1503 = vadd.f32 %v1495, %v1471
      %v1504 = vadd.f32 %v1496, %v1474
      %v1505 = vadd.f32 %v1497, %v1479
      %v1506 = vadd.f32 %v1498, %v1482
      %v1507 = vadd.f32 %v1499, %v1487
      %v1508 = vadd.f32 %v1500, %v1490
      %1509 = vst [vmem:[#allocation2] sm:$0xff] %v1501
      %1510 = vst [vmem:[#allocation2 + $0x8] sm:$0xff] %v1502
      %1511 = vst [vmem:[#allocation2 + $0x10] sm:$0xff] %v1503
      %1512 = vst [vmem:[#allocation2 + $0x18] sm:$0xff] %v1504
      %1513 = vst [vmem:[#allocation2 + $0x20] sm:$0xff] %v1505
      %1514 = vst [vmem:[#allocation2 + $0x28] sm:$0xff] %v1506
      %1515 = vst [vmem:[#allocation2 + $0x30] sm:$0xff] %v1507
      %1516 = vst [vmem:[#allocation2 + $0x38] sm:$0xff] %v1508
      %v1517 = vld [vmem:[%s1247] sm:$0xf]
      %v1518 = vld [vmem:[%s1247 + $0x4] sm:$0x1]
      %v1519 = vld [vmem:[%s1247 + $0x8] sm:$0xf]
      %v1520 = vld [vmem:[%s1247 + $0xc] sm:$0x1]
      %v1521 = vld [vmem:[%s1247 + $0x10] sm:$0xf]
      %v1522 = vld [vmem:[%s1247 + $0x14] sm:$0x1]
      %v1523 = vld [vmem:[%s1247 + $0x18] sm:$0xf]
      %v1524 = vld [vmem:[%s1247 + $0x1c] sm:$0x1]
      %v1525 = vld [vmem:[%s1247 + $0x20] sm:$0xf]
      %v1526 = vld [vmem:[%s1247 + $0x24] sm:$0x1]
      %v1527 = vld [vmem:[%s1247 + $0x28] sm:$0xf]
      %v1528 = vld [vmem:[%s1247 + $0x2c] sm:$0x1]
      %v1529 = vld [vmem:[%s1247 + $0x30] sm:$0xf]
      %v1530 = vld [vmem:[%s1247 + $0x34] sm:$0x1]
      %v1531 = vld [vmem:[%s1247 + $0x38] sm:$0xf]
      %v1532 = vld [vmem:[%s1247 + $0x3c] sm:$0x1]
      %v1534 = vshrl.u32 %v1517, 16
      %v1536 = vrot.slane %v1534, 4
      %v1537 = vshll.u32 %v1517, 16
      %v1539 = vrot.slane %v1537, 5
      %v1540 = vor.u32 %v1536, %v1539
      %v1541 = vrot.slane %v1540, 4
      %v1543 = vshll.u32 %v1518, 16
      %v1545 = vrot.slane %v1543, 5
      %v1546 = vsel %vm498, %v1541, %v1545
      %v1548 = vshrl.u32 %v1519, 16
      %v1550 = vrot.slane %v1548, 4
      %v1551 = vshll.u32 %v1519, 16
      %v1553 = vrot.slane %v1551, 5
      %v1554 = vor.u32 %v1550, %v1553
      %v1555 = vrot.slane %v1554, 4
      %v1557 = vshll.u32 %v1520, 16
      %v1559 = vrot.slane %v1557, 5
      %v1560 = vsel %vm498, %v1555, %v1559
      %v1562 = vshrl.u32 %v1521, 16
      %v1564 = vrot.slane %v1562, 4
      %v1565 = vshll.u32 %v1521, 16
      %v1567 = vrot.slane %v1565, 5
      %v1568 = vor.u32 %v1564, %v1567
      %v1569 = vrot.slane %v1568, 4
      %v1571 = vshll.u32 %v1522, 16
      %v1573 = vrot.slane %v1571, 5
      %v1574 = vsel %vm498, %v1569, %v1573
      %v1576 = vshrl.u32 %v1523, 16
      %v1578 = vrot.slane %v1576, 4
      %v1579 = vshll.u32 %v1523, 16
      %v1581 = vrot.slane %v1579, 5
      %v1582 = vor.u32 %v1578, %v1581
      %v1583 = vrot.slane %v1582, 4
      %v1585 = vshll.u32 %v1524, 16
      %v1587 = vrot.slane %v1585, 5
      %v1588 = vsel %vm498, %v1583, %v1587
      %v1590 = vshrl.u32 %v1525, 16
      %v1592 = vrot.slane %v1590, 4
      %v1593 = vshll.u32 %v1525, 16
      %v1595 = vrot.slane %v1593, 5
      %v1596 = vor.u32 %v1592, %v1595
      %v1597 = vrot.slane %v1596, 4
      %v1599 = vshll.u32 %v1526, 16
      %v1601 = vrot.slane %v1599, 5
      %v1602 = vsel %vm498, %v1597, %v1601
      %v1604 = vshrl.u32 %v1527, 16
      %v1606 = vrot.slane %v1604, 4
      %v1607 = vshll.u32 %v1527, 16
      %v1609 = vrot.slane %v1607, 5
      %v1610 = vor.u32 %v1606, %v1609
      %v1611 = vrot.slane %v1610, 4
      %v1613 = vshll.u32 %v1528, 16
      %v1615 = vrot.slane %v1613, 5
      %v1616 = vsel %vm498, %v1611, %v1615
      %v1618 = vshrl.u32 %v1529, 16
      %v1620 = vrot.slane %v1618, 4
      %v1621 = vshll.u32 %v1529, 16
      %v1623 = vrot.slane %v1621, 5
      %v1624 = vor.u32 %v1620, %v1623
      %v1625 = vrot.slane %v1624, 4
      %v1627 = vshll.u32 %v1530, 16
      %v1629 = vrot.slane %v1627, 5
      %v1630 = vsel %vm498, %v1625, %v1629
      %v1632 = vshrl.u32 %v1531, 16
      %v1634 = vrot.slane %v1632, 4
      %v1635 = vshll.u32 %v1531, 16
      %v1637 = vrot.slane %v1635, 5
      %v1638 = vor.u32 %v1634, %v1637
      %v1639 = vrot.slane %v1638, 4
      %v1641 = vshll.u32 %v1532, 16
      %v1643 = vrot.slane %v1641, 5
      %v1644 = vsel %vm498, %v1639, %v1643
      %v1645 = vunpack.c.l.b16 %v1546
      %v1646 = vunpack.c.l.b16 %v1560
      %v1647 = vunpack.c.l.b16 %v1574
      %v1648 = vunpack.c.l.b16 %v1588
      %v1649 = vunpack.c.l.b16 %v1602
      %v1650 = vunpack.c.l.b16 %v1616
      %v1651 = vunpack.c.l.b16 %v1630
      %v1652 = vunpack.c.l.b16 %v1644
      %v1653 = vpack.c.b16 %v1646, %v1645
      %v1654 = vpack.c.b16 %v1648, %v1647
      %v1655 = vpack.c.b16 %v1650, %v1649
      %v1656 = vpack.c.b16 %v1652, %v1651
      %v1658 = vsel %vm253, %v1653, 0
      %v1661 = vsel %vm253, %v1654, 0
      %v1664 = vsel %vm253, %v1655, 0
      %v1667 = vsel %vm253, %v1656, 0
      %v1670 = vsel %vm266, %v1246, 0
      %1672 = vmatprep.subr.bf16.mxu0 0
      %1673 = vmatpush1.bf16.msra.mxu0 0
      %1674 = vmatprep.subr.bf16.mxu0 0
      %1675 = vmatpush1.bf16.msra.mxu0 0
      %1676 = vmatprep.subr.bf16.mxu0 0
      %1677 = vmatpush1.bf16.msra.mxu0 0
      %1678 = vmatprep.subr.bf16.mxu0 0
      %1679 = vmatpush1.bf16.msra.mxu0 0
      %1680 = vmatprep.subr.bf16.mxu0 0
      %1681 = vmatpush1.bf16.msra.mxu0 0
      %1682 = vmatprep.subr.bf16.mxu0 0
      %1683 = vmatpush1.bf16.msra.mxu0 0
      %1684 = vmatprep.subr.bf16.mxu0 0
      %1685 = vmatpush1.bf16.msra.mxu0 0
      %1686 = vmatprep.subr.bf16.mxu0 0
      %1687 = vmatpush1.bf16.msra.mxu0 %v1670
      %1688 = vmatprep.subr.bf16.mxu0 0
      %1689 = vmatpush2.bf16.msra.mxu0 0
      %1690 = vmatprep.subr.bf16.mxu0 0
      %1691 = vmatpush2.bf16.msra.mxu0 0
      %1692 = vmatprep.subr.bf16.mxu0 0
      %1693 = vmatpush2.bf16.msra.mxu0 0
      %1694 = vmatprep.subr.bf16.mxu0 0
      %1695 = vmatpush2.bf16.msra.mxu0 0
      %1696 = vmatprep.subr.bf16.mxu0 0
      %1697 = vmatpush2.bf16.msra.mxu0 0
      %1698 = vmatprep.subr.bf16.mxu0 0
      %1699 = vmatpush2.bf16.msra.mxu0 0
      %1700 = vmatprep.subr.bf16.mxu0 0
      %1701 = vmatpush2.bf16.msra.mxu0 0
      %1702 = vmatprep.subr.bf16.mxu0 0
      %1703 = vmatpush2.bf16.msra.mxu0 0
      %1704 = vmatprep.mubr.bf16.mxu0 0
      %1705 = vmatmul.mubr.bf16.gmra.mxu0 %v1658
      %v1706 = vpop.f32.mrf.mxu0
      %v1707 = vadd.f32 0.0, %v1706
      %v1708 = vpop.f32.mrf.mxu0
      %v1709 = vpop.f32.mrf.mxu0
      %v1710 = vadd.f32 0.0, %v1709
      %v1711 = vpop.f32.mrf.mxu0
      %1712 = vmatprep.mubr.bf16.mxu0 0
      %1713 = vmatmul.mubr.bf16.gmra.mxu0 %v1661
      %v1714 = vpop.f32.mrf.mxu0
      %v1715 = vadd.f32 0.0, %v1714
      %v1716 = vpop.f32.mrf.mxu0
      %v1717 = vpop.f32.mrf.mxu0
      %v1718 = vadd.f32 0.0, %v1717
      %v1719 = vpop.f32.mrf.mxu0
      %1720 = vmatprep.mubr.bf16.mxu0 0
      %1721 = vmatmul.mubr.bf16.gmra.mxu0 %v1664
      %v1722 = vpop.f32.mrf.mxu0
      %v1723 = vadd.f32 0.0, %v1722
      %v1724 = vpop.f32.mrf.mxu0
      %v1725 = vpop.f32.mrf.mxu0
      %v1726 = vadd.f32 0.0, %v1725
      %v1727 = vpop.f32.mrf.mxu0
      %1728 = vmatprep.mubr.bf16.mxu0 0
      %1729 = vmatmul.mubr.bf16.gmra.mxu0 %v1667
      %v1730 = vpop.f32.mrf.mxu0
      %v1731 = vadd.f32 0.0, %v1730
      %v1732 = vpop.f32.mrf.mxu0
      %v1733 = vpop.f32.mrf.mxu0
      %v1734 = vadd.f32 0.0, %v1733
      %v1735 = vpop.f32.mrf.mxu0
      %1736 = vdwg.mxu0
      %v1737 = vld [vmem:[#allocation2] sm:$0xff]
      %v1738 = vld [vmem:[#allocation2 + $0x8] sm:$0xff]
      %v1739 = vld [vmem:[#allocation2 + $0x10] sm:$0xff]
      %v1740 = vld [vmem:[#allocation2 + $0x18] sm:$0xff]
      %v1741 = vld [vmem:[#allocation2 + $0x20] sm:$0xff]
      %v1742 = vld [vmem:[#allocation2 + $0x28] sm:$0xff]
      %v1743 = vld [vmem:[#allocation2 + $0x30] sm:$0xff]
      %v1744 = vld [vmem:[#allocation2 + $0x38] sm:$0xff]
      %v1745 = vadd.f32 %v1737, %v1707
      %v1746 = vadd.f32 %v1738, %v1710
      %v1747 = vadd.f32 %v1739, %v1715
      %v1748 = vadd.f32 %v1740, %v1718
      %v1749 = vadd.f32 %v1741, %v1723
      %v1750 = vadd.f32 %v1742, %v1726
      %v1751 = vadd.f32 %v1743, %v1731
      %v1752 = vadd.f32 %v1744, %v1734
      %1753 = vst [vmem:[#allocation2] sm:$0xff] %v1745
      %1754 = vst [vmem:[#allocation2 + $0x8] sm:$0xff] %v1746
      %1755 = vst [vmem:[#allocation2 + $0x10] sm:$0xff] %v1747
      %1756 = vst [vmem:[#allocation2 + $0x18] sm:$0xff] %v1748
      %1757 = vst [vmem:[#allocation2 + $0x20] sm:$0xff] %v1749
      %1758 = vst [vmem:[#allocation2 + $0x28] sm:$0xff] %v1750
      %1759 = vst [vmem:[#allocation2 + $0x30] sm:$0xff] %v1751
      %1760 = vst [vmem:[#allocation2 + $0x38] sm:$0xff] %v1752
      %v1761 = vld [vmem:[#allocation2] sm:$0xff]
      %v1762 = vld [vmem:[#allocation2 + $0x8] sm:$0xff]
      %v1763 = vld [vmem:[#allocation2 + $0x10] sm:$0xff]
      %v1764 = vld [vmem:[#allocation2 + $0x18] sm:$0xff]
      %v1765 = vld [vmem:[#allocation2 + $0x20] sm:$0xff]
      %v1766 = vld [vmem:[#allocation2 + $0x28] sm:$0xff]
      %v1767 = vld [vmem:[#allocation2 + $0x30] sm:$0xff]
      %v1768 = vld [vmem:[#allocation2 + $0x38] sm:$0xff]
      %v1769 = vld [vmem:[%s213] sm:$0x1]
      %v1771 = vlaneseq
      %v1772 = vshrl.u32 %v1771, 7
      %v1773 = vsub.s32 0, %v1772
      %v1774 = vrot.slane %v1769, %v1773
      %v1776 = vadd.f32 %v1761, %v1774
      %v1777 = vadd.f32 %v1762, %v1774
      %v1778 = vadd.f32 %v1763, %v1774
      %v1779 = vadd.f32 %v1764, %v1774
      %v1780 = vadd.f32 %v1765, %v1774
      %v1781 = vadd.f32 %v1766, %v1774
      %v1782 = vadd.f32 %v1767, %v1774
      %v1783 = vadd.f32 %v1768, %v1774
      %v1784 = vmax.f32 %v1776, 0.0
      %v1785 = vmax.f32 %v1777, 0.0
      %v1786 = vmax.f32 %v1778, 0.0
      %v1787 = vmax.f32 %v1779, 0.0
      %v1788 = vmax.f32 %v1780, 0.0
      %v1789 = vmax.f32 %v1781, 0.0
      %v1790 = vmax.f32 %v1782, 0.0
      %v1791 = vmax.f32 %v1783, 0.0
      %1792 = vst [vmem:[%s221] sm:$0xf] 0
      %1793 = vst [vmem:[%s221 + $0x4] sm:$0x1] 0
      %1794 = vst [vmem:[%s221 + $0x8] sm:$0xf] 0
      %1795 = vst [vmem:[%s221 + $0xc] sm:$0x1] 0
      %1796 = vst [vmem:[%s221 + $0x10] sm:$0xf] 0
      %1797 = vst [vmem:[%s221 + $0x14] sm:$0x1] 0
      %1798 = vst [vmem:[%s221 + $0x18] sm:$0xf] 0
      %1799 = vst [vmem:[%s221 + $0x1c] sm:$0x1] 0
      %1800 = vst [vmem:[%s221 + $0x20] sm:$0xf] 0
      %1801 = vst [vmem:[%s221 + $0x24] sm:$0x1] 0
      %1802 = vst [vmem:[%s221 + $0x28] sm:$0xf] 0
      %1803 = vst [vmem:[%s221 + $0x2c] sm:$0x1] 0
      %1804 = vst [vmem:[%s221 + $0x30] sm:$0xf] 0
      %1805 = vst [vmem:[%s221 + $0x34] sm:$0x1] 0
      %1806 = vst [vmem:[%s221 + $0x38] sm:$0xf] 0
      %1807 = vst [vmem:[%s221 + $0x3c] sm:$0x1] 0
      %1808 = vst [vmem:[%s221 + $0x40] sm:$0xf] 0
      %1809 = vst [vmem:[%s221 + $0x44] sm:$0x1] 0
      %1810 = vst [vmem:[%s221 + $0x48] sm:$0xf] 0
      %1811 = vst [vmem:[%s221 + $0x4c] sm:$0x1] 0
      %v1812 = vpack.c.bf16 %v1784, %v1784
      %v1813 = vpack.c.bf16 %v1785, %v1785
      %v1814 = vpack.c.bf16 %v1786, %v1786
      %v1815 = vpack.c.bf16 %v1787, %v1787
      %v1816 = vpack.c.bf16 %v1788, %v1788
      %v1817 = vpack.c.bf16 %v1789, %v1789
      %v1818 = vpack.c.bf16 %v1790, %v1790
      %v1819 = vpack.c.bf16 %v1791, %v1791
      %v1828 = vunpack.c.l.b16 %v1812
      %v1829 = vunpack.c.l.b16 %v1813
      %v1830 = vunpack.c.l.b16 %v1814
      %v1831 = vunpack.c.l.b16 %v1815
      %v1832 = vunpack.c.l.b16 %v1816
      %v1833 = vunpack.c.l.b16 %v1817
      %v1834 = vunpack.c.l.b16 %v1818
      %v1835 = vunpack.c.l.b16 %v1819
      %v1836 = vpack.c.b16 %v1828, %v1828
      %v1837 = vpack.c.b16 %v1829, %v1829
      %v1838 = vpack.c.b16 %v1830, %v1830
      %v1839 = vpack.c.b16 %v1831, %v1831
      %v1840 = vpack.c.b16 %v1832, %v1832
      %v1841 = vpack.c.b16 %v1833, %v1833
      %v1842 = vpack.c.b16 %v1834, %v1834
      %v1843 = vpack.c.b16 %v1835, %v1835
      %v1845 = vshrl.u32 %v1836, 16
      %v1847 = vrot.slane %v1845, 7
      %v1848 = vshll.u32 %v1836, 16
      %v1850 = vor.u32 %v1847, %v1848
      %v1851 = vrot.slane %v1847, 4
      %v1853 = vshrl.u32 %v1837, 16
      %v1855 = vrot.slane %v1853, 7
      %v1856 = vshll.u32 %v1837, 16
      %v1858 = vor.u32 %v1855, %v1856
      %v1859 = vrot.slane %v1855, 4
      %v1861 = vshrl.u32 %v1838, 16
      %v1863 = vrot.slane %v1861, 7
      %v1864 = vshll.u32 %v1838, 16
      %v1866 = vor.u32 %v1863, %v1864
      %v1867 = vrot.slane %v1863, 4
      %v1869 = vshrl.u32 %v1839, 16
      %v1871 = vrot.slane %v1869, 7
      %v1872 = vshll.u32 %v1839, 16
      %v1874 = vor.u32 %v1871, %v1872
      %v1875 = vrot.slane %v1871, 4
      %v1877 = vshrl.u32 %v1840, 16
      %v1879 = vrot.slane %v1877, 7
      %v1880 = vshll.u32 %v1840, 16
      %v1882 = vor.u32 %v1879, %v1880
      %v1883 = vrot.slane %v1879, 4
      %v1885 = vshrl.u32 %v1841, 16
      %v1887 = vrot.slane %v1885, 7
      %v1888 = vshll.u32 %v1841, 16
      %v1890 = vor.u32 %v1887, %v1888
      %v1891 = vrot.slane %v1887, 4
      %v1893 = vshrl.u32 %v1842, 16
      %v1895 = vrot.slane %v1893, 7
      %v1896 = vshll.u32 %v1842, 16
      %v1898 = vor.u32 %v1895, %v1896
      %v1899 = vrot.slane %v1895, 4
      %v1901 = vshrl.u32 %v1843, 16
      %v1903 = vrot.slane %v1901, 7
      %v1904 = vshll.u32 %v1843, 16
      %v1906 = vor.u32 %v1903, %v1904
      %v1907 = vrot.slane %v1903, 4
      %s1924 = scalar_lea.vmem %s221, 8
      %vm1925 = vcmask 1043456
      %vm1926 = vsmask.f32 7938
      %vm1927 = vmand %vm1925, %vm1926
      %v1928 = vld [vmem:[%s1924] sm:$0xf]
      %v1929 = vsel %vm1927, %v1850, %v1928
      %1930 = vst [vmem:[%s1924] sm:$0xf] %v1929
      %vm1931 = vcmask 1040384
      %vm1932 = vsmask.f32 256
      %vm1933 = vmand %vm1931, %vm1932
      %v1934 = vld [vmem:[%s1924 + $0x4] sm:$0x1]
      %v1935 = vsel %vm1933, %v1851, %v1934
      %1936 = vst [vmem:[%s1924 + $0x4] sm:$0x1] %v1935
      %v1937 = vld [vmem:[%s1924 + $0x8] sm:$0xf]
      %v1938 = vsel %vm1927, %v1858, %v1937
      %1939 = vst [vmem:[%s1924 + $0x8] sm:$0xf] %v1938
      %v1940 = vld [vmem:[%s1924 + $0xc] sm:$0x1]
      %v1941 = vsel %vm1933, %v1859, %v1940
      %1942 = vst [vmem:[%s1924 + $0xc] sm:$0x1] %v1941
      %v1943 = vld [vmem:[%s1924 + $0x10] sm:$0xf]
      %v1944 = vsel %vm1927, %v1866, %v1943
      %1945 = vst [vmem:[%s1924 + $0x10] sm:$0xf] %v1944
      %v1946 = vld [vmem:[%s1924 + $0x14] sm:$0x1]
      %v1947 = vsel %vm1933, %v1867, %v1946
      %1948 = vst [vmem:[%s1924 + $0x14] sm:$0x1] %v1947
      %v1949 = vld [vmem:[%s1924 + $0x18] sm:$0xf]
      %v1950 = vsel %vm1927, %v1874, %v1949
      %1951 = vst [vmem:[%s1924 + $0x18] sm:$0xf] %v1950
      %v1952 = vld [vmem:[%s1924 + $0x1c] sm:$0x1]
      %v1953 = vsel %vm1933, %v1875, %v1952
      %1954 = vst [vmem:[%s1924 + $0x1c] sm:$0x1] %v1953
      %v1955 = vld [vmem:[%s1924 + $0x20] sm:$0xf]
      %v1956 = vsel %vm1927, %v1882, %v1955
      %1957 = vst [vmem:[%s1924 + $0x20] sm:$0xf] %v1956
      %v1958 = vld [vmem:[%s1924 + $0x24] sm:$0x1]
      %v1959 = vsel %vm1933, %v1883, %v1958
      %1960 = vst [vmem:[%s1924 + $0x24] sm:$0x1] %v1959
      %v1961 = vld [vmem:[%s1924 + $0x28] sm:$0xf]
      %v1962 = vsel %vm1927, %v1890, %v1961
      %1963 = vst [vmem:[%s1924 + $0x28] sm:$0xf] %v1962
      %v1964 = vld [vmem:[%s1924 + $0x2c] sm:$0x1]
      %v1965 = vsel %vm1933, %v1891, %v1964
      %1966 = vst [vmem:[%s1924 + $0x2c] sm:$0x1] %v1965
      %v1967 = vld [vmem:[%s1924 + $0x30] sm:$0xf]
      %v1968 = vsel %vm1927, %v1898, %v1967
      %1969 = vst [vmem:[%s1924 + $0x30] sm:$0xf] %v1968
      %v1970 = vld [vmem:[%s1924 + $0x34] sm:$0x1]
      %v1971 = vsel %vm1933, %v1899, %v1970
      %1972 = vst [vmem:[%s1924 + $0x34] sm:$0x1] %v1971
      %v1973 = vld [vmem:[%s1924 + $0x38] sm:$0xf]
      %v1974 = vsel %vm1927, %v1906, %v1973
      %1975 = vst [vmem:[%s1924 + $0x38] sm:$0xf] %v1974
      %v1976 = vld [vmem:[%s1924 + $0x3c] sm:$0x1]
      %v1977 = vsel %vm1933, %v1907, %v1976
      %1978 = vst [vmem:[%s1924 + $0x3c] sm:$0x1] %v1977
      %p1979 = scmp.lt.s32.totalorder %s19, 1
      %s1980 = scalar_select %p1979, %s19, 1
      %p1981 = scmp.lt.s32.totalorder %s18, 0
      %s1982 = scalar_select %p1981, %s18, 0
      %s1983 = smul.addr %s1980, 20
      %s1984 = sadd.s32 %s1982, %s1983
      %s1985 = smul.addr %s1984, 4
      %s1986 = scalar_lea.vmem %s3, %s1985
      // Predicated region
      $region33: #{basic_block_forward.2} parent=31 // pred_check
        %p1987 = pneg %p124
      $region34: #{basic_block_forward.2} parent=31 // pred_check_branch
        %1989 = sbr.rel (%p1987) target = $region36
      $region35: #{basic_block_forward.2} parent=31 // pred_region
        _
      $region36: #{basic_block_forward.2} parent=31 // pred_fallthru
        _
    $region32: #{basic_block_forward.2} parent=5 // pred_fallthru
      _
    %p1990 = scmp.le.s32.totalorder 2, %s9
    // Predicated region
    $region37: #{basic_block_forward.2} parent=5 // pred_check
      %p1991 = pneg %p1990
    $region38: #{basic_block_forward.2} parent=5 // pred_check_branch
      %1993 = sbr.rel (%p1991) target = $region40
    $region39: #{basic_block_forward.2} parent=5 // pred_region
      %s1994 = ssub.s32 %s9, 2
      // Predicated region
      $region41: #{basic_block_forward.2} parent=39 // pred_check
        %p1995 = pneg %p130
      $region42: #{basic_block_forward.2} parent=39 // pred_check_branch
        %1997 = sbr.rel (%p1995) target = $region44
      $region43: #{basic_block_forward.2} parent=39 // pred_region
        %p1998 = scmp.lt.s32.totalorder %s21, 1
        %s1999 = scalar_select %p1998, %s21, 1
        %p2000 = scmp.lt.s32.totalorder %s20, 0
        %s2001 = scalar_select %p2000, %s20, 0
        %s2002 = smul.addr %s1999, 20
        %s2003 = sadd.s32 %s2001, %s2002
        %s2004 = smul.addr %s2003, 4
        %s2005 = scalar_lea.vmem %s3, %s2004
      $region44: #{basic_block_forward.2} parent=39 // pred_fallthru
        _
    $region40: #{basic_block_forward.2} parent=5 // pred_fallthru
      _
  $region6: #{basic_block_forward.2} parent=0 // loop_footer
    %s13 = sadd.s32 1, %s9
  $region7: #{basic_block_forward.2} parent=0 // loop_footer_branch
    %8 = sbr.rel target = $region3
  $region8: #{basic_block_forward.2} parent=0 // loop_exit
    _

// kernel: basic_block_forward.3
$region0: #{basic_block_forward.3}
  #allocation0 [shape = 'u32[]', space=smem, size = 0x4, offset = 0x4, fixed_abs, tag = 'smem constant byte address 0x4 - core index']
  #allocation1 [shape = 'u32[144,128]{1,0:T(1,128)}', space=vmem, size = 0x12000, scoped, tag = 'internal scratch']
  #allocation2 [shape = 'f32[64,128]{1,0:T(8,128)}', space=vmem, size = 0x8000, scoped, tag = 'scratch operand']
  %s0 = inlined_call_operand.vmem [shape: bf16[2,10,10,128], index: 0, kind: input, shape index: {}]
  %s1 = inlined_call_operand.vmem [shape: bf16[3,384,128], index: 1, kind: input, shape index: {}]
  %s2 = inlined_call_operand.vmem [shape: f32[1,128], index: 2, kind: input, shape index: {}]
  %s3 = inlined_call_operand.vmem [shape: bf16[2,36,9,4], index: 3, kind: input, shape index: {}]
  %s4 = inlined_call_operand.vmem [shape: bf16[4,128], index: 4, kind: input, shape index: {}]
  %s5 = inlined_call_operand.vmem [shape: f32[1,128], index: 5, kind: input, shape index: {}]
  %s6 = inlined_call_operand.vmem [shape: bf16[2,8,8,128], index: 6, kind: output, shape index: {}]
  %s7 = sld [smem:[#allocation0]]
  $region57: #{basic_block_forward.3} parent=0
    _
  %s9 = ssub.s32 1, %s7
  %s10 = scalar_select 0, %s9, %s7
  loop: start=0, step=1, limit=4
  $region2: #{basic_block_forward.3} parent=0 // loop_pre_header
    _
  $region3: #{basic_block_forward.3} parent=0 // loop_header
    %s12 = sphi 0, %s16
    %p13 = scmp.ge.s32.totalorder %s12, 4
    %s19 = sphi 0, %s31
    %s20 = sphi 0, %s27
    %s21 = sphi 0, %s19
    %s22 = sphi 0, %s20
    %s23 = sphi 0, %s21
    %s24 = sphi 0, %s22
    %s34 = sphi 0, %s36
    %s37 = sphi 0, %s34
    %s38 = sphi 0, %s37
    %s54 = sphi 0, %s38
    %s60 = sphi 0, %s62
    %s63 = sphi 0, %s60
    %s64 = sphi 0, %s63
    %s80 = sphi 0, %s64
    %s86 = sphi 0, %s88
    %s89 = sphi 0, %s86
    %s90 = sphi 0, %s89
    %s106 = sphi 0, %s90
    %s112 = sphi 0, %s114
    %s115 = sphi 0, %s112
    %s116 = sphi 0, %s115
    %s132 = sphi 0, %s116
    %s138 = sphi 0, %s140
    %s141 = sphi 0, %s138
    %s142 = sphi 0, %s141
    %s158 = sphi 0, %s142
    %s164 = sphi 0, %s166
    %s167 = sphi 0, %s164
    %s168 = sphi 0, %s167
    %s184 = sphi 0, %s168
    %s192 = sphi 0, %s194
    %s195 = sphi 0, %s192
    %s196 = sphi 0, %s195
    %s212 = sphi 0, %s196
  $region4: #{basic_block_forward.3} parent=0 // loop_header_branch
    %15 = sbr.rel (%p13) target = $region8
  $region5: #{basic_block_forward.3} parent=0 // loop_body
    %s17 = ssub.s32 %s12, 1
    %s18 = ssub.s32 %s12, 2
    %s25 = sadd.s32 1, %s20
    %p26 = scmp.ge.s32.totalorder %s25, 2
    %s27 = scalar_select %p26, 0, %s25
    %s28 = sadd.s32 1, %s19
    %s29 = scalar_select %p26, %s28, %s19
    %p30 = scmp.ge.s32.totalorder %s29, 1
    %s31 = scalar_select %p30, 0, %s29
    %s32 = ssub.s32 %s20, %s27
    %p33 = scmp.eq.s32.totalorder %s32, 0
    %s35 = sadd.s32 %s34, 1
    %s36 = scalar_select %p33, %s34, %s35
    %p39 = pneg %p33
    %p40 = scmp.eq.s32.totalorder %s12, 1
    %p41 = por %p39, %p40
    %p42 = scmp.ne.s32.totalorder %s34, %s37
    %p43 = scmp.eq.s32.totalorder %s12, 0
    %p44 = por %p42, %p43
    %p45 = scmp.ne.s32.totalorder %s34, %s37
    %p46 = scmp.eq.s32.totalorder %s17, 1
    %p47 = por %p45, %p46
    %p48 = scmp.ne.s32.totalorder %s37, %s38
    %p49 = scmp.eq.s32.totalorder %s17, 0
    %p50 = por %p48, %p49
    %p51 = scmp.ne.s32.totalorder %s37, %s38
    %p52 = scmp.eq.s32.totalorder %s18, 1
    %p53 = por %p51, %p52
    %p55 = scmp.ne.s32.totalorder %s38, %s54
    %p56 = scmp.eq.s32.totalorder %s18, 0
    %p57 = por %p55, %p56
    %s58 = ssub.s32 %s19, %s31
    %p59 = scmp.eq.s32.totalorder %s58, 0
    %s61 = sadd.s32 %s60, 1
    %s62 = scalar_select %p59, %s60, %s61
    %p65 = pneg %p59
    %p66 = scmp.eq.s32.totalorder %s12, 1
    %p67 = por %p65, %p66
    %p68 = scmp.ne.s32.totalorder %s60, %s63
    %p69 = scmp.eq.s32.totalorder %s12, 0
    %p70 = por %p68, %p69
    %p71 = scmp.ne.s32.totalorder %s60, %s63
    %p72 = scmp.eq.s32.totalorder %s17, 1
    %p73 = por %p71, %p72
    %p74 = scmp.ne.s32.totalorder %s63, %s64
    %p75 = scmp.eq.s32.totalorder %s17, 0
    %p76 = por %p74, %p75
    %p77 = scmp.ne.s32.totalorder %s63, %s64
    %p78 = scmp.eq.s32.totalorder %s18, 1
    %p79 = por %p77, %p78
    %p81 = scmp.ne.s32.totalorder %s64, %s80
    %p82 = scmp.eq.s32.totalorder %s18, 0
    %p83 = por %p81, %p82
    %s84 = ssub.s32 %s19, %s31
    %p85 = scmp.eq.s32.totalorder %s84, 0
    %s87 = sadd.s32 %s86, 1
    %s88 = scalar_select %p85, %s86, %s87
    %p91 = pneg %p85
    %p92 = scmp.eq.s32.totalorder %s12, 1
    %p93 = por %p91, %p92
    %p94 = scmp.ne.s32.totalorder %s86, %s89
    %p95 = scmp.eq.s32.totalorder %s12, 0
    %p96 = por %p94, %p95
    %p97 = scmp.ne.s32.totalorder %s86, %s89
    %p98 = scmp.eq.s32.totalorder %s17, 1
    %p99 = por %p97, %p98
    %p100 = scmp.ne.s32.totalorder %s89, %s90
    %p101 = scmp.eq.s32.totalorder %s17, 0
    %p102 = por %p100, %p101
    %p103 = scmp.ne.s32.totalorder %s89, %s90
    %p104 = scmp.eq.s32.totalorder %s18, 1
    %p105 = por %p103, %p104
    %p107 = scmp.ne.s32.totalorder %s90, %s106
    %p108 = scmp.eq.s32.totalorder %s18, 0
    %p109 = por %p107, %p108
    %s110 = ssub.s32 %s20, %s27
    %p111 = scmp.eq.s32.totalorder %s110, 0
    %s113 = sadd.s32 %s112, 1
    %s114 = scalar_select %p111, %s112, %s113
    %p117 = pneg %p111
    %p118 = scmp.eq.s32.totalorder %s12, 1
    %p119 = por %p117, %p118
    %p120 = scmp.ne.s32.totalorder %s112, %s115
    %p121 = scmp.eq.s32.totalorder %s12, 0
    %p122 = por %p120, %p121
    %p123 = scmp.ne.s32.totalorder %s112, %s115
    %p124 = scmp.eq.s32.totalorder %s17, 1
    %p125 = por %p123, %p124
    %p126 = scmp.ne.s32.totalorder %s115, %s116
    %p127 = scmp.eq.s32.totalorder %s17, 0
    %p128 = por %p126, %p127
    %p129 = scmp.ne.s32.totalorder %s115, %s116
    %p130 = scmp.eq.s32.totalorder %s18, 1
    %p131 = por %p129, %p130
    %p133 = scmp.ne.s32.totalorder %s116, %s132
    %p134 = scmp.eq.s32.totalorder %s18, 0
    %p135 = por %p133, %p134
    %s136 = ssub.s32 %s19, %s31
    %p137 = scmp.eq.s32.totalorder %s136, 0
    %s139 = sadd.s32 %s138, 1
    %s140 = scalar_select %p137, %s138, %s139
    %p143 = pneg %p137
    %p144 = scmp.eq.s32.totalorder %s12, 1
    %p145 = por %p143, %p144
    %p146 = scmp.ne.s32.totalorder %s138, %s141
    %p147 = scmp.eq.s32.totalorder %s12, 0
    %p148 = por %p146, %p147
    %p149 = scmp.ne.s32.totalorder %s138, %s141
    %p150 = scmp.eq.s32.totalorder %s17, 1
    %p151 = por %p149, %p150
    %p152 = scmp.ne.s32.totalorder %s141, %s142
    %p153 = scmp.eq.s32.totalorder %s17, 0
    %p154 = por %p152, %p153
    %p155 = scmp.ne.s32.totalorder %s141, %s142
    %p156 = scmp.eq.s32.totalorder %s18, 1
    %p157 = por %p155, %p156
    %p159 = scmp.ne.s32.totalorder %s142, %s158
    %p160 = scmp.eq.s32.totalorder %s18, 0
    %p161 = por %p159, %p160
    %s162 = ssub.s32 %s19, %s31
    %p163 = scmp.eq.s32.totalorder %s162, 0
    %s165 = sadd.s32 %s164, 1
    %s166 = scalar_select %p163, %s164, %s165
    %p169 = pneg %p163
    %p170 = scmp.eq.s32.totalorder %s12, 1
    %p171 = por %p169, %p170
    %p172 = scmp.ne.s32.totalorder %s164, %s167
    %p173 = scmp.eq.s32.totalorder %s12, 0
    %p174 = por %p172, %p173
    %p175 = scmp.ne.s32.totalorder %s164, %s167
    %p176 = scmp.eq.s32.totalorder %s17, 1
    %p177 = por %p175, %p176
    %p178 = scmp.ne.s32.totalorder %s167, %s168
    %p179 = scmp.eq.s32.totalorder %s17, 0
    %p180 = por %p178, %p179
    %p181 = scmp.ne.s32.totalorder %s167, %s168
    %p182 = scmp.eq.s32.totalorder %s18, 1
    %p183 = por %p181, %p182
    %p185 = scmp.ne.s32.totalorder %s168, %s184
    %p186 = scmp.eq.s32.totalorder %s18, 0
    %p187 = por %p185, %p186
    %s188 = ssub.s32 %s20, %s27
    %s189 = ssub.s32 %s19, %s31
    %s190 = sor.u32 %s188, %s189
    %p191 = scmp.eq.s32.totalorder %s190, 0
    %s193 = sadd.s32 %s192, 1
    %s194 = scalar_select %p191, %s192, %s193
    %p197 = pneg %p191
    %p198 = scmp.eq.s32.totalorder %s12, 1
    %p199 = por %p197, %p198
    %p200 = scmp.ne.s32.totalorder %s192, %s195
    %p201 = scmp.eq.s32.totalorder %s12, 0
    %p202 = por %p200, %p201
    %p203 = scmp.ne.s32.totalorder %s192, %s195
    %p204 = scmp.eq.s32.totalorder %s17, 1
    %p205 = por %p203, %p204
    %p206 = scmp.ne.s32.totalorder %s195, %s196
    %p207 = scmp.eq.s32.totalorder %s17, 0
    %p208 = por %p206, %p207
    %p209 = scmp.ne.s32.totalorder %s195, %s196
    %p210 = scmp.eq.s32.totalorder %s18, 1
    %p211 = por %p209, %p210
    %p213 = scmp.ne.s32.totalorder %s196, %s212
    %p214 = scmp.eq.s32.totalorder %s18, 0
    %p215 = por %p213, %p214
    %p216 = scmp.le.s32.totalorder 1, %s12
    %p217 = scmp.lt.s32.totalorder %s12, 3
    %p218 = pnand %p216, %p217
    %p219 = pneg %p218
    // Predicated region
    $region9: #{basic_block_forward.3} parent=5 // pred_check
      _
    $region10: #{basic_block_forward.3} parent=5 // pred_check_branch
      %221 = sbr.rel (%p218) target = $region12
    $region11: #{basic_block_forward.3} parent=5 // pred_region
      %s222 = ssub.s32 %s12, 1
      // Predicated region
      $region13: #{basic_block_forward.3} parent=11 // pred_check
        %p223 = pneg %p76
      $region14: #{basic_block_forward.3} parent=11 // pred_check_branch
        %225 = sbr.rel (%p223) target = $region16
      $region15: #{basic_block_forward.3} parent=11 // pred_region
        %p226 = scmp.lt.s32.totalorder %s21, 0
        %s227 = scalar_select %p226, %s21, 0
        %s228 = smul.addr %s227, 4
        %s229 = scalar_lea.vmem %s1, %s228
      $region16: #{basic_block_forward.3} parent=11 // pred_fallthru
        _
      // Predicated region
      $region17: #{basic_block_forward.3} parent=11 // pred_check
        %p230 = pneg %p102
      $region18: #{basic_block_forward.3} parent=11 // pred_check_branch
        %232 = sbr.rel (%p230) target = $region20
      $region19: #{basic_block_forward.3} parent=11 // pred_region
        %p233 = scmp.lt.s32.totalorder %s21, 0
        %s234 = scalar_select %p233, %s21, 0
        %s235 = scalar_lea.vmem %s2, %s234
      $region20: #{basic_block_forward.3} parent=11 // pred_fallthru
        _
      // Predicated region
      $region21: #{basic_block_forward.3} parent=11 // pred_check
        %p236 = pneg %p154
      $region22: #{basic_block_forward.3} parent=11 // pred_check_branch
        %238 = sbr.rel (%p236) target = $region24
      $region23: #{basic_block_forward.3} parent=11 // pred_region
        %p239 = scmp.lt.s32.totalorder %s21, 0
        %s240 = scalar_select %p239, %s21, 0
        %s241 = smul.addr %s240, 2
        %s242 = scalar_lea.vmem %s4, %s241
      $region24: #{basic_block_forward.3} parent=11 // pred_fallthru
        _
      // Predicated region
      $region25: #{basic_block_forward.3} parent=11 // pred_check
        %p243 = pneg %p180
      $region26: #{basic_block_forward.3} parent=11 // pred_check_branch
        %245 = sbr.rel (%p243) target = $region28
      $region27: #{basic_block_forward.3} parent=11 // pred_region
        %p246 = scmp.lt.s32.totalorder %s21, 0
        %s247 = scalar_select %p246, %s21, 0
        %s248 = scalar_lea.vmem %s5, %s247
      $region28: #{basic_block_forward.3} parent=11 // pred_fallthru
        _
    $region12: #{basic_block_forward.3} parent=5 // pred_fallthru
      _
    %p249 = scmp.lt.s32.totalorder %s12, 2
    // Predicated region
    $region29: #{basic_block_forward.3} parent=5 // pred_check
      %p250 = pneg %p249
    $region30: #{basic_block_forward.3} parent=5 // pred_check_branch
      %252 = sbr.rel (%p250) target = $region32
    $region31: #{basic_block_forward.3} parent=5 // pred_region
      // Predicated region
      $region33: #{basic_block_forward.3} parent=31 // pred_check
        %p253 = pneg %p44
      $region34: #{basic_block_forward.3} parent=31 // pred_check_branch
        %255 = sbr.rel (%p253) target = $region36
      $region35: #{basic_block_forward.3} parent=31 // pred_region
        %p256 = scmp.lt.s32.totalorder %s20, 1
        %s257 = scalar_select %p256, %s20, 1
        %s258 = smul.addr %s257, 20
        %s259 = smul.addr %s258, 4
        %s260 = scalar_lea.vmem %s0, %s259
      $region36: #{basic_block_forward.3} parent=31 // pred_fallthru
        _
      // Predicated region
      $region37: #{basic_block_forward.3} parent=31 // pred_check
        %p261 = pneg %p122
      $region38: #{basic_block_forward.3} parent=31 // pred_check_branch
        %263 = sbr.rel (%p261) target = $region40
      $region39: #{basic_block_forward.3} parent=31 // pred_region
        %p264 = scmp.lt.s32.totalorder %s20, 1
        %s265 = scalar_select %p264, %s20, 1
        %s266 = smul.addr %s265, 72
        %s267 = smul.addr %s266, 4
        %s268 = scalar_lea.vmem %s3, %s267
      $region40: #{basic_block_forward.3} parent=31 // pred_fallthru
        _
    $region32: #{basic_block_forward.3} parent=5 // pred_fallthru
      _
    %p269 = scmp.le.s32.totalorder 1, %s12
    %p270 = scmp.lt.s32.totalorder %s12, 3
    %p271 = pnand %p269, %p270
    %p272 = pneg %p271
    // Predicated region
    $region41: #{basic_block_forward.3} parent=5 // pred_check
      _
    $region42: #{basic_block_forward.3} parent=5 // pred_check_branch
      %274 = sbr.rel (%p271) target = $region44
    $region43: #{basic_block_forward.3} parent=5 // pred_region
      %s275 = ssub.s32 %s12, 1
      %p276 = scmp.lt.s32.totalorder %s22, 1
      %s277 = scalar_select %p276, %s22, 1
      %s278 = smul.addr %s277, 20
      %s279 = smul.addr %s278, 4
      %s280 = scalar_lea.vmem %s0, %s279
      %p281 = pneg %p50
      %p282 = pneg %p47
      %p283 = scmp.lt.s32.totalorder %s21, 0
      %s284 = scalar_select %p283, %s21, 0
      %s285 = smul.addr %s284, 4
      %s286 = scalar_lea.vmem %s1, %s285
      %p287 = pneg %p76
      %p288 = pneg %p73
      %p289 = scmp.lt.s32.totalorder %s21, 0
      %s290 = scalar_select %p289, %s21, 0
      %s291 = scalar_lea.vmem %s2, %s290
      %p292 = pneg %p102
      %p293 = pneg %p99
      %p294 = scmp.lt.s32.totalorder %s22, 1
      %s295 = scalar_select %p294, %s22, 1
      %s296 = smul.addr %s295, 72
      %s297 = smul.addr %s296, 4
      %s298 = scalar_lea.vmem %s3, %s297
      %p299 = pneg %p128
      %p300 = pneg %p125
      %p301 = scmp.lt.s32.totalorder %s21, 0
      %s302 = scalar_select %p301, %s21, 0
      %s303 = smul.addr %s302, 2
      %s304 = scalar_lea.vmem %s4, %s303
      %p305 = pneg %p154
      %p306 = pneg %p151
      %p307 = scmp.lt.s32.totalorder %s21, 0
      %s308 = scalar_select %p307, %s21, 0
      %s309 = scalar_lea.vmem %s5, %s308
      %p310 = pneg %p180
      %p311 = pneg %p177
      %p312 = pneg %p208
      %p313 = pneg %p205
      %p314 = scmp.lt.s32.totalorder %s22, 1
      %s315 = scalar_select %p314, %s22, 1
      %p316 = scmp.lt.s32.totalorder %s21, 0
      %s317 = scalar_select %p316, %s21, 0
      %s318 = smul.addr %s315, 8
      %s319 = sadd.s32 %s317, %s318
      %s320 = smul.addr %s319, 4
      %s321 = scalar_lea.vmem %s6, %s320
      %p322 = scmp.lt.s32.totalorder %s22, 1
      %s323 = scalar_select %p322, %s22, 1
      %s324 = smul.addr %s323, 20
      %s325 = smul.addr %s324, 4
      %s326 = scalar_lea.vmem %s0, %s325
      %p327 = scmp.lt.s32.totalorder %s21, 0
      %s328 = scalar_select %p327, %s21, 0
      %s329 = smul.addr %s328, 4
      %s330 = scalar_lea.vmem %s1, %s329
      %p331 = scmp.lt.s32.totalorder %s21, 0
      %s332 = scalar_select %p331, %s21, 0
      %s333 = scalar_lea.vmem %s2, %s332
      %p334 = scmp.lt.s32.totalorder %s22, 1
      %s335 = scalar_select %p334, %s22, 1
      %s336 = smul.addr %s335, 72
      %s337 = smul.addr %s336, 4
      %s338 = scalar_lea.vmem %s3, %s337
      %p339 = scmp.lt.s32.totalorder %s21, 0
      %s340 = scalar_select %p339, %s21, 0
      %s341 = smul.addr %s340, 2
      %s342 = scalar_lea.vmem %s4, %s341
      %p343 = scmp.lt.s32.totalorder %s21, 0
      %s344 = scalar_select %p343, %s21, 0
      %s345 = scalar_lea.vmem %s5, %s344
      %p346 = scmp.lt.s32.totalorder %s22, 1
      %s347 = scalar_select %p346, %s22, 1
      %p348 = scmp.lt.s32.totalorder %s21, 0
      %s349 = scalar_select %p348, %s21, 0
      %s350 = smul.addr %s347, 8
      %s351 = sadd.s32 %s349, %s350
      %s352 = smul.addr %s351, 4
      %s353 = scalar_lea.vmem %s6, %s352
      %v355 = vld [vmem:[%s326] sm:$0xf]
      %v356 = vld [vmem:[%s326 + $0x8] sm:$0xf]
      %v357 = vld [vmem:[%s326 + $0x10] sm:$0xf]
      %v358 = vld [vmem:[%s326 + $0x18] sm:$0xf]
      %v359 = vld [vmem:[%s326 + $0x20] sm:$0xf]
      %v360 = vld [vmem:[%s326 + $0x28] sm:$0xf]
      %v361 = vld [vmem:[%s326 + $0x30] sm:$0xf]
      %v362 = vld [vmem:[%s326 + $0x38] sm:$0xf]
      %v363 = vld [vmem:[%s326 + $0x4] sm:$0x1]
      %v364 = vld [vmem:[%s326 + $0xc] sm:$0x1]
      %v365 = vld [vmem:[%s326 + $0x14] sm:$0x1]
      %v366 = vld [vmem:[%s326 + $0x1c] sm:$0x1]
      %v367 = vld [vmem:[%s326 + $0x24] sm:$0x1]
      %v368 = vld [vmem:[%s326 + $0x2c] sm:$0x1]
      %v369 = vld [vmem:[%s326 + $0x34] sm:$0x1]
      %v370 = vld [vmem:[%s326 + $0x3c] sm:$0x1]
      %v371 = vld [vmem:[%s326] sm:$0xe]
      %v372 = vld [vmem:[%s326 + $0x8] sm:$0xe]
      %v373 = vld [vmem:[%s326 + $0x10] sm:$0xe]
      %v374 = vld [vmem:[%s326 + $0x18] sm:$0xe]
      %v375 = vld [vmem:[%s326 + $0x20] sm:$0xe]
      %v376 = vld [vmem:[%s326 + $0x28] sm:$0xe]
      %v377 = vld [vmem:[%s326 + $0x30] sm:$0xe]
      %v378 = vld [vmem:[%s326 + $0x38] sm:$0xe]
      %v395 = vunpack.c.l.b16 %v355
      %v396 = vunpack.c.l.b16 %v363
      %v397 = vunpack.c.l.b16 %v356
      %v398 = vunpack.c.l.b16 %v364
      %v399 = vunpack.c.l.b16 %v357
      %v400 = vunpack.c.l.b16 %v365
      %v401 = vunpack.c.l.b16 %v358
      %v402 = vunpack.c.l.b16 %v366
      %v403 = vunpack.c.l.b16 %v359
      %v404 = vunpack.c.l.b16 %v367
      %v405 = vunpack.c.l.b16 %v360
      %v406 = vunpack.c.l.b16 %v368
      %v407 = vunpack.c.l.b16 %v361
      %v408 = vunpack.c.l.b16 %v369
      %v409 = vunpack.c.l.b16 %v362
      %v410 = vunpack.c.l.b16 %v370
      %v411 = vpack.c.b16 %v396, %v395
      %v412 = vpack.c.b16 %v398, %v397
      %v413 = vpack.c.b16 %v400, %v399
      %v414 = vpack.c.b16 %v402, %v401
      %v415 = vpack.c.b16 %v404, %v403
      %v416 = vpack.c.b16 %v406, %v405
      %v417 = vpack.c.b16 %v408, %v407
      %v418 = vpack.c.b16 %v410, %v409
      %v420 = vshrl.u32 %v411, 16
      %v422 = vshll.u32 %v411, 16
      %v424 = vrot.slane %v422, 1
      %v425 = vor.u32 %v420, %v424
      %v427 = vshrl.u32 %v412, 16
      %v429 = vshll.u32 %v412, 16
      %v431 = vrot.slane %v429, 1
      %v432 = vor.u32 %v427, %v431
      %v434 = vshrl.u32 %v413, 16
      %v436 = vshll.u32 %v413, 16
      %v438 = vrot.slane %v436, 1
      %v439 = vor.u32 %v434, %v438
      %v441 = vshrl.u32 %v414, 16
      %v443 = vshll.u32 %v414, 16
      %v445 = vrot.slane %v443, 1
      %v446 = vor.u32 %v441, %v445
      %v448 = vshrl.u32 %v415, 16
      %v450 = vshll.u32 %v415, 16
      %v452 = vrot.slane %v450, 1
      %v453 = vor.u32 %v448, %v452
      %v455 = vshrl.u32 %v416, 16
      %v457 = vshll.u32 %v416, 16
      %v459 = vrot.slane %v457, 1
      %v460 = vor.u32 %v455, %v459
      %v462 = vshrl.u32 %v417, 16
      %v464 = vshll.u32 %v417, 16
      %v466 = vrot.slane %v464, 1
      %v467 = vor.u32 %v462, %v466
      %v469 = vshrl.u32 %v418, 16
      %v471 = vshll.u32 %v418, 16
      %v473 = vrot.slane %v471, 1
      %v474 = vor.u32 %v469, %v473
      %v483 = vunpack.c.l.b16 %v371
      %v484 = vunpack.c.l.b16 %v372
      %v485 = vunpack.c.l.b16 %v373
      %v486 = vunpack.c.l.b16 %v374
      %v487 = vunpack.c.l.b16 %v375
      %v488 = vunpack.c.l.b16 %v376
      %v489 = vunpack.c.l.b16 %v377
      %v490 = vunpack.c.l.b16 %v378
      %v491 = vpack.c.b16 %v396, %v483
      %v492 = vpack.c.b16 %v398, %v484
      %v493 = vpack.c.b16 %v400, %v485
      %v494 = vpack.c.b16 %v402, %v486
      %v495 = vpack.c.b16 %v404, %v487
      %v496 = vpack.c.b16 %v406, %v488
      %v497 = vpack.c.b16 %v408, %v489
      %v498 = vpack.c.b16 %v410, %v490
      %v499 = vrot.slane %v491, 1
      %v500 = vrot.slane %v492, 1
      %v501 = vrot.slane %v493, 1
      %v502 = vrot.slane %v494, 1
      %v503 = vrot.slane %v495, 1
      %v504 = vrot.slane %v496, 1
      %v505 = vrot.slane %v497, 1
      %v506 = vrot.slane %v498, 1
      %v507 = vunpack.c.l.b16 %v425
      %v508 = vunpack.c.l.b16 %v499
      %v509 = vunpack.c.l.b16 %v432
      %v510 = vunpack.c.l.b16 %v500
      %v511 = vunpack.c.l.b16 %v439
      %v512 = vunpack.c.l.b16 %v501
      %v513 = vunpack.c.l.b16 %v446
      %v514 = vunpack.c.l.b16 %v502
      %v515 = vunpack.c.l.b16 %v453
      %v516 = vunpack.c.l.b16 %v503
      %v517 = vunpack.c.l.b16 %v460
      %v518 = vunpack.c.l.b16 %v504
      %v519 = vunpack.c.l.b16 %v467
      %v520 = vunpack.c.l.b16 %v505
      %v521 = vunpack.c.l.b16 %v474
      %v522 = vunpack.c.l.b16 %v506
      %v523 = vld [vmem:[%s330] sm:$0xf]
      %v524 = vld [vmem:[%s330 + $0x4] sm:$0xf]
      %v525 = vld [vmem:[%s330 + $0x8] sm:$0xf]
      %v526 = vld [vmem:[%s330 + $0xc] sm:$0xf]
      %v527 = vld [vmem:[%s330 + $0x10] sm:$0xf]
      %v528 = vld [vmem:[%s330 + $0x14] sm:$0xf]
      %v529 = vld [vmem:[%s330 + $0x18] sm:$0xf]
      %v530 = vld [vmem:[%s330 + $0x1c] sm:$0xf]
      %v531 = vld [vmem:[%s330 + $0x20] sm:$0xf]
      %v532 = vld [vmem:[%s330 + $0x24] sm:$0xf]
      %v533 = vld [vmem:[%s330 + $0x28] sm:$0xf]
      %v534 = vld [vmem:[%s330 + $0x2c] sm:$0xf]
      %v535 = vld [vmem:[%s330 + $0x30] sm:$0xf]
      %v536 = vld [vmem:[%s330 + $0x34] sm:$0xf]
      %v537 = vld [vmem:[%s330 + $0x38] sm:$0xf]
      %v538 = vld [vmem:[%s330 + $0x3c] sm:$0xf]
      %v539 = vld [vmem:[%s330 + $0x40] sm:$0xf]
      %v540 = vld [vmem:[%s330 + $0x44] sm:$0xf]
      %v541 = vld [vmem:[%s330 + $0x48] sm:$0xf]
      %v542 = vld [vmem:[%s330 + $0x4c] sm:$0xf]
      %v543 = vld [vmem:[%s330 + $0x50] sm:$0xf]
      %v544 = vld [vmem:[%s330 + $0x54] sm:$0xf]
      %v545 = vld [vmem:[%s330 + $0x58] sm:$0xf]
      %v546 = vld [vmem:[%s330 + $0x5c] sm:$0xf]
      %v547 = vld [vmem:[%s330 + $0x60] sm:$0xf]
      %v548 = vld [vmem:[%s330 + $0x64] sm:$0xf]
      %v549 = vld [vmem:[%s330 + $0x68] sm:$0xf]
      %v550 = vld [vmem:[%s330 + $0x6c] sm:$0xf]
      %v551 = vld [vmem:[%s330 + $0x70] sm:$0xf]
      %v552 = vld [vmem:[%s330 + $0x74] sm:$0xf]
      %v553 = vld [vmem:[%s330 + $0x78] sm:$0xf]
      %v554 = vld [vmem:[%s330 + $0x7c] sm:$0xf]
      %v555 = vld [vmem:[%s330 + $0x80] sm:$0xf]
      %v556 = vld [vmem:[%s330 + $0x84] sm:$0xf]
      %v557 = vld [vmem:[%s330 + $0x88] sm:$0xf]
      %v558 = vld [vmem:[%s330 + $0x8c] sm:$0xf]
      %v559 = vld [vmem:[%s330 + $0x90] sm:$0xf]
      %v560 = vld [vmem:[%s330 + $0x94] sm:$0xf]
      %v561 = vld [vmem:[%s330 + $0x98] sm:$0xf]
      %v562 = vld [vmem:[%s330 + $0x9c] sm:$0xf]
      %v563 = vld [vmem:[%s330 + $0xa0] sm:$0xf]
      %v564 = vld [vmem:[%s330 + $0xa4] sm:$0xf]
      %v565 = vld [vmem:[%s330 + $0xa8] sm:$0xf]
      %v566 = vld [vmem:[%s330 + $0xac] sm:$0xf]
      %v567 = vld [vmem:[%s330 + $0xb0] sm:$0xf]
      %v568 = vld [vmem:[%s330 + $0xb4] sm:$0xf]
      %v569 = vld [vmem:[%s330 + $0xb8] sm:$0xf]
      %v570 = vld [vmem:[%s330 + $0xbc] sm:$0xf]
      %v571 = vpack.c.b16 %v397, %v395
      %v572 = vpack.c.b16 %v509, %v507
      %v573 = vpack.c.b16 %v510, %v508
      %v574 = vpack.c.b16 %v401, %v399
      %v575 = vpack.c.b16 %v513, %v511
      %v576 = vpack.c.b16 %v514, %v512
      %v577 = vpack.c.b16 %v405, %v403
      %v578 = vpack.c.b16 %v517, %v515
      %v579 = vpack.c.b16 %v518, %v516
      %v580 = vpack.c.b16 %v409, %v407
      %v581 = vpack.c.b16 %v521, %v519
      %v582 = vpack.c.b16 %v522, %v520
      %v643 = vunpack.c.l.b16 %v523
      %v644 = vunpack.c.l.b16 %v524
      %v645 = vunpack.c.l.b16 %v525
      %v646 = vunpack.c.l.b16 %v526
      %v647 = vunpack.c.l.b16 %v527
      %v648 = vunpack.c.l.b16 %v528
      %v649 = vunpack.c.l.b16 %v529
      %v650 = vunpack.c.l.b16 %v530
      %v651 = vunpack.c.l.b16 %v531
      %v652 = vunpack.c.l.b16 %v532
      %v653 = vunpack.c.l.b16 %v533
      %v654 = vunpack.c.l.b16 %v534
      %v655 = vunpack.c.l.b16 %v535
      %v656 = vunpack.c.l.b16 %v536
      %v657 = vunpack.c.l.b16 %v537
      %v658 = vunpack.c.l.b16 %v538
      %v659 = vunpack.c.l.b16 %v539
      %v660 = vunpack.c.l.b16 %v540
      %v661 = vunpack.c.l.b16 %v541
      %v662 = vunpack.c.l.b16 %v542
      %v663 = vunpack.c.l.b16 %v543
      %v664 = vunpack.c.l.b16 %v544
      %v665 = vunpack.c.l.b16 %v545
      %v666 = vunpack.c.l.b16 %v546
      %v667 = vunpack.c.l.b16 %v547
      %v668 = vunpack.c.l.b16 %v548
      %v669 = vunpack.c.l.b16 %v549
      %v670 = vunpack.c.l.b16 %v550
      %v671 = vunpack.c.l.b16 %v551
      %v672 = vunpack.c.l.b16 %v552
      %v673 = vunpack.c.l.b16 %v553
      %v674 = vunpack.c.l.b16 %v554
      %v675 = vunpack.c.l.b16 %v555
      %v676 = vunpack.c.l.b16 %v556
      %v677 = vunpack.c.l.b16 %v557
      %v678 = vunpack.c.l.b16 %v558
      %v679 = vunpack.c.l.b16 %v559
      %v680 = vunpack.c.l.b16 %v560
      %v681 = vunpack.c.l.b16 %v561
      %v682 = vunpack.c.l.b16 %v562
      %v683 = vunpack.c.l.b16 %v563
      %v684 = vunpack.c.l.b16 %v564
      %v685 = vunpack.c.l.b16 %v565
      %v686 = vunpack.c.l.b16 %v566
      %v687 = vunpack.c.l.b16 %v567
      %v688 = vunpack.c.l.b16 %v568
      %v689 = vunpack.c.l.b16 %v569
      %v690 = vunpack.c.l.b16 %v570
      %v691 = vpack.c.b16 %v644, %v643
      %v692 = vpack.c.b16 %v646, %v645
      %v693 = vpack.c.b16 %v648, %v647
      %v694 = vpack.c.b16 %v650, %v649
      %v695 = vpack.c.b16 %v652, %v651
      %v696 = vpack.c.b16 %v654, %v653
      %v697 = vpack.c.b16 %v656, %v655
      %v698 = vpack.c.b16 %v658, %v657
      %v699 = vpack.c.b16 %v660, %v659
      %v700 = vpack.c.b16 %v662, %v661
      %v701 = vpack.c.b16 %v664, %v663
      %v702 = vpack.c.b16 %v666, %v665
      %v703 = vpack.c.b16 %v668, %v667
      %v704 = vpack.c.b16 %v670, %v669
      %v705 = vpack.c.b16 %v672, %v671
      %v706 = vpack.c.b16 %v674, %v673
      %v707 = vpack.c.b16 %v676, %v675
      %v708 = vpack.c.b16 %v678, %v677
      %v709 = vpack.c.b16 %v680, %v679
      %v710 = vpack.c.b16 %v682, %v681
      %v711 = vpack.c.b16 %v684, %v683
      %v712 = vpack.c.b16 %v686, %v685
      %v713 = vpack.c.b16 %v688, %v687
      %v714 = vpack.c.b16 %v690, %v689
      %739 = vmatprep.subr.bf16.mxu0 0
      %740 = vmatpush1.bf16.msra.mxu0 %v698
      %741 = vmatprep.subr.bf16.mxu0 0
      %742 = vmatpush1.bf16.msra.mxu0 %v697
      %743 = vmatprep.subr.bf16.mxu0 0
      %744 = vmatpush1.bf16.msra.mxu0 %v696
      %745 = vmatprep.subr.bf16.mxu0 0
      %746 = vmatpush1.bf16.msra.mxu0 %v695
      %747 = vmatprep.subr.bf16.mxu0 0
      %748 = vmatpush1.bf16.msra.mxu0 %v694
      %749 = vmatprep.subr.bf16.mxu0 0
      %750 = vmatpush1.bf16.msra.mxu0 %v693
      %751 = vmatprep.subr.bf16.mxu0 0
      %752 = vmatpush1.bf16.msra.mxu0 %v692
      %753 = vmatprep.subr.bf16.mxu0 0
      %754 = vmatpush1.bf16.msra.mxu0 %v691
      %755 = vmatprep.subr.bf16.mxu0 0
      %756 = vmatpush2.bf16.msra.mxu0 %v706
      %757 = vmatprep.subr.bf16.mxu0 0
      %758 = vmatpush2.bf16.msra.mxu0 %v705
      %759 = vmatprep.subr.bf16.mxu0 0
      %760 = vmatpush2.bf16.msra.mxu0 %v704
      %761 = vmatprep.subr.bf16.mxu0 0
      %762 = vmatpush2.bf16.msra.mxu0 %v703
      %763 = vmatprep.subr.bf16.mxu0 0
      %764 = vmatpush2.bf16.msra.mxu0 %v702
      %765 = vmatprep.subr.bf16.mxu0 0
      %766 = vmatpush2.bf16.msra.mxu0 %v701
      %767 = vmatprep.subr.bf16.mxu0 0
      %768 = vmatpush2.bf16.msra.mxu0 %v700
      %769 = vmatprep.subr.bf16.mxu0 0
      %770 = vmatpush2.bf16.msra.mxu0 %v699
      %771 = vmatprep.mubr.bf16.mxu0 %v572
      %772 = vmatmul.mubr.bf16.gmra.mxu0 %v571
      %v773 = vpop.f32.mrf.mxu0
      %v774 = vadd.f32 0.0, %v773
      %v775 = vpop.f32.mrf.mxu0
      %v776 = vpop.f32.mrf.mxu0
      %v777 = vadd.f32 0.0, %v776
      %v778 = vpop.f32.mrf.mxu0
      %779 = vmatprep.mubr.bf16.mxu0 %v575
      %780 = vmatmul.mubr.bf16.gmra.mxu0 %v574
      %v781 = vpop.f32.mrf.mxu0
      %v782 = vadd.f32 0.0, %v781
      %v783 = vpop.f32.mrf.mxu0
      %v784 = vpop.f32.mrf.mxu0
      %v785 = vadd.f32 0.0, %v784
      %v786 = vpop.f32.mrf.mxu0
      %787 = vmatprep.mubr.bf16.mxu0 %v578
      %788 = vmatmul.mubr.bf16.gmra.mxu0 %v577
      %v789 = vpop.f32.mrf.mxu0
      %v790 = vadd.f32 0.0, %v789
      %v791 = vpop.f32.mrf.mxu0
      %v792 = vpop.f32.mrf.mxu0
      %v793 = vadd.f32 0.0, %v792
      %v794 = vpop.f32.mrf.mxu0
      %795 = vmatprep.mubr.bf16.mxu0 %v581
      %796 = vmatmul.mubr.bf16.gmra.mxu0 %v580
      %v797 = vpop.f32.mrf.mxu0
      %v798 = vadd.f32 0.0, %v797
      %v799 = vpop.f32.mrf.mxu0
      %v800 = vpop.f32.mrf.mxu0
      %v801 = vadd.f32 0.0, %v800
      %v802 = vpop.f32.mrf.mxu0
      %803 = vdwg.mxu0
      %804 = vmatprep.subr.bf16.mxu0 0
      %805 = vmatpush1.bf16.msra.mxu0 %v714
      %806 = vmatprep.subr.bf16.mxu0 0
      %807 = vmatpush1.bf16.msra.mxu0 %v713
      %808 = vmatprep.subr.bf16.mxu0 0
      %809 = vmatpush1.bf16.msra.mxu0 %v712
      %810 = vmatprep.subr.bf16.mxu0 0
      %811 = vmatpush1.bf16.msra.mxu0 %v711
      %812 = vmatprep.subr.bf16.mxu0 0
      %813 = vmatpush1.bf16.msra.mxu0 %v710
      %814 = vmatprep.subr.bf16.mxu0 0
      %815 = vmatpush1.bf16.msra.mxu0 %v709
      %816 = vmatprep.subr.bf16.mxu0 0
      %817 = vmatpush1.bf16.msra.mxu0 %v708
      %818 = vmatprep.subr.bf16.mxu0 0
      %819 = vmatpush1.bf16.msra.mxu0 %v707
      %820 = vmatprep.subr.bf16.mxu0 0
      %821 = vmatpush2.bf16.msra.mxu0 0
      %822 = vmatprep.subr.bf16.mxu0 0
      %823 = vmatpush2.bf16.msra.mxu0 0
      %824 = vmatprep.subr.bf16.mxu0 0
      %825 = vmatpush2.bf16.msra.mxu0 0
      %826 = vmatprep.subr.bf16.mxu0 0
      %827 = vmatpush2.bf16.msra.mxu0 0
      %828 = vmatprep.subr.bf16.mxu0 0
      %829 = vmatpush2.bf16.msra.mxu0 0
      %830 = vmatprep.subr.bf16.mxu0 0
      %831 = vmatpush2.bf16.msra.mxu0 0
      %832 = vmatprep.subr.bf16.mxu0 0
      %833 = vmatpush2.bf16.msra.mxu0 0
      %834 = vmatprep.subr.bf16.mxu0 0
      %835 = vmatpush2.bf16.msra.mxu0 0
      %836 = vmatprep.mubr.bf16.mxu0 0
      %837 = vmatmul.mubr.bf16.gmra.mxu0 %v573
      %v838 = vpop.f32.mrf.mxu0
      %v839 = vadd.f32 %v774, %v838
      %v840 = vpop.f32.mrf.mxu0
      %v841 = vpop.f32.mrf.mxu0
      %v842 = vadd.f32 %v777, %v841
      %v843 = vpop.f32.mrf.mxu0
      %844 = vmatprep.mubr.bf16.mxu0 0
      %845 = vmatmul.mubr.bf16.gmra.mxu0 %v576
      %v846 = vpop.f32.mrf.mxu0
      %v847 = vadd.f32 %v782, %v846
      %v848 = vpop.f32.mrf.mxu0
      %v849 = vpop.f32.mrf.mxu0
      %v850 = vadd.f32 %v785, %v849
      %v851 = vpop.f32.mrf.mxu0
      %852 = vmatprep.mubr.bf16.mxu0 0
      %853 = vmatmul.mubr.bf16.gmra.mxu0 %v579
      %v854 = vpop.f32.mrf.mxu0
      %v855 = vadd.f32 %v790, %v854
      %v856 = vpop.f32.mrf.mxu0
      %v857 = vpop.f32.mrf.mxu0
      %v858 = vadd.f32 %v793, %v857
      %v859 = vpop.f32.mrf.mxu0
      %860 = vmatprep.mubr.bf16.mxu0 0
      %861 = vmatmul.mubr.bf16.gmra.mxu0 %v582
      %v862 = vpop.f32.mrf.mxu0
      %v863 = vadd.f32 %v798, %v862
      %v864 = vpop.f32.mrf.mxu0
      %v865 = vpop.f32.mrf.mxu0
      %v866 = vadd.f32 %v801, %v865
      %v867 = vpop.f32.mrf.mxu0
      %868 = vdwg.mxu0
      %869 = vst [vmem:[#allocation2] sm:$0xff] %v839
      %870 = vst [vmem:[#allocation2 + $0x8] sm:$0xff] %v842
      %871 = vst [vmem:[#allocation2 + $0x10] sm:$0xff] %v847
      %872 = vst [vmem:[#allocation2 + $0x18] sm:$0xff] %v850
      %873 = vst [vmem:[#allocation2 + $0x20] sm:$0xff] %v855
      %874 = vst [vmem:[#allocation2 + $0x28] sm:$0xff] %v858
      %875 = vst [vmem:[#allocation2 + $0x30] sm:$0xff] %v863
      %876 = vst [vmem:[#allocation2 + $0x38] sm:$0xff] %v866
      %s877 = scalar_lea.vmem %s326, 8
      %v878 = vld [vmem:[%s877] sm:$0xf]
      %v879 = vld [vmem:[%s877 + $0x8] sm:$0xf]
      %v880 = vld [vmem:[%s877 + $0x10] sm:$0xf]
      %v881 = vld [vmem:[%s877 + $0x18] sm:$0xf]
      %v882 = vld [vmem:[%s877 + $0x20] sm:$0xf]
      %v883 = vld [vmem:[%s877 + $0x28] sm:$0xf]
      %v884 = vld [vmem:[%s877 + $0x30] sm:$0xf]
      %v885 = vld [vmem:[%s877 + $0x38] sm:$0xf]
      %v886 = vld [vmem:[%s877 + $0x4] sm:$0x1]
      %v887 = vld [vmem:[%s877 + $0xc] sm:$0x1]
      %v888 = vld [vmem:[%s877 + $0x14] sm:$0x1]
      %v889 = vld [vmem:[%s877 + $0x1c] sm:$0x1]
      %v890 = vld [vmem:[%s877 + $0x24] sm:$0x1]
      %v891 = vld [vmem:[%s877 + $0x2c] sm:$0x1]
      %v892 = vld [vmem:[%s877 + $0x34] sm:$0x1]
      %v893 = vld [vmem:[%s877 + $0x3c] sm:$0x1]
      %v894 = vld [vmem:[%s877] sm:$0xe]
      %v895 = vld [vmem:[%s877 + $0x8] sm:$0xe]
      %v896 = vld [vmem:[%s877 + $0x10] sm:$0xe]
      %v897 = vld [vmem:[%s877 + $0x18] sm:$0xe]
      %v898 = vld [vmem:[%s877 + $0x20] sm:$0xe]
      %v899 = vld [vmem:[%s877 + $0x28] sm:$0xe]
      %v900 = vld [vmem:[%s877 + $0x30] sm:$0xe]
      %v901 = vld [vmem:[%s877 + $0x38] sm:$0xe]
      %v918 = vunpack.c.l.b16 %v878
      %v919 = vunpack.c.l.b16 %v886
      %v920 = vunpack.c.l.b16 %v879
      %v921 = vunpack.c.l.b16 %v887
      %v922 = vunpack.c.l.b16 %v880
      %v923 = vunpack.c.l.b16 %v888
      %v924 = vunpack.c.l.b16 %v881
      %v925 = vunpack.c.l.b16 %v889
      %v926 = vunpack.c.l.b16 %v882
      %v927 = vunpack.c.l.b16 %v890
      %v928 = vunpack.c.l.b16 %v883
      %v929 = vunpack.c.l.b16 %v891
      %v930 = vunpack.c.l.b16 %v884
      %v931 = vunpack.c.l.b16 %v892
      %v932 = vunpack.c.l.b16 %v885
      %v933 = vunpack.c.l.b16 %v893
      %v934 = vpack.c.b16 %v919, %v918
      %v935 = vpack.c.b16 %v921, %v920
      %v936 = vpack.c.b16 %v923, %v922
      %v937 = vpack.c.b16 %v925, %v924
      %v938 = vpack.c.b16 %v927, %v926
      %v939 = vpack.c.b16 %v929, %v928
      %v940 = vpack.c.b16 %v931, %v930
      %v941 = vpack.c.b16 %v933, %v932
      %v943 = vshrl.u32 %v934, 16
      %v945 = vshll.u32 %v934, 16
      %v947 = vrot.slane %v945, 1
      %v948 = vor.u32 %v943, %v947
      %v950 = vshrl.u32 %v935, 16
      %v952 = vshll.u32 %v935, 16
      %v954 = vrot.slane %v952, 1
      %v955 = vor.u32 %v950, %v954
      %v957 = vshrl.u32 %v936, 16
      %v959 = vshll.u32 %v936, 16
      %v961 = vrot.slane %v959, 1
      %v962 = vor.u32 %v957, %v961
      %v964 = vshrl.u32 %v937, 16
      %v966 = vshll.u32 %v937, 16
      %v968 = vrot.slane %v966, 1
      %v969 = vor.u32 %v964, %v968
      %v971 = vshrl.u32 %v938, 16
      %v973 = vshll.u32 %v938, 16
      %v975 = vrot.slane %v973, 1
      %v976 = vor.u32 %v971, %v975
      %v978 = vshrl.u32 %v939, 16
      %v980 = vshll.u32 %v939, 16
      %v982 = vrot.slane %v980, 1
      %v983 = vor.u32 %v978, %v982
      %v985 = vshrl.u32 %v940, 16
      %v987 = vshll.u32 %v940, 16
      %v989 = vrot.slane %v987, 1
      %v990 = vor.u32 %v985, %v989
      %v992 = vshrl.u32 %v941, 16
      %v994 = vshll.u32 %v941, 16
      %v996 = vrot.slane %v994, 1
      %v997 = vor.u32 %v992, %v996
      %v1006 = vunpack.c.l.b16 %v894
      %v1007 = vunpack.c.l.b16 %v895
      %v1008 = vunpack.c.l.b16 %v896
      %v1009 = vunpack.c.l.b16 %v897
      %v1010 = vunpack.c.l.b16 %v898
      %v1011 = vunpack.c.l.b16 %v899
      %v1012 = vunpack.c.l.b16 %v900
      %v1013 = vunpack.c.l.b16 %v901
      %v1014 = vpack.c.b16 %v919, %v1006
      %v1015 = vpack.c.b16 %v921, %v1007
      %v1016 = vpack.c.b16 %v923, %v1008
      %v1017 = vpack.c.b16 %v925, %v1009
      %v1018 = vpack.c.b16 %v927, %v1010
      %v1019 = vpack.c.b16 %v929, %v1011
      %v1020 = vpack.c.b16 %v931, %v1012
      %v1021 = vpack.c.b16 %v933, %v1013
      %v1022 = vrot.slane %v1014, 1
      %v1023 = vrot.slane %v1015, 1
      %v1024 = vrot.slane %v1016, 1
      %v1025 = vrot.slane %v1017, 1
      %v1026 = vrot.slane %v1018, 1
      %v1027 = vrot.slane %v1019, 1
      %v1028 = vrot.slane %v1020, 1
      %v1029 = vrot.slane %v1021, 1
      %v1030 = vunpack.c.l.b16 %v948
      %v1031 = vunpack.c.l.b16 %v1022
      %v1032 = vunpack.c.l.b16 %v955
      %v1033 = vunpack.c.l.b16 %v1023
      %v1034 = vunpack.c.l.b16 %v962
      %v1035 = vunpack.c.l.b16 %v1024
      %v1036 = vunpack.c.l.b16 %v969
      %v1037 = vunpack.c.l.b16 %v1025
      %v1038 = vunpack.c.l.b16 %v976
      %v1039 = vunpack.c.l.b16 %v1026
      %v1040 = vunpack.c.l.b16 %v983
      %v1041 = vunpack.c.l.b16 %v1027
      %v1042 = vunpack.c.l.b16 %v990
      %v1043 = vunpack.c.l.b16 %v1028
      %v1044 = vunpack.c.l.b16 %v997
      %v1045 = vunpack.c.l.b16 %v1029
      %s1046 = scalar_lea.vmem %s330, 192
      %v1047 = vld [vmem:[%s1046] sm:$0xf]
      %v1048 = vld [vmem:[%s1046 + $0x4] sm:$0xf]
      %v1049 = vld [vmem:[%s1046 + $0x8] sm:$0xf]
      %v1050 = vld [vmem:[%s1046 + $0xc] sm:$0xf]
      %v1051 = vld [vmem:[%s1046 + $0x10] sm:$0xf]
      %v1052 = vld [vmem:[%s1046 + $0x14] sm:$0xf]
      %v1053 = vld [vmem:[%s1046 + $0x18] sm:$0xf]
      %v1054 = vld [vmem:[%s1046 + $0x1c] sm:$0xf]
      %v1055 = vld [vmem:[%s1046 + $0x20] sm:$0xf]
      %v1056 = vld [vmem:[%s1046 + $0x24] sm:$0xf]
      %v1057 = vld [vmem:[%s1046 + $0x28] sm:$0xf]
      %v1058 = vld [vmem:[%s1046 + $0x2c] sm:$0xf]
      %v1059 = vld [vmem:[%s1046 + $0x30] sm:$0xf]
      %v1060 = vld [vmem:[%s1046 + $0x34] sm:$0xf]
      %v1061 = vld [vmem:[%s1046 + $0x38] sm:$0xf]
      %v1062 = vld [vmem:[%s1046 + $0x3c] sm:$0xf]
      %v1063 = vld [vmem:[%s1046 + $0x40] sm:$0xf]
      %v1064 = vld [vmem:[%s1046 + $0x44] sm:$0xf]
      %v1065 = vld [vmem:[%s1046 + $0x48] sm:$0xf]
      %v1066 = vld [vmem:[%s1046 + $0x4c] sm:$0xf]
      %v1067 = vld [vmem:[%s1046 + $0x50] sm:$0xf]
      %v1068 = vld [vmem:[%s1046 + $0x54] sm:$0xf]
      %v1069 = vld [vmem:[%s1046 + $0x58] sm:$0xf]
      %v1070 = vld [vmem:[%s1046 + $0x5c] sm:$0xf]
      %v1071 = vld [vmem:[%s1046 + $0x60] sm:$0xf]
      %v1072 = vld [vmem:[%s1046 + $0x64] sm:$0xf]
      %v1073 = vld [vmem:[%s1046 + $0x68] sm:$0xf]
      %v1074 = vld [vmem:[%s1046 + $0x6c] sm:$0xf]
      %v1075 = vld [vmem:[%s1046 + $0x70] sm:$0xf]
      %v1076 = vld [vmem:[%s1046 + $0x74] sm:$0xf]
      %v1077 = vld [vmem:[%s1046 + $0x78] sm:$0xf]
      %v1078 = vld [vmem:[%s1046 + $0x7c] sm:$0xf]
      %v1079 = vld [vmem:[%s1046 + $0x80] sm:$0xf]
      %v1080 = vld [vmem:[%s1046 + $0x84] sm:$0xf]
      %v1081 = vld [vmem:[%s1046 + $0x88] sm:$0xf]
      %v1082 = vld [vmem:[%s1046 + $0x8c] sm:$0xf]
      %v1083 = vld [vmem:[%s1046 + $0x90] sm:$0xf]
      %v1084 = vld [vmem:[%s1046 + $0x94] sm:$0xf]
      %v1085 = vld [vmem:[%s1046 + $0x98] sm:$0xf]
      %v1086 = vld [vmem:[%s1046 + $0x9c] sm:$0xf]
      %v1087 = vld [vmem:[%s1046 + $0xa0] sm:$0xf]
      %v1088 = vld [vmem:[%s1046 + $0xa4] sm:$0xf]
      %v1089 = vld [vmem:[%s1046 + $0xa8] sm:$0xf]
      %v1090 = vld [vmem:[%s1046 + $0xac] sm:$0xf]
      %v1091 = vld [vmem:[%s1046 + $0xb0] sm:$0xf]
      %v1092 = vld [vmem:[%s1046 + $0xb4] sm:$0xf]
      %v1093 = vld [vmem:[%s1046 + $0xb8] sm:$0xf]
      %v1094 = vld [vmem:[%s1046 + $0xbc] sm:$0xf]
      %v1095 = vpack.c.b16 %v920, %v918
      %v1096 = vpack.c.b16 %v1032, %v1030
      %v1097 = vpack.c.b16 %v1033, %v1031
      %v1098 = vpack.c.b16 %v924, %v922
      %v1099 = vpack.c.b16 %v1036, %v1034
      %v1100 = vpack.c.b16 %v1037, %v1035
      %v1101 = vpack.c.b16 %v928, %v926
      %v1102 = vpack.c.b16 %v1040, %v1038
      %v1103 = vpack.c.b16 %v1041, %v1039
      %v1104 = vpack.c.b16 %v932, %v930
      %v1105 = vpack.c.b16 %v1044, %v1042
      %v1106 = vpack.c.b16 %v1045, %v1043
      %v1167 = vunpack.c.l.b16 %v1047
      %v1168 = vunpack.c.l.b16 %v1048
      %v1169 = vunpack.c.l.b16 %v1049
      %v1170 = vunpack.c.l.b16 %v1050
      %v1171 = vunpack.c.l.b16 %v1051
      %v1172 = vunpack.c.l.b16 %v1052
      %v1173 = vunpack.c.l.b16 %v1053
      %v1174 = vunpack.c.l.b16 %v1054
      %v1175 = vunpack.c.l.b16 %v1055
      %v1176 = vunpack.c.l.b16 %v1056
      %v1177 = vunpack.c.l.b16 %v1057
      %v1178 = vunpack.c.l.b16 %v1058
      %v1179 = vunpack.c.l.b16 %v1059
      %v1180 = vunpack.c.l.b16 %v1060
      %v1181 = vunpack.c.l.b16 %v1061
      %v1182 = vunpack.c.l.b16 %v1062
      %v1183 = vunpack.c.l.b16 %v1063
      %v1184 = vunpack.c.l.b16 %v1064
      %v1185 = vunpack.c.l.b16 %v1065
      %v1186 = vunpack.c.l.b16 %v1066
      %v1187 = vunpack.c.l.b16 %v1067
      %v1188 = vunpack.c.l.b16 %v1068
      %v1189 = vunpack.c.l.b16 %v1069
      %v1190 = vunpack.c.l.b16 %v1070
      %v1191 = vunpack.c.l.b16 %v1071
      %v1192 = vunpack.c.l.b16 %v1072
      %v1193 = vunpack.c.l.b16 %v1073
      %v1194 = vunpack.c.l.b16 %v1074
      %v1195 = vunpack.c.l.b16 %v1075
      %v1196 = vunpack.c.l.b16 %v1076
      %v1197 = vunpack.c.l.b16 %v1077
      %v1198 = vunpack.c.l.b16 %v1078
      %v1199 = vunpack.c.l.b16 %v1079
      %v1200 = vunpack.c.l.b16 %v1080
      %v1201 = vunpack.c.l.b16 %v1081
      %v1202 = vunpack.c.l.b16 %v1082
      %v1203 = vunpack.c.l.b16 %v1083
      %v1204 = vunpack.c.l.b16 %v1084
      %v1205 = vunpack.c.l.b16 %v1085
      %v1206 = vunpack.c.l.b16 %v1086
      %v1207 = vunpack.c.l.b16 %v1087
      %v1208 = vunpack.c.l.b16 %v1088
      %v1209 = vunpack.c.l.b16 %v1089
      %v1210 = vunpack.c.l.b16 %v1090
      %v1211 = vunpack.c.l.b16 %v1091
      %v1212 = vunpack.c.l.b16 %v1092
      %v1213 = vunpack.c.l.b16 %v1093
      %v1214 = vunpack.c.l.b16 %v1094
      %v1215 = vpack.c.b16 %v1168, %v1167
      %v1216 = vpack.c.b16 %v1170, %v1169
      %v1217 = vpack.c.b16 %v1172, %v1171
      %v1218 = vpack.c.b16 %v1174, %v1173
      %v1219 = vpack.c.b16 %v1176, %v1175
      %v1220 = vpack.c.b16 %v1178, %v1177
      %v1221 = vpack.c.b16 %v1180, %v1179
      %v1222 = vpack.c.b16 %v1182, %v1181
      %v1223 = vpack.c.b16 %v1184, %v1183
      %v1224 = vpack.c.b16 %v1186, %v1185
      %v1225 = vpack.c.b16 %v1188, %v1187
      %v1226 = vpack.c.b16 %v1190, %v1189
      %v1227 = vpack.c.b16 %v1192, %v1191
      %v1228 = vpack.c.b16 %v1194, %v1193
      %v1229 = vpack.c.b16 %v1196, %v1195
      %v1230 = vpack.c.b16 %v1198, %v1197
      %v1231 = vpack.c.b16 %v1200, %v1199
      %v1232 = vpack.c.b16 %v1202, %v1201
      %v1233 = vpack.c.b16 %v1204, %v1203
      %v1234 = vpack.c.b16 %v1206, %v1205
      %v1235 = vpack.c.b16 %v1208, %v1207
      %v1236 = vpack.c.b16 %v1210, %v1209
      %v1237 = vpack.c.b16 %v1212, %v1211
      %v1238 = vpack.c.b16 %v1214, %v1213
      %1263 = vmatprep.subr.bf16.mxu0 0
      %1264 = vmatpush1.bf16.msra.mxu0 %v1222
      %1265 = vmatprep.subr.bf16.mxu0 0
      %1266 = vmatpush1.bf16.msra.mxu0 %v1221
      %1267 = vmatprep.subr.bf16.mxu0 0
      %1268 = vmatpush1.bf16.msra.mxu0 %v1220
      %1269 = vmatprep.subr.bf16.mxu0 0
      %1270 = vmatpush1.bf16.msra.mxu0 %v1219
      %1271 = vmatprep.subr.bf16.mxu0 0
      %1272 = vmatpush1.bf16.msra.mxu0 %v1218
      %1273 = vmatprep.subr.bf16.mxu0 0
      %1274 = vmatpush1.bf16.msra.mxu0 %v1217
      %1275 = vmatprep.subr.bf16.mxu0 0
      %1276 = vmatpush1.bf16.msra.mxu0 %v1216
      %1277 = vmatprep.subr.bf16.mxu0 0
      %1278 = vmatpush1.bf16.msra.mxu0 %v1215
      %1279 = vmatprep.subr.bf16.mxu0 0
      %1280 = vmatpush2.bf16.msra.mxu0 %v1230
      %1281 = vmatprep.subr.bf16.mxu0 0
      %1282 = vmatpush2.bf16.msra.mxu0 %v1229
      %1283 = vmatprep.subr.bf16.mxu0 0
      %1284 = vmatpush2.bf16.msra.mxu0 %v1228
      %1285 = vmatprep.subr.bf16.mxu0 0
      %1286 = vmatpush2.bf16.msra.mxu0 %v1227
      %1287 = vmatprep.subr.bf16.mxu0 0
      %1288 = vmatpush2.bf16.msra.mxu0 %v1226
      %1289 = vmatprep.subr.bf16.mxu0 0
      %1290 = vmatpush2.bf16.msra.mxu0 %v1225
      %1291 = vmatprep.subr.bf16.mxu0 0
      %1292 = vmatpush2.bf16.msra.mxu0 %v1224
      %1293 = vmatprep.subr.bf16.mxu0 0
      %1294 = vmatpush2.bf16.msra.mxu0 %v1223
      %1295 = vmatprep.mubr.bf16.mxu0 %v1096
      %1296 = vmatmul.mubr.bf16.gmra.mxu0 %v1095
      %v1297 = vpop.f32.mrf.mxu0
      %v1298 = vadd.f32 0.0, %v1297
      %v1299 = vpop.f32.mrf.mxu0
      %v1300 = vpop.f32.mrf.mxu0
      %v1301 = vadd.f32 0.0, %v1300
      %v1302 = vpop.f32.mrf.mxu0
      %1303 = vmatprep.mubr.bf16.mxu0 %v1099
      %1304 = vmatmul.mubr.bf16.gmra.mxu0 %v1098
      %v1305 = vpop.f32.mrf.mxu0
      %v1306 = vadd.f32 0.0, %v1305
      %v1307 = vpop.f32.mrf.mxu0
      %v1308 = vpop.f32.mrf.mxu0
      %v1309 = vadd.f32 0.0, %v1308
      %v1310 = vpop.f32.mrf.mxu0
      %1311 = vmatprep.mubr.bf16.mxu0 %v1102
      %1312 = vmatmul.mubr.bf16.gmra.mxu0 %v1101
      %v1313 = vpop.f32.mrf.mxu0
      %v1314 = vadd.f32 0.0, %v1313
      %v1315 = vpop.f32.mrf.mxu0
      %v1316 = vpop.f32.mrf.mxu0
      %v1317 = vadd.f32 0.0, %v1316
      %v1318 = vpop.f32.mrf.mxu0
      %1319 = vmatprep.mubr.bf16.mxu0 %v1105
      %1320 = vmatmul.mubr.bf16.gmra.mxu0 %v1104
      %v1321 = vpop.f32.mrf.mxu0
      %v1322 = vadd.f32 0.0, %v1321
      %v1323 = vpop.f32.mrf.mxu0
      %v1324 = vpop.f32.mrf.mxu0
      %v1325 = vadd.f32 0.0, %v1324
      %v1326 = vpop.f32.mrf.mxu0
      %1327 = vdwg.mxu0
      %1328 = vmatprep.subr.bf16.mxu0 0
      %1329 = vmatpush1.bf16.msra.mxu0 %v1238
      %1330 = vmatprep.subr.bf16.mxu0 0
      %1331 = vmatpush1.bf16.msra.mxu0 %v1237
      %1332 = vmatprep.subr.bf16.mxu0 0
      %1333 = vmatpush1.bf16.msra.mxu0 %v1236
      %1334 = vmatprep.subr.bf16.mxu0 0
      %1335 = vmatpush1.bf16.msra.mxu0 %v1235
      %1336 = vmatprep.subr.bf16.mxu0 0
      %1337 = vmatpush1.bf16.msra.mxu0 %v1234
      %1338 = vmatprep.subr.bf16.mxu0 0
      %1339 = vmatpush1.bf16.msra.mxu0 %v1233
      %1340 = vmatprep.subr.bf16.mxu0 0
      %1341 = vmatpush1.bf16.msra.mxu0 %v1232
      %1342 = vmatprep.subr.bf16.mxu0 0
      %1343 = vmatpush1.bf16.msra.mxu0 %v1231
      %1344 = vmatprep.subr.bf16.mxu0 0
      %1345 = vmatpush2.bf16.msra.mxu0 0
      %1346 = vmatprep.subr.bf16.mxu0 0
      %1347 = vmatpush2.bf16.msra.mxu0 0
      %1348 = vmatprep.subr.bf16.mxu0 0
      %1349 = vmatpush2.bf16.msra.mxu0 0
      %1350 = vmatprep.subr.bf16.mxu0 0
      %1351 = vmatpush2.bf16.msra.mxu0 0
      %1352 = vmatprep.subr.bf16.mxu0 0
      %1353 = vmatpush2.bf16.msra.mxu0 0
      %1354 = vmatprep.subr.bf16.mxu0 0
      %1355 = vmatpush2.bf16.msra.mxu0 0
      %1356 = vmatprep.subr.bf16.mxu0 0
      %1357 = vmatpush2.bf16.msra.mxu0 0
      %1358 = vmatprep.subr.bf16.mxu0 0
      %1359 = vmatpush2.bf16.msra.mxu0 0
      %1360 = vmatprep.mubr.bf16.mxu0 0
      %1361 = vmatmul.mubr.bf16.gmra.mxu0 %v1097
      %v1362 = vpop.f32.mrf.mxu0
      %v1363 = vadd.f32 %v1298, %v1362
      %v1364 = vpop.f32.mrf.mxu0
      %v1365 = vpop.f32.mrf.mxu0
      %v1366 = vadd.f32 %v1301, %v1365
      %v1367 = vpop.f32.mrf.mxu0
      %1368 = vmatprep.mubr.bf16.mxu0 0
      %1369 = vmatmul.mubr.bf16.gmra.mxu0 %v1100
      %v1370 = vpop.f32.mrf.mxu0
      %v1371 = vadd.f32 %v1306, %v1370
      %v1372 = vpop.f32.mrf.mxu0
      %v1373 = vpop.f32.mrf.mxu0
      %v1374 = vadd.f32 %v1309, %v1373
      %v1375 = vpop.f32.mrf.mxu0
      %1376 = vmatprep.mubr.bf16.mxu0 0
      %1377 = vmatmul.mubr.bf16.gmra.mxu0 %v1103
      %v1378 = vpop.f32.mrf.mxu0
      %v1379 = vadd.f32 %v1314, %v1378
      %v1380 = vpop.f32.mrf.mxu0
      %v1381 = vpop.f32.mrf.mxu0
      %v1382 = vadd.f32 %v1317, %v1381
      %v1383 = vpop.f32.mrf.mxu0
      %1384 = vmatprep.mubr.bf16.mxu0 0
      %1385 = vmatmul.mubr.bf16.gmra.mxu0 %v1106
      %v1386 = vpop.f32.mrf.mxu0
      %v1387 = vadd.f32 %v1322, %v1386
      %v1388 = vpop.f32.mrf.mxu0
      %v1389 = vpop.f32.mrf.mxu0
      %v1390 = vadd.f32 %v1325, %v1389
      %v1391 = vpop.f32.mrf.mxu0
      %1392 = vdwg.mxu0
      %v1393 = vld [vmem:[#allocation2] sm:$0xff]
      %v1394 = vld [vmem:[#allocation2 + $0x8] sm:$0xff]
      %v1395 = vld [vmem:[#allocation2 + $0x10] sm:$0xff]
      %v1396 = vld [vmem:[#allocation2 + $0x18] sm:$0xff]
      %v1397 = vld [vmem:[#allocation2 + $0x20] sm:$0xff]
      %v1398 = vld [vmem:[#allocation2 + $0x28] sm:$0xff]
      %v1399 = vld [vmem:[#allocation2 + $0x30] sm:$0xff]
      %v1400 = vld [vmem:[#allocation2 + $0x38] sm:$0xff]
      %v1401 = vadd.f32 %v1393, %v1363
      %v1402 = vadd.f32 %v1394, %v1366
      %v1403 = vadd.f32 %v1395, %v1371
      %v1404 = vadd.f32 %v1396, %v1374
      %v1405 = vadd.f32 %v1397, %v1379
      %v1406 = vadd.f32 %v1398, %v1382
      %v1407 = vadd.f32 %v1399, %v1387
      %v1408 = vadd.f32 %v1400, %v1390
      %1409 = vst [vmem:[#allocation2] sm:$0xff] %v1401
      %1410 = vst [vmem:[#allocation2 + $0x8] sm:$0xff] %v1402
      %1411 = vst [vmem:[#allocation2 + $0x10] sm:$0xff] %v1403
      %1412 = vst [vmem:[#allocation2 + $0x18] sm:$0xff] %v1404
      %1413 = vst [vmem:[#allocation2 + $0x20] sm:$0xff] %v1405
      %1414 = vst [vmem:[#allocation2 + $0x28] sm:$0xff] %v1406
      %1415 = vst [vmem:[#allocation2 + $0x30] sm:$0xff] %v1407
      %1416 = vst [vmem:[#allocation2 + $0x38] sm:$0xff] %v1408
      %s1417 = scalar_lea.vmem %s326, 16
      %v1418 = vld [vmem:[%s1417] sm:$0xf]
      %v1419 = vld [vmem:[%s1417 + $0x8] sm:$0xf]
      %v1420 = vld [vmem:[%s1417 + $0x10] sm:$0xf]
      %v1421 = vld [vmem:[%s1417 + $0x18] sm:$0xf]
      %v1422 = vld [vmem:[%s1417 + $0x20] sm:$0xf]
      %v1423 = vld [vmem:[%s1417 + $0x28] sm:$0xf]
      %v1424 = vld [vmem:[%s1417 + $0x30] sm:$0xf]
      %v1425 = vld [vmem:[%s1417 + $0x38] sm:$0xf]
      %v1426 = vld [vmem:[%s1417 + $0x4] sm:$0x1]
      %v1427 = vld [vmem:[%s1417 + $0xc] sm:$0x1]
      %v1428 = vld [vmem:[%s1417 + $0x14] sm:$0x1]
      %v1429 = vld [vmem:[%s1417 + $0x1c] sm:$0x1]
      %v1430 = vld [vmem:[%s1417 + $0x24] sm:$0x1]
      %v1431 = vld [vmem:[%s1417 + $0x2c] sm:$0x1]
      %v1432 = vld [vmem:[%s1417 + $0x34] sm:$0x1]
      %v1433 = vld [vmem:[%s1417 + $0x3c] sm:$0x1]
      %v1434 = vld [vmem:[%s1417] sm:$0xe]
      %v1435 = vld [vmem:[%s1417 + $0x8] sm:$0xe]
      %v1436 = vld [vmem:[%s1417 + $0x10] sm:$0xe]
      %v1437 = vld [vmem:[%s1417 + $0x18] sm:$0xe]
      %v1438 = vld [vmem:[%s1417 + $0x20] sm:$0xe]
      %v1439 = vld [vmem:[%s1417 + $0x28] sm:$0xe]
      %v1440 = vld [vmem:[%s1417 + $0x30] sm:$0xe]
      %v1441 = vld [vmem:[%s1417 + $0x38] sm:$0xe]
      %v1458 = vunpack.c.l.b16 %v1418
      %v1459 = vunpack.c.l.b16 %v1426
      %v1460 = vunpack.c.l.b16 %v1419
      %v1461 = vunpack.c.l.b16 %v1427
      %v1462 = vunpack.c.l.b16 %v1420
      %v1463 = vunpack.c.l.b16 %v1428
      %v1464 = vunpack.c.l.b16 %v1421
      %v1465 = vunpack.c.l.b16 %v1429
      %v1466 = vunpack.c.l.b16 %v1422
      %v1467 = vunpack.c.l.b16 %v1430
      %v1468 = vunpack.c.l.b16 %v1423
      %v1469 = vunpack.c.l.b16 %v1431
      %v1470 = vunpack.c.l.b16 %v1424
      %v1471 = vunpack.c.l.b16 %v1432
      %v1472 = vunpack.c.l.b16 %v1425
      %v1473 = vunpack.c.l.b16 %v1433
      %v1474 = vpack.c.b16 %v1459, %v1458
      %v1475 = vpack.c.b16 %v1461, %v1460
      %v1476 = vpack.c.b16 %v1463, %v1462
      %v1477 = vpack.c.b16 %v1465, %v1464
      %v1478 = vpack.c.b16 %v1467, %v1466
      %v1479 = vpack.c.b16 %v1469, %v1468
      %v1480 = vpack.c.b16 %v1471, %v1470
      %v1481 = vpack.c.b16 %v1473, %v1472
      %v1483 = vshrl.u32 %v1474, 16
      %v1485 = vshll.u32 %v1474, 16
      %v1487 = vrot.slane %v1485, 1
      %v1488 = vor.u32 %v1483, %v1487
      %v1490 = vshrl.u32 %v1475, 16
      %v1492 = vshll.u32 %v1475, 16
      %v1494 = vrot.slane %v1492, 1
      %v1495 = vor.u32 %v1490, %v1494
      %v1497 = vshrl.u32 %v1476, 16
      %v1499 = vshll.u32 %v1476, 16
      %v1501 = vrot.slane %v1499, 1
      %v1502 = vor.u32 %v1497, %v1501
      %v1504 = vshrl.u32 %v1477, 16
      %v1506 = vshll.u32 %v1477, 16
      %v1508 = vrot.slane %v1506, 1
      %v1509 = vor.u32 %v1504, %v1508
      %v1511 = vshrl.u32 %v1478, 16
      %v1513 = vshll.u32 %v1478, 16
      %v1515 = vrot.slane %v1513, 1
      %v1516 = vor.u32 %v1511, %v1515
      %v1518 = vshrl.u32 %v1479, 16
      %v1520 = vshll.u32 %v1479, 16
      %v1522 = vrot.slane %v1520, 1
      %v1523 = vor.u32 %v1518, %v1522
      %v1525 = vshrl.u32 %v1480, 16
      %v1527 = vshll.u32 %v1480, 16
      %v1529 = vrot.slane %v1527, 1
      %v1530 = vor.u32 %v1525, %v1529
      %v1532 = vshrl.u32 %v1481, 16
      %v1534 = vshll.u32 %v1481, 16
      %v1536 = vrot.slane %v1534, 1
      %v1537 = vor.u32 %v1532, %v1536
      %v1546 = vunpack.c.l.b16 %v1434
      %v1547 = vunpack.c.l.b16 %v1435
      %v1548 = vunpack.c.l.b16 %v1436
      %v1549 = vunpack.c.l.b16 %v1437
      %v1550 = vunpack.c.l.b16 %v1438
      %v1551 = vunpack.c.l.b16 %v1439
      %v1552 = vunpack.c.l.b16 %v1440
      %v1553 = vunpack.c.l.b16 %v1441
      %v1554 = vpack.c.b16 %v1459, %v1546
      %v1555 = vpack.c.b16 %v1461, %v1547
      %v1556 = vpack.c.b16 %v1463, %v1548
      %v1557 = vpack.c.b16 %v1465, %v1549
      %v1558 = vpack.c.b16 %v1467, %v1550
      %v1559 = vpack.c.b16 %v1469, %v1551
      %v1560 = vpack.c.b16 %v1471, %v1552
      %v1561 = vpack.c.b16 %v1473, %v1553
      %v1562 = vrot.slane %v1554, 1
      %v1563 = vrot.slane %v1555, 1
      %v1564 = vrot.slane %v1556, 1
      %v1565 = vrot.slane %v1557, 1
      %v1566 = vrot.slane %v1558, 1
      %v1567 = vrot.slane %v1559, 1
      %v1568 = vrot.slane %v1560, 1
      %v1569 = vrot.slane %v1561, 1
      %v1570 = vunpack.c.l.b16 %v1488
      %v1571 = vunpack.c.l.b16 %v1562
      %v1572 = vunpack.c.l.b16 %v1495
      %v1573 = vunpack.c.l.b16 %v1563
      %v1574 = vunpack.c.l.b16 %v1502
      %v1575 = vunpack.c.l.b16 %v1564
      %v1576 = vunpack.c.l.b16 %v1509
      %v1577 = vunpack.c.l.b16 %v1565
      %v1578 = vunpack.c.l.b16 %v1516
      %v1579 = vunpack.c.l.b16 %v1566
      %v1580 = vunpack.c.l.b16 %v1523
      %v1581 = vunpack.c.l.b16 %v1567
      %v1582 = vunpack.c.l.b16 %v1530
      %v1583 = vunpack.c.l.b16 %v1568
      %v1584 = vunpack.c.l.b16 %v1537
      %v1585 = vunpack.c.l.b16 %v1569
      %s1586 = scalar_lea.vmem %s330, 384
      %v1587 = vld [vmem:[%s1586] sm:$0xf]
      %v1588 = vld [vmem:[%s1586 + $0x4] sm:$0xf]
      %v1589 = vld [vmem:[%s1586 + $0x8] sm:$0xf]
      %v1590 = vld [vmem:[%s1586 + $0xc] sm:$0xf]
      %v1591 = vld [vmem:[%s1586 + $0x10] sm:$0xf]
      %v1592 = vld [vmem:[%s1586 + $0x14] sm:$0xf]
      %v1593 = vld [vmem:[%s1586 + $0x18] sm:$0xf]
      %v1594 = vld [vmem:[%s1586 + $0x1c] sm:$0xf]
      %v1595 = vld [vmem:[%s1586 + $0x20] sm:$0xf]
      %v1596 = vld [vmem:[%s1586 + $0x24] sm:$0xf]
      %v1597 = vld [vmem:[%s1586 + $0x28] sm:$0xf]
      %v1598 = vld [vmem:[%s1586 + $0x2c] sm:$0xf]
      %v1599 = vld [vmem:[%s1586 + $0x30] sm:$0xf]
      %v1600 = vld [vmem:[%s1586 + $0x34] sm:$0xf]
      %v1601 = vld [vmem:[%s1586 + $0x38] sm:$0xf]
      %v1602 = vld [vmem:[%s1586 + $0x3c] sm:$0xf]
      %v1603 = vld [vmem:[%s1586 + $0x40] sm:$0xf]
      %v1604 = vld [vmem:[%s1586 + $0x44] sm:$0xf]
      %v1605 = vld [vmem:[%s1586 + $0x48] sm:$0xf]
      %v1606 = vld [vmem:[%s1586 + $0x4c] sm:$0xf]
      %v1607 = vld [vmem:[%s1586 + $0x50] sm:$0xf]
      %v1608 = vld [vmem:[%s1586 + $0x54] sm:$0xf]
      %v1609 = vld [vmem:[%s1586 + $0x58] sm:$0xf]
      %v1610 = vld [vmem:[%s1586 + $0x5c] sm:$0xf]
      %v1611 = vld [vmem:[%s1586 + $0x60] sm:$0xf]
      %v1612 = vld [vmem:[%s1586 + $0x64] sm:$0xf]
      %v1613 = vld [vmem:[%s1586 + $0x68] sm:$0xf]
      %v1614 = vld [vmem:[%s1586 + $0x6c] sm:$0xf]
      %v1615 = vld [vmem:[%s1586 + $0x70] sm:$0xf]
      %v1616 = vld [vmem:[%s1586 + $0x74] sm:$0xf]
      %v1617 = vld [vmem:[%s1586 + $0x78] sm:$0xf]
      %v1618 = vld [vmem:[%s1586 + $0x7c] sm:$0xf]
      %v1619 = vld [vmem:[%s1586 + $0x80] sm:$0xf]
      %v1620 = vld [vmem:[%s1586 + $0x84] sm:$0xf]
      %v1621 = vld [vmem:[%s1586 + $0x88] sm:$0xf]
      %v1622 = vld [vmem:[%s1586 + $0x8c] sm:$0xf]
      %v1623 = vld [vmem:[%s1586 + $0x90] sm:$0xf]
      %v1624 = vld [vmem:[%s1586 + $0x94] sm:$0xf]
      %v1625 = vld [vmem:[%s1586 + $0x98] sm:$0xf]
      %v1626 = vld [vmem:[%s1586 + $0x9c] sm:$0xf]
      %v1627 = vld [vmem:[%s1586 + $0xa0] sm:$0xf]
      %v1628 = vld [vmem:[%s1586 + $0xa4] sm:$0xf]
      %v1629 = vld [vmem:[%s1586 + $0xa8] sm:$0xf]
      %v1630 = vld [vmem:[%s1586 + $0xac] sm:$0xf]
      %v1631 = vld [vmem:[%s1586 + $0xb0] sm:$0xf]
      %v1632 = vld [vmem:[%s1586 + $0xb4] sm:$0xf]
      %v1633 = vld [vmem:[%s1586 + $0xb8] sm:$0xf]
      %v1634 = vld [vmem:[%s1586 + $0xbc] sm:$0xf]
      %v1635 = vpack.c.b16 %v1460, %v1458
      %v1636 = vpack.c.b16 %v1572, %v1570
      %v1637 = vpack.c.b16 %v1573, %v1571
      %v1638 = vpack.c.b16 %v1464, %v1462
      %v1639 = vpack.c.b16 %v1576, %v1574
      %v1640 = vpack.c.b16 %v1577, %v1575
      %v1641 = vpack.c.b16 %v1468, %v1466
      %v1642 = vpack.c.b16 %v1580, %v1578
      %v1643 = vpack.c.b16 %v1581, %v1579
      %v1644 = vpack.c.b16 %v1472, %v1470
      %v1645 = vpack.c.b16 %v1584, %v1582
      %v1646 = vpack.c.b16 %v1585, %v1583
      %v1707 = vunpack.c.l.b16 %v1587
      %v1708 = vunpack.c.l.b16 %v1588
      %v1709 = vunpack.c.l.b16 %v1589
      %v1710 = vunpack.c.l.b16 %v1590
      %v1711 = vunpack.c.l.b16 %v1591
      %v1712 = vunpack.c.l.b16 %v1592
      %v1713 = vunpack.c.l.b16 %v1593
      %v1714 = vunpack.c.l.b16 %v1594
      %v1715 = vunpack.c.l.b16 %v1595
      %v1716 = vunpack.c.l.b16 %v1596
      %v1717 = vunpack.c.l.b16 %v1597
      %v1718 = vunpack.c.l.b16 %v1598
      %v1719 = vunpack.c.l.b16 %v1599
      %v1720 = vunpack.c.l.b16 %v1600
      %v1721 = vunpack.c.l.b16 %v1601
      %v1722 = vunpack.c.l.b16 %v1602
      %v1723 = vunpack.c.l.b16 %v1603
      %v1724 = vunpack.c.l.b16 %v1604
      %v1725 = vunpack.c.l.b16 %v1605
      %v1726 = vunpack.c.l.b16 %v1606
      %v1727 = vunpack.c.l.b16 %v1607
      %v1728 = vunpack.c.l.b16 %v1608
      %v1729 = vunpack.c.l.b16 %v1609
      %v1730 = vunpack.c.l.b16 %v1610
      %v1731 = vunpack.c.l.b16 %v1611
      %v1732 = vunpack.c.l.b16 %v1612
      %v1733 = vunpack.c.l.b16 %v1613
      %v1734 = vunpack.c.l.b16 %v1614
      %v1735 = vunpack.c.l.b16 %v1615
      %v1736 = vunpack.c.l.b16 %v1616
      %v1737 = vunpack.c.l.b16 %v1617
      %v1738 = vunpack.c.l.b16 %v1618
      %v1739 = vunpack.c.l.b16 %v1619
      %v1740 = vunpack.c.l.b16 %v1620
      %v1741 = vunpack.c.l.b16 %v1621
      %v1742 = vunpack.c.l.b16 %v1622
      %v1743 = vunpack.c.l.b16 %v1623
      %v1744 = vunpack.c.l.b16 %v1624
      %v1745 = vunpack.c.l.b16 %v1625
      %v1746 = vunpack.c.l.b16 %v1626
      %v1747 = vunpack.c.l.b16 %v1627
      %v1748 = vunpack.c.l.b16 %v1628
      %v1749 = vunpack.c.l.b16 %v1629
      %v1750 = vunpack.c.l.b16 %v1630
      %v1751 = vunpack.c.l.b16 %v1631
      %v1752 = vunpack.c.l.b16 %v1632
      %v1753 = vunpack.c.l.b16 %v1633
      %v1754 = vunpack.c.l.b16 %v1634
      %v1755 = vpack.c.b16 %v1708, %v1707
      %v1756 = vpack.c.b16 %v1710, %v1709
      %v1757 = vpack.c.b16 %v1712, %v1711
      %v1758 = vpack.c.b16 %v1714, %v1713
      %v1759 = vpack.c.b16 %v1716, %v1715
      %v1760 = vpack.c.b16 %v1718, %v1717
      %v1761 = vpack.c.b16 %v1720, %v1719
      %v1762 = vpack.c.b16 %v1722, %v1721
      %v1763 = vpack.c.b16 %v1724, %v1723
      %v1764 = vpack.c.b16 %v1726, %v1725
      %v1765 = vpack.c.b16 %v1728, %v1727
      %v1766 = vpack.c.b16 %v1730, %v1729
      %v1767 = vpack.c.b16 %v1732, %v1731
      %v1768 = vpack.c.b16 %v1734, %v1733
      %v1769 = vpack.c.b16 %v1736, %v1735
      %v1770 = vpack.c.b16 %v1738, %v1737
      %v1771 = vpack.c.b16 %v1740, %v1739
      %v1772 = vpack.c.b16 %v1742, %v1741
      %v1773 = vpack.c.b16 %v1744, %v1743
      %v1774 = vpack.c.b16 %v1746, %v1745
      %v1775 = vpack.c.b16 %v1748, %v1747
      %v1776 = vpack.c.b16 %v1750, %v1749
      %v1777 = vpack.c.b16 %v1752, %v1751
      %v1778 = vpack.c.b16 %v1754, %v1753
      %1803 = vmatprep.subr.bf16.mxu0 0
      %1804 = vmatpush1.bf16.msra.mxu0 %v1762
      %1805 = vmatprep.subr.bf16.mxu0 0
      %1806 = vmatpush1.bf16.msra.mxu0 %v1761
      %1807 = vmatprep.subr.bf16.mxu0 0
      %1808 = vmatpush1.bf16.msra.mxu0 %v1760
      %1809 = vmatprep.subr.bf16.mxu0 0
      %1810 = vmatpush1.bf16.msra.mxu0 %v1759
      %1811 = vmatprep.subr.bf16.mxu0 0
      %1812 = vmatpush1.bf16.msra.mxu0 %v1758
      %1813 = vmatprep.subr.bf16.mxu0 0
      %1814 = vmatpush1.bf16.msra.mxu0 %v1757
      %1815 = vmatprep.subr.bf16.mxu0 0
      %1816 = vmatpush1.bf16.msra.mxu0 %v1756
      %1817 = vmatprep.subr.bf16.mxu0 0
      %1818 = vmatpush1.bf16.msra.mxu0 %v1755
      %1819 = vmatprep.subr.bf16.mxu0 0
      %1820 = vmatpush2.bf16.msra.mxu0 %v1770
      %1821 = vmatprep.subr.bf16.mxu0 0
      %1822 = vmatpush2.bf16.msra.mxu0 %v1769
      %1823 = vmatprep.subr.bf16.mxu0 0
      %1824 = vmatpush2.bf16.msra.mxu0 %v1768
      %1825 = vmatprep.subr.bf16.mxu0 0
      %1826 = vmatpush2.bf16.msra.mxu0 %v1767
      %1827 = vmatprep.subr.bf16.mxu0 0
      %1828 = vmatpush2.bf16.msra.mxu0 %v1766
      %1829 = vmatprep.subr.bf16.mxu0 0
      %1830 = vmatpush2.bf16.msra.mxu0 %v1765
      %1831 = vmatprep.subr.bf16.mxu0 0
      %1832 = vmatpush2.bf16.msra.mxu0 %v1764
      %1833 = vmatprep.subr.bf16.mxu0 0
      %1834 = vmatpush2.bf16.msra.mxu0 %v1763
      %1835 = vmatprep.mubr.bf16.mxu0 %v1636
      %1836 = vmatmul.mubr.bf16.gmra.mxu0 %v1635
      %v1837 = vpop.f32.mrf.mxu0
      %v1838 = vadd.f32 0.0, %v1837
      %v1839 = vpop.f32.mrf.mxu0
      %v1840 = vpop.f32.mrf.mxu0
      %v1841 = vadd.f32 0.0, %v1840
      %v1842 = vpop.f32.mrf.mxu0
      %1843 = vmatprep.mubr.bf16.mxu0 %v1639
      %1844 = vmatmul.mubr.bf16.gmra.mxu0 %v1638
      %v1845 = vpop.f32.mrf.mxu0
      %v1846 = vadd.f32 0.0, %v1845
      %v1847 = vpop.f32.mrf.mxu0
      %v1848 = vpop.f32.mrf.mxu0
      %v1849 = vadd.f32 0.0, %v1848
      %v1850 = vpop.f32.mrf.mxu0
      %1851 = vmatprep.mubr.bf16.mxu0 %v1642
      %1852 = vmatmul.mubr.bf16.gmra.mxu0 %v1641
      %v1853 = vpop.f32.mrf.mxu0
      %v1854 = vadd.f32 0.0, %v1853
      %v1855 = vpop.f32.mrf.mxu0
      %v1856 = vpop.f32.mrf.mxu0
      %v1857 = vadd.f32 0.0, %v1856
      %v1858 = vpop.f32.mrf.mxu0
      %1859 = vmatprep.mubr.bf16.mxu0 %v1645
      %1860 = vmatmul.mubr.bf16.gmra.mxu0 %v1644
      %v1861 = vpop.f32.mrf.mxu0
      %v1862 = vadd.f32 0.0, %v1861
      %v1863 = vpop.f32.mrf.mxu0
      %v1864 = vpop.f32.mrf.mxu0
      %v1865 = vadd.f32 0.0, %v1864
      %v1866 = vpop.f32.mrf.mxu0
      %1867 = vdwg.mxu0
      %1868 = vmatprep.subr.bf16.mxu0 0
      %1869 = vmatpush1.bf16.msra.mxu0 %v1778
      %1870 = vmatprep.subr.bf16.mxu0 0
      %1871 = vmatpush1.bf16.msra.mxu0 %v1777
      %1872 = vmatprep.subr.bf16.mxu0 0
      %1873 = vmatpush1.bf16.msra.mxu0 %v1776
      %1874 = vmatprep.subr.bf16.mxu0 0
      %1875 = vmatpush1.bf16.msra.mxu0 %v1775
      %1876 = vmatprep.subr.bf16.mxu0 0
      %1877 = vmatpush1.bf16.msra.mxu0 %v1774
      %1878 = vmatprep.subr.bf16.mxu0 0
      %1879 = vmatpush1.bf16.msra.mxu0 %v1773
      %1880 = vmatprep.subr.bf16.mxu0 0
      %1881 = vmatpush1.bf16.msra.mxu0 %v1772
      %1882 = vmatprep.subr.bf16.mxu0 0
      %1883 = vmatpush1.bf16.msra.mxu0 %v1771
      %1884 = vmatprep.subr.bf16.mxu0 0
      %1885 = vmatpush2.bf16.msra.mxu0 0
      %1886 = vmatprep.subr.bf16.mxu0 0
      %1887 = vmatpush2.bf16.msra.mxu0 0
      %1888 = vmatprep.subr.bf16.mxu0 0
      %1889 = vmatpush2.bf16.msra.mxu0 0
      %1890 = vmatprep.subr.bf16.mxu0 0
      %1891 = vmatpush2.bf16.msra.mxu0 0
      %1892 = vmatprep.subr.bf16.mxu0 0
      %1893 = vmatpush2.bf16.msra.mxu0 0
      %1894 = vmatprep.subr.bf16.mxu0 0
      %1895 = vmatpush2.bf16.msra.mxu0 0
      %1896 = vmatprep.subr.bf16.mxu0 0
      %1897 = vmatpush2.bf16.msra.mxu0 0
      %1898 = vmatprep.subr.bf16.mxu0 0
      %1899 = vmatpush2.bf16.msra.mxu0 0
      %1900 = vmatprep.mubr.bf16.mxu0 0
      %1901 = vmatmul.mubr.bf16.gmra.mxu0 %v1637
      %v1902 = vpop.f32.mrf.mxu0
      %v1903 = vadd.f32 %v1838, %v1902
      %v1904 = vpop.f32.mrf.mxu0
      %v1905 = vpop.f32.mrf.mxu0
      %v1906 = vadd.f32 %v1841, %v1905
      %v1907 = vpop.f32.mrf.mxu0
      %1908 = vmatprep.mubr.bf16.mxu0 0
      %1909 = vmatmul.mubr.bf16.gmra.mxu0 %v1640
      %v1910 = vpop.f32.mrf.mxu0
      %v1911 = vadd.f32 %v1846, %v1910
      %v1912 = vpop.f32.mrf.mxu0
      %v1913 = vpop.f32.mrf.mxu0
      %v1914 = vadd.f32 %v1849, %v1913
      %v1915 = vpop.f32.mrf.mxu0
      %1916 = vmatprep.mubr.bf16.mxu0 0
      %1917 = vmatmul.mubr.bf16.gmra.mxu0 %v1643
      %v1918 = vpop.f32.mrf.mxu0
      %v1919 = vadd.f32 %v1854, %v1918
      %v1920 = vpop.f32.mrf.mxu0
      %v1921 = vpop.f32.mrf.mxu0
      %v1922 = vadd.f32 %v1857, %v1921
      %v1923 = vpop.f32.mrf.mxu0
      %1924 = vmatprep.mubr.bf16.mxu0 0
      %1925 = vmatmul.mubr.bf16.gmra.mxu0 %v1646
      %v1926 = vpop.f32.mrf.mxu0
      %v1927 = vadd.f32 %v1862, %v1926
      %v1928 = vpop.f32.mrf.mxu0
      %v1929 = vpop.f32.mrf.mxu0
      %v1930 = vadd.f32 %v1865, %v1929
      %v1931 = vpop.f32.mrf.mxu0
      %1932 = vdwg.mxu0
      %v1933 = vld [vmem:[#allocation2] sm:$0xff]
      %v1934 = vld [vmem:[#allocation2 + $0x8] sm:$0xff]
      %v1935 = vld [vmem:[#allocation2 + $0x10] sm:$0xff]
      %v1936 = vld [vmem:[#allocation2 + $0x18] sm:$0xff]
      %v1937 = vld [vmem:[#allocation2 + $0x20] sm:$0xff]
      %v1938 = vld [vmem:[#allocation2 + $0x28] sm:$0xff]
      %v1939 = vld [vmem:[#allocation2 + $0x30] sm:$0xff]
      %v1940 = vld [vmem:[#allocation2 + $0x38] sm:$0xff]
      %v1941 = vadd.f32 %v1933, %v1903
      %v1942 = vadd.f32 %v1934, %v1906
      %v1943 = vadd.f32 %v1935, %v1911
      %v1944 = vadd.f32 %v1936, %v1914
      %v1945 = vadd.f32 %v1937, %v1919
      %v1946 = vadd.f32 %v1938, %v1922
      %v1947 = vadd.f32 %v1939, %v1927
      %v1948 = vadd.f32 %v1940, %v1930
      %1949 = vst [vmem:[#allocation2] sm:$0xff] %v1941
      %1950 = vst [vmem:[#allocation2 + $0x8] sm:$0xff] %v1942
      %1951 = vst [vmem:[#allocation2 + $0x10] sm:$0xff] %v1943
      %1952 = vst [vmem:[#allocation2 + $0x18] sm:$0xff] %v1944
      %1953 = vst [vmem:[#allocation2 + $0x20] sm:$0xff] %v1945
      %1954 = vst [vmem:[#allocation2 + $0x28] sm:$0xff] %v1946
      %1955 = vst [vmem:[#allocation2 + $0x30] sm:$0xff] %v1947
      %1956 = vst [vmem:[#allocation2 + $0x38] sm:$0xff] %v1948
      %s1957 = scalar_lea.vmem %s338, 216
      %v1958 = vld [vmem:[%s1957] sm:$0xf]
      %v1959 = vld [vmem:[%s1957 + $0x8] sm:$0xf]
      %v1960 = vld [vmem:[%s1957 + $0x10] sm:$0xf]
      %v1961 = vld [vmem:[%s1957 + $0x18] sm:$0xf]
      %v1962 = vld [vmem:[%s1957 + $0x20] sm:$0xf]
      %v1963 = vld [vmem:[%s1957 + $0x28] sm:$0xf]
      %v1964 = vld [vmem:[%s1957 + $0x30] sm:$0xf]
      %v1965 = vld [vmem:[%s1957 + $0x38] sm:$0xf]
      %v1966 = vld [vmem:[%s342] sm:$0x3]
      %v1975 = vunpack.c.l.b16 %v1958
      %v1976 = vunpack.c.l.b16 %v1959
      %v1977 = vunpack.c.l.b16 %v1960
      %v1978 = vunpack.c.l.b16 %v1961
      %v1979 = vunpack.c.l.b16 %v1962
      %v1980 = vunpack.c.l.b16 %v1963
      %v1981 = vunpack.c.l.b16 %v1964
      %v1982 = vunpack.c.l.b16 %v1965
      %v1983 = vpack.c.b16 %v1976, %v1975
      %v1984 = vpack.c.b16 %v1978, %v1977
      %v1985 = vpack.c.b16 %v1980, %v1979
      %v1986 = vpack.c.b16 %v1982, %v1981
      %vm1987 = vcmask 31744
      %v1989 = vsel %vm1987, %v1983, 0
      %v1992 = vsel %vm1987, %v1984, 0
      %v1995 = vsel %vm1987, %v1985, 0
      %v1998 = vsel %vm1987, %v1986, 0
      %vm2000 = vcmask 1041408
      %v2002 = vsel %vm2000, %v1966, 0
      %2004 = vmatprep.subr.bf16.mxu0 0
      %2005 = vmatpush1.bf16.msra.mxu0 0
      %2006 = vmatprep.subr.bf16.mxu0 0
      %2007 = vmatpush1.bf16.msra.mxu0 0
      %2008 = vmatprep.subr.bf16.mxu0 0
      %2009 = vmatpush1.bf16.msra.mxu0 0
      %2010 = vmatprep.subr.bf16.mxu0 0
      %2011 = vmatpush1.bf16.msra.mxu0 0
      %2012 = vmatprep.subr.bf16.mxu0 0
      %2013 = vmatpush1.bf16.msra.mxu0 0
      %2014 = vmatprep.subr.bf16.mxu0 0
      %2015 = vmatpush1.bf16.msra.mxu0 0
      %2016 = vmatprep.subr.bf16.mxu0 0
      %2017 = vmatpush1.bf16.msra.mxu0 0
      %2018 = vmatprep.subr.bf16.mxu0 0
      %2019 = vmatpush1.bf16.msra.mxu0 %v2002
      %2020 = vmatprep.subr.bf16.mxu0 0
      %2021 = vmatpush2.bf16.msra.mxu0 0
      %2022 = vmatprep.subr.bf16.mxu0 0
      %2023 = vmatpush2.bf16.msra.mxu0 0
      %2024 = vmatprep.subr.bf16.mxu0 0
      %2025 = vmatpush2.bf16.msra.mxu0 0
      %2026 = vmatprep.subr.bf16.mxu0 0
      %2027 = vmatpush2.bf16.msra.mxu0 0
      %2028 = vmatprep.subr.bf16.mxu0 0
      %2029 = vmatpush2.bf16.msra.mxu0 0
      %2030 = vmatprep.subr.bf16.mxu0 0
      %2031 = vmatpush2.bf16.msra.mxu0 0
      %2032 = vmatprep.subr.bf16.mxu0 0
      %2033 = vmatpush2.bf16.msra.mxu0 0
      %2034 = vmatprep.subr.bf16.mxu0 0
      %2035 = vmatpush2.bf16.msra.mxu0 0
      %2036 = vmatprep.mubr.bf16.mxu0 0
      %2037 = vmatmul.mubr.bf16.gmra.mxu0 %v1989
      %v2038 = vpop.f32.mrf.mxu0
      %v2039 = vadd.f32 0.0, %v2038
      %v2040 = vpop.f32.mrf.mxu0
      %v2041 = vpop.f32.mrf.mxu0
      %v2042 = vadd.f32 0.0, %v2041
      %v2043 = vpop.f32.mrf.mxu0
      %2044 = vmatprep.mubr.bf16.mxu0 0
      %2045 = vmatmul.mubr.bf16.gmra.mxu0 %v1992
      %v2046 = vpop.f32.mrf.mxu0
      %v2047 = vadd.f32 0.0, %v2046
      %v2048 = vpop.f32.mrf.mxu0
      %v2049 = vpop.f32.mrf.mxu0
      %v2050 = vadd.f32 0.0, %v2049
      %v2051 = vpop.f32.mrf.mxu0
      %2052 = vmatprep.mubr.bf16.mxu0 0
      %2053 = vmatmul.mubr.bf16.gmra.mxu0 %v1995
      %v2054 = vpop.f32.mrf.mxu0
      %v2055 = vadd.f32 0.0, %v2054
      %v2056 = vpop.f32.mrf.mxu0
      %v2057 = vpop.f32.mrf.mxu0
      %v2058 = vadd.f32 0.0, %v2057
      %v2059 = vpop.f32.mrf.mxu0
      %2060 = vmatprep.mubr.bf16.mxu0 0
      %2061 = vmatmul.mubr.bf16.gmra.mxu0 %v1998
      %v2062 = vpop.f32.mrf.mxu0
      %v2063 = vadd.f32 0.0, %v2062
      %v2064 = vpop.f32.mrf.mxu0
      %v2065 = vpop.f32.mrf.mxu0
      %v2066 = vadd.f32 0.0, %v2065
      %v2067 = vpop.f32.mrf.mxu0
      %2068 = vdwg.mxu0
      %v2069 = vld [vmem:[#allocation2] sm:$0xff]
      %v2070 = vld [vmem:[#allocation2 + $0x8] sm:$0xff]
      %v2071 = vld [vmem:[#allocation2 + $0x10] sm:$0xff]
      %v2072 = vld [vmem:[#allocation2 + $0x18] sm:$0xff]
      %v2073 = vld [vmem:[#allocation2 + $0x20] sm:$0xff]
      %v2074 = vld [vmem:[#allocation2 + $0x28] sm:$0xff]
      %v2075 = vld [vmem:[#allocation2 + $0x30] sm:$0xff]
      %v2076 = vld [vmem:[#allocation2 + $0x38] sm:$0xff]
      %v2077 = vld [vmem:[%s333] sm:$0x1]
      %v2079 = vlaneseq
      %v2080 = vshrl.u32 %v2079, 7
      %v2081 = vsub.s32 0, %v2080
      %v2082 = vrot.slane %v2077, %v2081
      %v2084 = vadd.f32 %v2069, %v2082
      %v2085 = vadd.f32 %v2070, %v2082
      %v2086 = vadd.f32 %v2071, %v2082
      %v2087 = vadd.f32 %v2072, %v2082
      %v2088 = vadd.f32 %v2073, %v2082
      %v2089 = vadd.f32 %v2074, %v2082
      %v2090 = vadd.f32 %v2075, %v2082
      %v2091 = vadd.f32 %v2076, %v2082
      %v2092 = vld [vmem:[%s345] sm:$0x1]
      %v2094 = vlaneseq
      %v2095 = vshrl.u32 %v2094, 7
      %v2096 = vsub.s32 0, %v2095
      %v2097 = vrot.slane %v2092, %v2096
      %v2099 = vadd.f32 %v2084, %v2097
      %v2100 = vadd.f32 %v2085, %v2097
      %v2101 = vadd.f32 %v2086, %v2097
      %v2102 = vadd.f32 %v2087, %v2097
      %v2103 = vadd.f32 %v2088, %v2097
      %v2104 = vadd.f32 %v2089, %v2097
      %v2105 = vadd.f32 %v2090, %v2097
      %v2106 = vadd.f32 %v2091, %v2097
      %v2107 = vadd.f32 %v2099, %v2039
      %v2108 = vadd.f32 %v2100, %v2042
      %v2109 = vadd.f32 %v2101, %v2047
      %v2110 = vadd.f32 %v2102, %v2050
      %v2111 = vadd.f32 %v2103, %v2055
      %v2112 = vadd.f32 %v2104, %v2058
      %v2113 = vadd.f32 %v2105, %v2063
      %v2114 = vadd.f32 %v2106, %v2066
      %v2115 = vmax.f32 %v2107, 0.0
      %v2116 = vmax.f32 %v2108, 0.0
      %v2117 = vmax.f32 %v2109, 0.0
      %v2118 = vmax.f32 %v2110, 0.0
      %v2119 = vmax.f32 %v2111, 0.0
      %v2120 = vmax.f32 %v2112, 0.0
      %v2121 = vmax.f32 %v2113, 0.0
      %v2122 = vmax.f32 %v2114, 0.0
      %v2123 = vpack.c.bf16 %v2115, %v2115
      %v2124 = vpack.c.bf16 %v2116, %v2116
      %v2125 = vpack.c.bf16 %v2117, %v2117
      %v2126 = vpack.c.bf16 %v2118, %v2118
      %v2127 = vpack.c.bf16 %v2119, %v2119
      %v2128 = vpack.c.bf16 %v2120, %v2120
      %v2129 = vpack.c.bf16 %v2121, %v2121
      %v2130 = vpack.c.bf16 %v2122, %v2122
      %2131 = vst [vmem:[%s353] sm:$0xf] %v2123
      %2132 = vst [vmem:[%s353 + $0x4] sm:$0xf] %v2124
      %2133 = vst [vmem:[%s353 + $0x8] sm:$0xf] %v2125
      %2134 = vst [vmem:[%s353 + $0xc] sm:$0xf] %v2126
      %2135 = vst [vmem:[%s353 + $0x10] sm:$0xf] %v2127
      %2136 = vst [vmem:[%s353 + $0x14] sm:$0xf] %v2128
      %2137 = vst [vmem:[%s353 + $0x18] sm:$0xf] %v2129
      %2138 = vst [vmem:[%s353 + $0x1c] sm:$0xf] %v2130
      %p2139 = scmp.lt.s32.totalorder %s22, 1
      %s2140 = scalar_select %p2139, %s22, 1
      %p2141 = scmp.lt.s32.totalorder %s21, 0
      %s2142 = scalar_select %p2141, %s21, 0
      %s2143 = smul.addr %s2140, 8
      %s2144 = sadd.s32 %s2142, %s2143
      %s2145 = smul.addr %s2144, 4
      %s2146 = scalar_lea.vmem %s6, %s2145
      // Predicated region
      $region45: #{basic_block_forward.3} parent=43 // pred_check
        %p2147 = pneg %p205
      $region46: #{basic_block_forward.3} parent=43 // pred_check_branch
        %2149 = sbr.rel (%p2147) target = $region48
      $region47: #{basic_block_forward.3} parent=43 // pred_region
        _
      $region48: #{basic_block_forward.3} parent=43 // pred_fallthru
        _
    $region44: #{basic_block_forward.3} parent=5 // pred_fallthru
      _
    %p2150 = scmp.le.s32.totalorder 2, %s12
    // Predicated region
    $region49: #{basic_block_forward.3} parent=5 // pred_check
      %p2151 = pneg %p2150
    $region50: #{basic_block_forward.3} parent=5 // pred_check_branch
      %2153 = sbr.rel (%p2151) target = $region52
    $region51: #{basic_block_forward.3} parent=5 // pred_region
      %s2154 = ssub.s32 %s12, 2
      // Predicated region
      $region53: #{basic_block_forward.3} parent=51 // pred_check
        %p2155 = pneg %p211
      $region54: #{basic_block_forward.3} parent=51 // pred_check_branch
        %2157 = sbr.rel (%p2155) target = $region56
      $region55: #{basic_block_forward.3} parent=51 // pred_region
        %p2158 = scmp.lt.s32.totalorder %s24, 1
        %s2159 = scalar_select %p2158, %s24, 1
        %p2160 = scmp.lt.s32.totalorder %s23, 0
        %s2161 = scalar_select %p2160, %s23, 0
        %s2162 = smul.addr %s2159, 8
        %s2163 = sadd.s32 %s2161, %s2162
        %s2164 = smul.addr %s2163, 4
        %s2165 = scalar_lea.vmem %s6, %s2164
      $region56: #{basic_block_forward.3} parent=51 // pred_fallthru
        _
    $region52: #{basic_block_forward.3} parent=5 // pred_fallthru
      _
  $region6: #{basic_block_forward.3} parent=0 // loop_footer
    %s16 = sadd.s32 1, %s12
  $region7: #{basic_block_forward.3} parent=0 // loop_footer_branch
    %11 = sbr.rel target = $region3
  $region8: #{basic_block_forward.3} parent=0 // loop_exit
    _

</llo_original>
